<compile_context>
chip_gen: v5e
topology: v5e:2x2
jax: 0.10.0
libtpu: 0.0.40
codegen_flags: <defaults>
</compile_context>

<pallas_src>
import functools

import jax
import jax.numpy as jnp
from jax import lax
from jax.experimental import pallas as pl
from jax.experimental.pallas import tpu as pltpu


# ----------------------------------------------------------------------------
# Kernel
# ----------------------------------------------------------------------------
def basic_block_kernel(xp_ref, xr_ref, w1_ref, s1_ref, b1_ref, w2_ref, s2_ref,
                       b2_ref, out_ref, h1_ref):
    # xp_ref : (1, H+4, W+2, Cp) bf16  zero-padded image (resident per image n)
    # xr_ref : (1, T,   W,   Cp) bf16  row tile of the unpadded image (residual)
    # w1_ref : (9*Cp, Cm) bf16, w2_ref : (9*Cm, Cm) bf16   (HWIO, tap-major)
    # s*/b*  : (1, Cm) f32   folded BatchNorm scale / bias
    # out_ref: (1, T, W, Cm) f32   one row tile of the output
    # h1_ref : (T+2, W+2, Cm) bf16 scratch: conv1 activation for this tile,
    #          1-px zero frame in W; rows 0 / T+1 zeroed at the image borders.
    H = xp_ref.shape[1] - 4
    W = out_ref.shape[2]
    Cp = xp_ref.shape[3]
    Cm = out_ref.shape[3]
    T = out_ref.shape[1]
    r = pl.program_id(1)
    base = pl.multiple_of(r * T, T)

    # Hoisted folded-BN constants (read once, f32).
    s1 = s1_ref[...]
    b1 = b1_ref[...]
    s2 = s2_ref[...]
    b2 = b2_ref[...]

    # ---- conv1 (3x3) + BN1 + ReLU over this tile's T+2 halo'd rows ----------
    # Per-tap accumulating matmuls: bf16 operands, f32 accumulation on the MXU.
    acc1 = None
    for ky in range(3):
        for kx in range(3):
            k = ky * 3 + kx
            tap = xp_ref[0, pl.ds(base + ky, T + 2), kx:kx + W, :]
            tap = tap.reshape((T + 2) * W, Cp)
            p = jnp.dot(tap, w1_ref[k * Cp:(k + 1) * Cp, :],
                        preferred_element_type=jnp.float32)
            acc1 = p if acc1 is None else acc1 + p
    h1 = jnp.maximum(acc1 * s1 + b1, 0.0)                     # BN1 + ReLU (f32)
    h1_ref[:, 1:W + 1, :] = h1.reshape(T + 2, W, Cm).astype(h1_ref.dtype)

    # Zero frame: halo columns every step; halo rows only at the image borders
    # (conv2's SAME padding must see zeros there, not BN1(conv1(pad))).
    zc = jnp.zeros((T + 2, 1, Cm), h1_ref.dtype)
    h1_ref[:, 0:1, :] = zc
    h1_ref[:, W + 1:W + 2, :] = zc

    @pl.when(r == 0)
    def _():
        h1_ref[0:1, 1:W + 1, :] = jnp.zeros((1, W, Cm), h1_ref.dtype)

    @pl.when(r == pl.num_programs(1) - 1)
    def _():
        h1_ref[T + 1:T + 2, 1:W + 1, :] = jnp.zeros((1, W, Cm), h1_ref.dtype)

    # ---- conv2 (3x3) + BN2 + residual + ReLU --------------------------------
    acc2 = None
    for ky in range(3):
        for kx in range(3):
            k = ky * 3 + kx
            tap = h1_ref[ky:ky + T, kx:kx + W, :].reshape(T * W, Cm)
            p = jnp.dot(tap, w2_ref[k * Cm:(k + 1) * Cm, :],
                        preferred_element_type=jnp.float32)
            acc2 = p if acc2 is None else acc2 + p
    h2 = acc2 * s2 + b2                                       # BN2 (f32)

    res = xr_ref[...].reshape(T * W, Cp).astype(jnp.float32)
    out = jnp.maximum(h2 + res, 0.0)
    out_ref[...] = out.reshape(1, T, W, Cm).astype(out_ref.dtype)


# ----------------------------------------------------------------------------
# Parameter packing (PyTorch layouts -> kernel layouts)
# ----------------------------------------------------------------------------
def _round_up(x, m):
    return (x + m - 1) // m * m


def fold_bn(gamma, beta, mean, var, eps=1e-5):
    scale = gamma / jnp.sqrt(var + eps)
    bias = beta - mean * scale
    return scale.astype(jnp.float32), bias.astype(jnp.float32)


def pack_params(w1_pt, bn1, w2_pt, bn2, lane=128):
    """PyTorch (O,I,3,3) conv weights + BN stats -> padded, tap-major params."""
    planes, inplanes = w1_pt.shape[0], w1_pt.shape[1]
    assert inplanes == planes, "BasicBlock with downsample=None needs inplanes == planes"
    Cp = _round_up(inplanes, lane)
    Cm = _round_up(planes, lane)

    def pack_w(w_pt, cin, cout, cin_p, cout_p):
        w = jnp.transpose(w_pt, (2, 3, 1, 0))                       # OIHW -> HWIO
        w = jnp.pad(w, ((0, 0), (0, 0), (0, cin_p - cin), (0, cout_p - cout)))
        return w.reshape(9 * cin_p, cout_p).astype(jnp.bfloat16)

    def pack_bn(bn, c, cpad):
        s, b = fold_bn(*bn)
        s = jnp.pad(s, (0, cpad - c)).reshape(1, cpad)
        b = jnp.pad(b, (0, cpad - c)).reshape(1, cpad)
        return s, b

    w1 = pack_w(w1_pt, inplanes, planes, Cp, Cm)
    w2 = pack_w(w2_pt, planes, planes, Cm, Cm)
    s1, b1 = pack_bn(bn1, planes, Cm)
    s2, b2 = pack_bn(bn2, planes, Cm)
    return (w1, s1, b1, w2, s2, b2)


# ----------------------------------------------------------------------------
# Forward wrapper
# ----------------------------------------------------------------------------
def _vmem_limit_bytes():
    try:
        cap = int(pltpu.get_tpu_info().vmem_capacity_bytes)
    except Exception:
        cap = 64 * 1024 * 1024          # conservative fallback (v7x per-core)
    return min(cap * 3 // 4, 100 * 1024 * 1024)


def basic_block_forward(x_nchw, packed, *, tile_h=None):
    w1, s1, b1, w2, s2, b2 = packed
    N, Cin, H, W = x_nchw.shape
    Cp = w1.shape[0] // 9
    Cm = w1.shape[1]
    assert Cp == Cm and Cin <= Cp
    if W % 8 != 0:
        raise ValueError("W must be a multiple of 8")
    if tile_h is None:
        tile_h = next(t for t in (16, 14, 8, 7, 4, 2, 1) if H % t == 0)
    if H % tile_h != 0:
        raise ValueError("H must be divisible by tile_h")
    T = tile_h

    # NCHW -> NHWC once; fuse channel pad (to 128 lanes) and the bf16 cast.
    x = jnp.transpose(x_nchw, (0, 2, 3, 1))
    xr = jnp.pad(x, ((0, 0), (0, 0), (0, 0), (0, Cp - Cin))).astype(jnp.bfloat16)
    # 2-row / 1-col spatial zero pad so conv1 halo rows can be recomputed per tile.
    xp = jnp.pad(xr, ((0, 0), (2, 2), (1, 1), (0, 0)))

    grid = (N, H // T)
    out = pl.pallas_call(
        basic_block_kernel,
        out_shape=jax.ShapeDtypeStruct((N, H, W, Cm), jnp.float32),
        grid=grid,
        in_specs=[
            # padded image: depends only on n -> fetched once per image
            pl.BlockSpec((1, H + 4, W + 2, Cp), lambda n, r: (n, 0, 0, 0)),
            # residual: tile-aligned row block, DMA hidden by the pipeline
            pl.BlockSpec((1, T, W, Cp), lambda n, r: (n, r, 0, 0)),
            # weights / BN params: constant index_map -> stay VMEM-resident
            pl.BlockSpec((9 * Cp, Cm), lambda n, r: (0, 0)),
            pl.BlockSpec((1, Cm), lambda n, r: (0, 0)),
            pl.BlockSpec((1, Cm), lambda n, r: (0, 0)),
            pl.BlockSpec((9 * Cm, Cm), lambda n, r: (0, 0)),
            pl.BlockSpec((1, Cm), lambda n, r: (0, 0)),
            pl.BlockSpec((1, Cm), lambda n, r: (0, 0)),
        ],
        out_specs=pl.BlockSpec((1, T, W, Cm), lambda n, r: (n, r, 0, 0)),
        scratch_shapes=[pltpu.VMEM((T + 2, W + 2, Cm), jnp.bfloat16)],
        compiler_params=pltpu.CompilerParams(
            dimension_semantics=("parallel", "parallel"),
            vmem_limit_bytes=_vmem_limit_bytes(),
        ),
    )(xp, xr, w1, s1, b1, w2, s2, b2)

    return jnp.transpose(out[..., :Cin], (0, 3, 1, 2))               # back to NCHW


# ----------------------------------------------------------------------------
# Pure-JAX reference (mirrors the kernel's bf16/f32 precision choices)
# ----------------------------------------------------------------------------
def reference_forward(x_nchw, packed, cin):
    w1, s1, b1, w2, s2, b2 = packed
    Cp = w1.shape[0] // 9
    Cm = w1.shape[1]
    dn = ('NHWC', 'HWIO', 'NHWC')
    w1h = w1.reshape(3, 3, Cp, Cm)
    w2h = w2.reshape(3, 3, Cm, Cm)

    x = jnp.transpose(x_nchw, (0, 2, 3, 1))
    xcp = jnp.pad(x, ((0, 0), (0, 0), (0, 0), (0, Cp - cin))).astype(jnp.bfloat16)

    h = lax.conv_general_dilated(xcp, w1h, (1, 1), 'SAME', dimension_numbers=dn,
                                 preferred_element_type=jnp.float32)
    h = jnp.maximum(h * s1.reshape(1, 1, 1, -1) + b1.reshape(1, 1, 1, -1), 0.0)
    h = h.astype(jnp.bfloat16)
    h = lax.conv_general_dilated(h, w2h, (1, 1), 'SAME', dimension_numbers=dn,
                                 preferred_element_type=jnp.float32)
    h = h * s2.reshape(1, 1, 1, -1) + b2.reshape(1, 1, 1, -1)
    h = jnp.maximum(h + xcp.astype(jnp.float32), 0.0)
    return jnp.transpose(h[..., :cin], (0, 3, 1, 2))


# ----------------------------------------------------------------------------
# Demo parameters
# ----------------------------------------------------------------------------
def make_params(key, inplanes, planes):
    k1, k2, k3, k4 = jax.random.split(key, 4)
    w1_pt = 0.1 * jax.random.normal(k1, (planes, inplanes, 3, 3), jnp.float32)
    w2_pt = 0.1 * jax.random.normal(k2, (planes, planes, 3, 3), jnp.float32)

    def bn(k, c):
        kg, kb, km, kv = jax.random.split(k, 4)
        gamma = 1.0 + 0.1 * jax.random.normal(kg, (c,), jnp.float32)
        beta = 0.1 * jax.random.normal(kb, (c,), jnp.float32)
        mean = 0.1 * jax.random.normal(km, (c,), jnp.float32)
        var = 0.5 + 0.5 * jnp.abs(jax.random.normal(kv, (c,), jnp.float32))
        return (gamma, beta, mean, var)

    return w1_pt, bn(k3, planes), w2_pt, bn(k4, planes)


if __name__ == "__main__":
    key = jax.random.PRNGKey(0)
    k_x, k_p = jax.random.split(key)

    # BasicBlock with expansion=1, stride=1, downsample=None -> inplanes == planes
    N, C, H, W = 2, 4, 16, 16
    x = jax.random.normal(k_x, (N, C, H, W), jnp.float32)            # NCHW like PyTorch
    packed = pack_params(*make_params(k_p, C, C))

    # tile_h=8 -> two row tiles per image, exercising both border-mask paths.
    fwd = jax.jit(functools.partial(basic_block_forward, tile_h=8))
    out = jax.block_until_ready(fwd(x, packed))

    ref = jax.block_until_ready(reference_forward(x, packed, C))
    assert out.shape == (N, C, H, W)
    assert jnp.allclose(out, ref, rtol=2e-3, atol=2e-3), (
        f"mismatch vs reference, max abs err {jnp.max(jnp.abs(out - ref))}")

    print("KERNEL_OK")
</pallas_src>

<mosaic_0001>
module attributes {stable_mosaic.version = 11 : i64} {
  func.func @basic_block_kernel(%arg0: i32, %arg1: i32, %arg2: memref<1x20x18x128xbf16, #tpu.memory_space<vmem>>, %arg3: memref<1x8x16x128xbf16, #tpu.memory_space<vmem>>, %arg4: memref<1152x128xbf16, #tpu.memory_space<vmem>>, %arg5: memref<1x128xf32, #tpu.memory_space<vmem>>, %arg6: memref<1x128xf32, #tpu.memory_space<vmem>>, %arg7: memref<1152x128xbf16, #tpu.memory_space<vmem>>, %arg8: memref<1x128xf32, #tpu.memory_space<vmem>>, %arg9: memref<1x128xf32, #tpu.memory_space<vmem>>, %arg10: memref<1x8x16x128xf32, #tpu.memory_space<vmem>>, %arg11: memref<10x18x128xbf16, #tpu.memory_space<vmem>>) attributes {dimension_semantics = [#tpu.dimension_semantics<parallel>, #tpu.dimension_semantics<parallel>], iteration_bounds = array<i64: 2, 2>, scalar_prefetch = 0 : i64, scratch_operands = 1 : i64, tpu.core_type = #tpu.core_type<tc>, window_params = [{transform_indices = @transform_0, window_bounds = array<i64: 1, 20, 18, 128>}, {transform_indices = @transform_1, window_bounds = array<i64: 1, 8, 16, 128>}, {pipeline_mode = #tpu.pipeline_mode<synchronous>, transform_indices = @transform_2, window_bounds = array<i64: 1152, 128>}, {pipeline_mode = #tpu.pipeline_mode<synchronous>, transform_indices = @transform_3, window_bounds = array<i64: 1, 128>}, {pipeline_mode = #tpu.pipeline_mode<synchronous>, transform_indices = @transform_4, window_bounds = array<i64: 1, 128>}, {pipeline_mode = #tpu.pipeline_mode<synchronous>, transform_indices = @transform_5, window_bounds = array<i64: 1152, 128>}, {pipeline_mode = #tpu.pipeline_mode<synchronous>, transform_indices = @transform_6, window_bounds = array<i64: 1, 128>}, {pipeline_mode = #tpu.pipeline_mode<synchronous>, transform_indices = @transform_7, window_bounds = array<i64: 1, 128>}, {transform_indices = @transform_8, window_bounds = array<i64: 1, 8, 16, 128>}]} {
    %c8_i32 = arith.constant 8 : i32
    %0 = arith.muli %arg1, %c8_i32 : i32
    %1 = tpu.assume_multiple %0, 8 : i32
    %c0 = arith.constant 0 : index
    %c0_0 = arith.constant 0 : index
    %2 = vector.load %arg5[%c0, %c0_0] : memref<1x128xf32, #tpu.memory_space<vmem>>, vector<1x128xf32>
    %c0_1 = arith.constant 0 : index
    %c0_2 = arith.constant 0 : index
    %3 = vector.load %arg6[%c0_1, %c0_2] : memref<1x128xf32, #tpu.memory_space<vmem>>, vector<1x128xf32>
    %c0_3 = arith.constant 0 : index
    %c0_4 = arith.constant 0 : index
    %4 = vector.load %arg8[%c0_3, %c0_4] : memref<1x128xf32, #tpu.memory_space<vmem>>, vector<1x128xf32>
    %c0_5 = arith.constant 0 : index
    %c0_6 = arith.constant 0 : index
    %5 = vector.load %arg9[%c0_5, %c0_6] : memref<1x128xf32, #tpu.memory_space<vmem>>, vector<1x128xf32>
    %c0_i32 = arith.constant 0 : i32
    %6 = arith.addi %1, %c0_i32 : i32
    %c0_7 = arith.constant 0 : index
    %7 = arith.index_cast %6 : i32 to index
    %c0_8 = arith.constant 0 : index
    %c0_9 = arith.constant 0 : index
    %8 = vector.load %arg2[%c0_7, %7, %c0_8, %c0_9] : memref<1x20x18x128xbf16, #tpu.memory_space<vmem>>, vector<1x10x16x128xbf16>
    %9 = vector.shape_cast %8 : vector<1x10x16x128xbf16> to vector<10x16x128xbf16>
    %10 = vector.shape_cast %9 : vector<10x16x128xbf16> to vector<160x128xbf16>
    %c0_10 = arith.constant 0 : index
    %c0_11 = arith.constant 0 : index
    %11 = vector.load %arg4[%c0_10, %c0_11] : memref<1152x128xbf16, #tpu.memory_space<vmem>>, vector<128x128xbf16>
    %cst = arith.constant dense<0.000000e+00> : vector<160x128xf32>
    %12 = tpu.matmul %10, %11, %cst {dimension_numbers = #tpu.dot_dimension_numbers<[1], [0], [0], [1], [0, 0, 1, 1], [], []>} : vector<160x128xbf16>, vector<128x128xbf16>, vector<160x128xf32> -> vector<160x128xf32>
    %c0_i32_12 = arith.constant 0 : i32
    %13 = arith.addi %1, %c0_i32_12 : i32
    %c0_13 = arith.constant 0 : index
    %14 = arith.index_cast %13 : i32 to index
    %c1 = arith.constant 1 : index
    %c0_14 = arith.constant 0 : index
    %15 = vector.load %arg2[%c0_13, %14, %c1, %c0_14] : memref<1x20x18x128xbf16, #tpu.memory_space<vmem>>, vector<1x10x16x128xbf16>
    %16 = vector.shape_cast %15 : vector<1x10x16x128xbf16> to vector<10x16x128xbf16>
    %17 = vector.shape_cast %16 : vector<10x16x128xbf16> to vector<160x128xbf16>
    %c128 = arith.constant 128 : index
    %c0_15 = arith.constant 0 : index
    %18 = vector.load %arg4[%c128, %c0_15] : memref<1152x128xbf16, #tpu.memory_space<vmem>>, vector<128x128xbf16>
    %cst_16 = arith.constant dense<0.000000e+00> : vector<160x128xf32>
    %19 = tpu.matmul %17, %18, %cst_16 {dimension_numbers = #tpu.dot_dimension_numbers<[1], [0], [0], [1], [0, 0, 1, 1], [], []>} : vector<160x128xbf16>, vector<128x128xbf16>, vector<160x128xf32> -> vector<160x128xf32>
    %20 = arith.addf %12, %19 : vector<160x128xf32>
    %c0_i32_17 = arith.constant 0 : i32
    %21 = arith.addi %1, %c0_i32_17 : i32
    %c0_18 = arith.constant 0 : index
    %22 = arith.index_cast %21 : i32 to index
    %c2 = arith.constant 2 : index
    %c0_19 = arith.constant 0 : index
    %23 = vector.load %arg2[%c0_18, %22, %c2, %c0_19] : memref<1x20x18x128xbf16, #tpu.memory_space<vmem>>, vector<1x10x16x128xbf16>
    %24 = vector.shape_cast %23 : vector<1x10x16x128xbf16> to vector<10x16x128xbf16>
    %25 = vector.shape_cast %24 : vector<10x16x128xbf16> to vector<160x128xbf16>
    %c256 = arith.constant 256 : index
    %c0_20 = arith.constant 0 : index
    %26 = vector.load %arg4[%c256, %c0_20] : memref<1152x128xbf16, #tpu.memory_space<vmem>>, vector<128x128xbf16>
    %cst_21 = arith.constant dense<0.000000e+00> : vector<160x128xf32>
    %27 = tpu.matmul %25, %26, %cst_21 {dimension_numbers = #tpu.dot_dimension_numbers<[1], [0], [0], [1], [0, 0, 1, 1], [], []>} : vector<160x128xbf16>, vector<128x128xbf16>, vector<160x128xf32> -> vector<160x128xf32>
    %28 = arith.addf %20, %27 : vector<160x128xf32>
    %c1_i32 = arith.constant 1 : i32
    %29 = arith.addi %1, %c1_i32 : i32
    %c0_22 = arith.constant 0 : index
    %30 = arith.index_cast %29 : i32 to index
    %c0_23 = arith.constant 0 : index
    %c0_24 = arith.constant 0 : index
    %31 = vector.load %arg2[%c0_22, %30, %c0_23, %c0_24] : memref<1x20x18x128xbf16, #tpu.memory_space<vmem>>, vector<1x10x16x128xbf16>
    %32 = vector.shape_cast %31 : vector<1x10x16x128xbf16> to vector<10x16x128xbf16>
    %33 = vector.shape_cast %32 : vector<10x16x128xbf16> to vector<160x128xbf16>
    %c384 = arith.constant 384 : index
    %c0_25 = arith.constant 0 : index
    %34 = vector.load %arg4[%c384, %c0_25] : memref<1152x128xbf16, #tpu.memory_space<vmem>>, vector<128x128xbf16>
    %cst_26 = arith.constant dense<0.000000e+00> : vector<160x128xf32>
    %35 = tpu.matmul %33, %34, %cst_26 {dimension_numbers = #tpu.dot_dimension_numbers<[1], [0], [0], [1], [0, 0, 1, 1], [], []>} : vector<160x128xbf16>, vector<128x128xbf16>, vector<160x128xf32> -> vector<160x128xf32>
    %36 = arith.addf %28, %35 : vector<160x128xf32>
    %c1_i32_27 = arith.constant 1 : i32
    %37 = arith.addi %1, %c1_i32_27 : i32
    %c0_28 = arith.constant 0 : index
    %38 = arith.index_cast %37 : i32 to index
    %c1_29 = arith.constant 1 : index
    %c0_30 = arith.constant 0 : index
    %39 = vector.load %arg2[%c0_28, %38, %c1_29, %c0_30] : memref<1x20x18x128xbf16, #tpu.memory_space<vmem>>, vector<1x10x16x128xbf16>
    %40 = vector.shape_cast %39 : vector<1x10x16x128xbf16> to vector<10x16x128xbf16>
    %41 = vector.shape_cast %40 : vector<10x16x128xbf16> to vector<160x128xbf16>
    %c512 = arith.constant 512 : index
    %c0_31 = arith.constant 0 : index
    %42 = vector.load %arg4[%c512, %c0_31] : memref<1152x128xbf16, #tpu.memory_space<vmem>>, vector<128x128xbf16>
    %cst_32 = arith.constant dense<0.000000e+00> : vector<160x128xf32>
    %43 = tpu.matmul %41, %42, %cst_32 {dimension_numbers = #tpu.dot_dimension_numbers<[1], [0], [0], [1], [0, 0, 1, 1], [], []>} : vector<160x128xbf16>, vector<128x128xbf16>, vector<160x128xf32> -> vector<160x128xf32>
    %44 = arith.addf %36, %43 : vector<160x128xf32>
    %c1_i32_33 = arith.constant 1 : i32
    %45 = arith.addi %1, %c1_i32_33 : i32
    %c0_34 = arith.constant 0 : index
    %46 = arith.index_cast %45 : i32 to index
    %c2_35 = arith.constant 2 : index
    %c0_36 = arith.constant 0 : index
    %47 = vector.load %arg2[%c0_34, %46, %c2_35, %c0_36] : memref<1x20x18x128xbf16, #tpu.memory_space<vmem>>, vector<1x10x16x128xbf16>
    %48 = vector.shape_cast %47 : vector<1x10x16x128xbf16> to vector<10x16x128xbf16>
    %49 = vector.shape_cast %48 : vector<10x16x128xbf16> to vector<160x128xbf16>
    %c640 = arith.constant 640 : index
    %c0_37 = arith.constant 0 : index
    %50 = vector.load %arg4[%c640, %c0_37] : memref<1152x128xbf16, #tpu.memory_space<vmem>>, vector<128x128xbf16>
    %cst_38 = arith.constant dense<0.000000e+00> : vector<160x128xf32>
    %51 = tpu.matmul %49, %50, %cst_38 {dimension_numbers = #tpu.dot_dimension_numbers<[1], [0], [0], [1], [0, 0, 1, 1], [], []>} : vector<160x128xbf16>, vector<128x128xbf16>, vector<160x128xf32> -> vector<160x128xf32>
    %52 = arith.addf %44, %51 : vector<160x128xf32>
    %c2_i32 = arith.constant 2 : i32
    %53 = arith.addi %1, %c2_i32 : i32
    %c0_39 = arith.constant 0 : index
    %54 = arith.index_cast %53 : i32 to index
    %c0_40 = arith.constant 0 : index
    %c0_41 = arith.constant 0 : index
    %55 = vector.load %arg2[%c0_39, %54, %c0_40, %c0_41] : memref<1x20x18x128xbf16, #tpu.memory_space<vmem>>, vector<1x10x16x128xbf16>
    %56 = vector.shape_cast %55 : vector<1x10x16x128xbf16> to vector<10x16x128xbf16>
    %57 = vector.shape_cast %56 : vector<10x16x128xbf16> to vector<160x128xbf16>
    %c768 = arith.constant 768 : index
    %c0_42 = arith.constant 0 : index
    %58 = vector.load %arg4[%c768, %c0_42] : memref<1152x128xbf16, #tpu.memory_space<vmem>>, vector<128x128xbf16>
    %cst_43 = arith.constant dense<0.000000e+00> : vector<160x128xf32>
    %59 = tpu.matmul %57, %58, %cst_43 {dimension_numbers = #tpu.dot_dimension_numbers<[1], [0], [0], [1], [0, 0, 1, 1], [], []>} : vector<160x128xbf16>, vector<128x128xbf16>, vector<160x128xf32> -> vector<160x128xf32>
    %60 = arith.addf %52, %59 : vector<160x128xf32>
    %c2_i32_44 = arith.constant 2 : i32
    %61 = arith.addi %1, %c2_i32_44 : i32
    %c0_45 = arith.constant 0 : index
    %62 = arith.index_cast %61 : i32 to index
    %c1_46 = arith.constant 1 : index
    %c0_47 = arith.constant 0 : index
    %63 = vector.load %arg2[%c0_45, %62, %c1_46, %c0_47] : memref<1x20x18x128xbf16, #tpu.memory_space<vmem>>, vector<1x10x16x128xbf16>
    %64 = vector.shape_cast %63 : vector<1x10x16x128xbf16> to vector<10x16x128xbf16>
    %65 = vector.shape_cast %64 : vector<10x16x128xbf16> to vector<160x128xbf16>
    %c896 = arith.constant 896 : index
    %c0_48 = arith.constant 0 : index
    %66 = vector.load %arg4[%c896, %c0_48] : memref<1152x128xbf16, #tpu.memory_space<vmem>>, vector<128x128xbf16>
    %cst_49 = arith.constant dense<0.000000e+00> : vector<160x128xf32>
    %67 = tpu.matmul %65, %66, %cst_49 {dimension_numbers = #tpu.dot_dimension_numbers<[1], [0], [0], [1], [0, 0, 1, 1], [], []>} : vector<160x128xbf16>, vector<128x128xbf16>, vector<160x128xf32> -> vector<160x128xf32>
    %68 = arith.addf %60, %67 : vector<160x128xf32>
    %c2_i32_50 = arith.constant 2 : i32
    %69 = arith.addi %1, %c2_i32_50 : i32
    %c0_51 = arith.constant 0 : index
    %70 = arith.index_cast %69 : i32 to index
    %c2_52 = arith.constant 2 : index
    %c0_53 = arith.constant 0 : index
    %71 = vector.load %arg2[%c0_51, %70, %c2_52, %c0_53] : memref<1x20x18x128xbf16, #tpu.memory_space<vmem>>, vector<1x10x16x128xbf16>
    %72 = vector.shape_cast %71 : vector<1x10x16x128xbf16> to vector<10x16x128xbf16>
    %73 = vector.shape_cast %72 : vector<10x16x128xbf16> to vector<160x128xbf16>
    %c1024 = arith.constant 1024 : index
    %c0_54 = arith.constant 0 : index
    %74 = vector.load %arg4[%c1024, %c0_54] : memref<1152x128xbf16, #tpu.memory_space<vmem>>, vector<128x128xbf16>
    %cst_55 = arith.constant dense<0.000000e+00> : vector<160x128xf32>
    %75 = tpu.matmul %73, %74, %cst_55 {dimension_numbers = #tpu.dot_dimension_numbers<[1], [0], [0], [1], [0, 0, 1, 1], [], []>} : vector<160x128xbf16>, vector<128x128xbf16>, vector<160x128xf32> -> vector<160x128xf32>
    %76 = arith.addf %68, %75 : vector<160x128xf32>
    %77 = vector.broadcast %2 : vector<1x128xf32> to vector<160x128xf32>
    %78 = arith.mulf %76, %77 : vector<160x128xf32>
    %79 = vector.broadcast %3 : vector<1x128xf32> to vector<160x128xf32>
    %80 = arith.addf %78, %79 : vector<160x128xf32>
    %cst_56 = arith.constant 0.000000e+00 : f32
    %81 = vector.broadcast %cst_56 : f32 to vector<160x128xf32>
    %82 = arith.maximumf %80, %81 : vector<160x128xf32>
    %83 = vector.shape_cast %82 : vector<160x128xf32> to vector<10x16x128xf32>
    %84 = arith.truncf %83 : vector<10x16x128xf32> to vector<10x16x128xbf16>
    %c0_57 = arith.constant 0 : index
    %c1_58 = arith.constant 1 : index
    %c0_59 = arith.constant 0 : index
    %85 = vector.load %arg11[%c0_57, %c1_58, %c0_59] : memref<10x18x128xbf16, #tpu.memory_space<vmem>>, vector<10x16x128xbf16>
    tpu.vector_store %arg11[%c0_57, %c1_58, %c0_59], %84 {strides = array<i32>} : memref<10x18x128xbf16, #tpu.memory_space<vmem>>, vector<10x16x128xbf16>,
    %cst_60 = arith.constant 0.000000e+00 : bf16
    %86 = vector.broadcast %cst_60 : bf16 to vector<10x1x128xbf16>
    %c0_61 = arith.constant 0 : index
    %c0_62 = arith.constant 0 : index
    %c0_63 = arith.constant 0 : index
    %87 = vector.load %arg11[%c0_61, %c0_62, %c0_63] : memref<10x18x128xbf16, #tpu.memory_space<vmem>>, vector<10x1x128xbf16>
    tpu.vector_store %arg11[%c0_61, %c0_62, %c0_63], %86 {strides = array<i32>} : memref<10x18x128xbf16, #tpu.memory_space<vmem>>, vector<10x1x128xbf16>,
    %c0_64 = arith.constant 0 : index
    %c17 = arith.constant 17 : index
    %c0_65 = arith.constant 0 : index
    %88 = vector.load %arg11[%c0_64, %c17, %c0_65] : memref<10x18x128xbf16, #tpu.memory_space<vmem>>, vector<10x1x128xbf16>
    tpu.vector_store %arg11[%c0_64, %c17, %c0_65], %86 {strides = array<i32>} : memref<10x18x128xbf16, #tpu.memory_space<vmem>>, vector<10x1x128xbf16>,
    %c0_i32_66 = arith.constant 0 : i32
    %89 = arith.cmpi eq, %arg1, %c0_i32_66 : i32
    %90 = arith.extui %89 : i1 to i32
    %c0_i32_67 = arith.constant 0 : i32
    %91 = arith.cmpi ne, %90, %c0_i32_67 : i32
    scf.if %91 {
      %cst_133 = arith.constant 0.000000e+00 : bf16
      %151 = vector.broadcast %cst_133 : bf16 to vector<1x16x128xbf16>
      %c0_134 = arith.constant 0 : index
      %c1_135 = arith.constant 1 : index
      %c0_136 = arith.constant 0 : index
      %152 = vector.load %arg11[%c0_134, %c1_135, %c0_136] : memref<10x18x128xbf16, #tpu.memory_space<vmem>>, vector<1x16x128xbf16>
      tpu.vector_store %arg11[%c0_134, %c1_135, %c0_136], %151 {strides = array<i32>} : memref<10x18x128xbf16, #tpu.memory_space<vmem>>, vector<1x16x128xbf16>,
    } else {
    }
    %c1_i32_68 = arith.constant 1 : i32
    %92 = arith.cmpi eq, %arg1, %c1_i32_68 : i32
    %93 = arith.extui %92 : i1 to i32
    %c0_i32_69 = arith.constant 0 : i32
    %94 = arith.cmpi ne, %93, %c0_i32_69 : i32
    scf.if %94 {
      %cst_133 = arith.constant 0.000000e+00 : bf16
      %151 = vector.broadcast %cst_133 : bf16 to vector<1x16x128xbf16>
      %c9 = arith.constant 9 : index
      %c1_134 = arith.constant 1 : index
      %c0_135 = arith.constant 0 : index
      %152 = vector.load %arg11[%c9, %c1_134, %c0_135] : memref<10x18x128xbf16, #tpu.memory_space<vmem>>, vector<1x16x128xbf16>
      tpu.vector_store %arg11[%c9, %c1_134, %c0_135], %151 {strides = array<i32>} : memref<10x18x128xbf16, #tpu.memory_space<vmem>>, vector<1x16x128xbf16>,
    } else {
    }
    %c0_70 = arith.constant 0 : index
    %c0_71 = arith.constant 0 : index
    %c0_72 = arith.constant 0 : index
    %95 = vector.load %arg11[%c0_70, %c0_71, %c0_72] : memref<10x18x128xbf16, #tpu.memory_space<vmem>>, vector<8x16x128xbf16>
    %96 = vector.shape_cast %95 : vector<8x16x128xbf16> to vector<128x128xbf16>
    %c0_73 = arith.constant 0 : index
    %c0_74 = arith.constant 0 : index
    %97 = vector.load %arg7[%c0_73, %c0_74] : memref<1152x128xbf16, #tpu.memory_space<vmem>>, vector<128x128xbf16>
    %cst_75 = arith.constant dense<0.000000e+00> : vector<128x128xf32>
    %98 = tpu.matmul %96, %97, %cst_75 {dimension_numbers = #tpu.dot_dimension_numbers<[1], [0], [0], [1], [0, 0, 1, 1], [], []>} : vector<128x128xbf16>, vector<128x128xbf16>, vector<128x128xf32> -> vector<128x128xf32>
    %c0_76 = arith.constant 0 : index
    %c1_77 = arith.constant 1 : index
    %c0_78 = arith.constant 0 : index
    %99 = vector.load %arg11[%c0_76, %c1_77, %c0_78] : memref<10x18x128xbf16, #tpu.memory_space<vmem>>, vector<8x16x128xbf16>
    %100 = vector.shape_cast %99 : vector<8x16x128xbf16> to vector<128x128xbf16>
    %c128_79 = arith.constant 128 : index
    %c0_80 = arith.constant 0 : index
    %101 = vector.load %arg7[%c128_79, %c0_80] : memref<1152x128xbf16, #tpu.memory_space<vmem>>, vector<128x128xbf16>
    %cst_81 = arith.constant dense<0.000000e+00> : vector<128x128xf32>
    %102 = tpu.matmul %100, %101, %cst_81 {dimension_numbers = #tpu.dot_dimension_numbers<[1], [0], [0], [1], [0, 0, 1, 1], [], []>} : vector<128x128xbf16>, vector<128x128xbf16>, vector<128x128xf32> -> vector<128x128xf32>
    %103 = arith.addf %98, %102 : vector<128x128xf32>
    %c0_82 = arith.constant 0 : index
    %c2_83 = arith.constant 2 : index
    %c0_84 = arith.constant 0 : index
    %104 = vector.load %arg11[%c0_82, %c2_83, %c0_84] : memref<10x18x128xbf16, #tpu.memory_space<vmem>>, vector<8x16x128xbf16>
    %105 = vector.shape_cast %104 : vector<8x16x128xbf16> to vector<128x128xbf16>
    %c256_85 = arith.constant 256 : index
    %c0_86 = arith.constant 0 : index
    %106 = vector.load %arg7[%c256_85, %c0_86] : memref<1152x128xbf16, #tpu.memory_space<vmem>>, vector<128x128xbf16>
    %cst_87 = arith.constant dense<0.000000e+00> : vector<128x128xf32>
    %107 = tpu.matmul %105, %106, %cst_87 {dimension_numbers = #tpu.dot_dimension_numbers<[1], [0], [0], [1], [0, 0, 1, 1], [], []>} : vector<128x128xbf16>, vector<128x128xbf16>, vector<128x128xf32> -> vector<128x128xf32>
    %108 = arith.addf %103, %107 : vector<128x128xf32>
    %c1_88 = arith.constant 1 : index
    %c0_89 = arith.constant 0 : index
    %c0_90 = arith.constant 0 : index
    %109 = vector.load %arg11[%c1_88, %c0_89, %c0_90] : memref<10x18x128xbf16, #tpu.memory_space<vmem>>, vector<8x16x128xbf16>
    %110 = vector.shape_cast %109 : vector<8x16x128xbf16> to vector<128x128xbf16>
    %c384_91 = arith.constant 384 : index
    %c0_92 = arith.constant 0 : index
    %111 = vector.load %arg7[%c384_91, %c0_92] : memref<1152x128xbf16, #tpu.memory_space<vmem>>, vector<128x128xbf16>
    %cst_93 = arith.constant dense<0.000000e+00> : vector<128x128xf32>
    %112 = tpu.matmul %110, %111, %cst_93 {dimension_numbers = #tpu.dot_dimension_numbers<[1], [0], [0], [1], [0, 0, 1, 1], [], []>} : vector<128x128xbf16>, vector<128x128xbf16>, vector<128x128xf32> -> vector<128x128xf32>
    %113 = arith.addf %108, %112 : vector<128x128xf32>
    %c1_94 = arith.constant 1 : index
    %c1_95 = arith.constant 1 : index
    %c0_96 = arith.constant 0 : index
    %114 = vector.load %arg11[%c1_94, %c1_95, %c0_96] : memref<10x18x128xbf16, #tpu.memory_space<vmem>>, vector<8x16x128xbf16>
    %115 = vector.shape_cast %114 : vector<8x16x128xbf16> to vector<128x128xbf16>
    %c512_97 = arith.constant 512 : index
    %c0_98 = arith.constant 0 : index
    %116 = vector.load %arg7[%c512_97, %c0_98] : memref<1152x128xbf16, #tpu.memory_space<vmem>>, vector<128x128xbf16>
    %cst_99 = arith.constant dense<0.000000e+00> : vector<128x128xf32>
    %117 = tpu.matmul %115, %116, %cst_99 {dimension_numbers = #tpu.dot_dimension_numbers<[1], [0], [0], [1], [0, 0, 1, 1], [], []>} : vector<128x128xbf16>, vector<128x128xbf16>, vector<128x128xf32> -> vector<128x128xf32>
    %118 = arith.addf %113, %117 : vector<128x128xf32>
    %c1_100 = arith.constant 1 : index
    %c2_101 = arith.constant 2 : index
    %c0_102 = arith.constant 0 : index
    %119 = vector.load %arg11[%c1_100, %c2_101, %c0_102] : memref<10x18x128xbf16, #tpu.memory_space<vmem>>, vector<8x16x128xbf16>
    %120 = vector.shape_cast %119 : vector<8x16x128xbf16> to vector<128x128xbf16>
    %c640_103 = arith.constant 640 : index
    %c0_104 = arith.constant 0 : index
    %121 = vector.load %arg7[%c640_103, %c0_104] : memref<1152x128xbf16, #tpu.memory_space<vmem>>, vector<128x128xbf16>
    %cst_105 = arith.constant dense<0.000000e+00> : vector<128x128xf32>
    %122 = tpu.matmul %120, %121, %cst_105 {dimension_numbers = #tpu.dot_dimension_numbers<[1], [0], [0], [1], [0, 0, 1, 1], [], []>} : vector<128x128xbf16>, vector<128x128xbf16>, vector<128x128xf32> -> vector<128x128xf32>
    %123 = arith.addf %118, %122 : vector<128x128xf32>
    %c2_106 = arith.constant 2 : index
    %c0_107 = arith.constant 0 : index
    %c0_108 = arith.constant 0 : index
    %124 = vector.load %arg11[%c2_106, %c0_107, %c0_108] : memref<10x18x128xbf16, #tpu.memory_space<vmem>>, vector<8x16x128xbf16>
    %125 = vector.shape_cast %124 : vector<8x16x128xbf16> to vector<128x128xbf16>
    %c768_109 = arith.constant 768 : index
    %c0_110 = arith.constant 0 : index
    %126 = vector.load %arg7[%c768_109, %c0_110] : memref<1152x128xbf16, #tpu.memory_space<vmem>>, vector<128x128xbf16>
    %cst_111 = arith.constant dense<0.000000e+00> : vector<128x128xf32>
    %127 = tpu.matmul %125, %126, %cst_111 {dimension_numbers = #tpu.dot_dimension_numbers<[1], [0], [0], [1], [0, 0, 1, 1], [], []>} : vector<128x128xbf16>, vector<128x128xbf16>, vector<128x128xf32> -> vector<128x128xf32>
    %128 = arith.addf %123, %127 : vector<128x128xf32>
    %c2_112 = arith.constant 2 : index
    %c1_113 = arith.constant 1 : index
    %c0_114 = arith.constant 0 : index
    %129 = vector.load %arg11[%c2_112, %c1_113, %c0_114] : memref<10x18x128xbf16, #tpu.memory_space<vmem>>, vector<8x16x128xbf16>
    %130 = vector.shape_cast %129 : vector<8x16x128xbf16> to vector<128x128xbf16>
    %c896_115 = arith.constant 896 : index
    %c0_116 = arith.constant 0 : index
    %131 = vector.load %arg7[%c896_115, %c0_116] : memref<1152x128xbf16, #tpu.memory_space<vmem>>, vector<128x128xbf16>
    %cst_117 = arith.constant dense<0.000000e+00> : vector<128x128xf32>
    %132 = tpu.matmul %130, %131, %cst_117 {dimension_numbers = #tpu.dot_dimension_numbers<[1], [0], [0], [1], [0, 0, 1, 1], [], []>} : vector<128x128xbf16>, vector<128x128xbf16>, vector<128x128xf32> -> vector<128x128xf32>
    %133 = arith.addf %128, %132 : vector<128x128xf32>
    %c2_118 = arith.constant 2 : index
    %c2_119 = arith.constant 2 : index
    %c0_120 = arith.constant 0 : index
    %134 = vector.load %arg11[%c2_118, %c2_119, %c0_120] : memref<10x18x128xbf16, #tpu.memory_space<vmem>>, vector<8x16x128xbf16>
    %135 = vector.shape_cast %134 : vector<8x16x128xbf16> to vector<128x128xbf16>
    %c1024_121 = arith.constant 1024 : index
    %c0_122 = arith.constant 0 : index
    %136 = vector.load %arg7[%c1024_121, %c0_122] : memref<1152x128xbf16, #tpu.memory_space<vmem>>, vector<128x128xbf16>
    %cst_123 = arith.constant dense<0.000000e+00> : vector<128x128xf32>
    %137 = tpu.matmul %135, %136, %cst_123 {dimension_numbers = #tpu.dot_dimension_numbers<[1], [0], [0], [1], [0, 0, 1, 1], [], []>} : vector<128x128xbf16>, vector<128x128xbf16>, vector<128x128xf32> -> vector<128x128xf32>
    %138 = arith.addf %133, %137 : vector<128x128xf32>
    %139 = vector.broadcast %4 : vector<1x128xf32> to vector<128x128xf32>
    %140 = arith.mulf %138, %139 : vector<128x128xf32>
    %141 = vector.broadcast %5 : vector<1x128xf32> to vector<128x128xf32>
    %142 = arith.addf %140, %141 : vector<128x128xf32>
    %c0_124 = arith.constant 0 : index
    %c0_125 = arith.constant 0 : index
    %c0_126 = arith.constant 0 : index
    %c0_127 = arith.constant 0 : index
    %143 = vector.load %arg3[%c0_124, %c0_125, %c0_126, %c0_127] : memref<1x8x16x128xbf16, #tpu.memory_space<vmem>>, vector<1x8x16x128xbf16>
    %144 = vector.shape_cast %143 : vector<1x8x16x128xbf16> to vector<128x128xbf16>
    %145 = arith.extf %144 : vector<128x128xbf16> to vector<128x128xf32>
    %146 = arith.addf %142, %145 : vector<128x128xf32>
    %cst_128 = arith.constant 0.000000e+00 : f32
    %147 = vector.broadcast %cst_128 : f32 to vector<128x128xf32>
    %148 = arith.maximumf %146, %147 : vector<128x128xf32>
    %149 = vector.shape_cast %148 : vector<128x128xf32> to vector<1x8x16x128xf32>
    %c0_129 = arith.constant 0 : index
    %c0_130 = arith.constant 0 : index
    %c0_131 = arith.constant 0 : index
    %c0_132 = arith.constant 0 : index
    %150 = vector.load %arg10[%c0_129, %c0_130, %c0_131, %c0_132] : memref<1x8x16x128xf32, #tpu.memory_space<vmem>>, vector<1x8x16x128xf32>
    tpu.vector_store %arg10[%c0_129, %c0_130, %c0_131, %c0_132], %149 {strides = array<i32>} : memref<1x8x16x128xf32, #tpu.memory_space<vmem>>, vector<1x8x16x128xf32>,
    return
  }
  func.func @transform_0(%arg0: i32, %arg1: i32) -> (i32, i32, i32, i32) {
    %c0_i32 = arith.constant 0 : i32
    %c0_i32_0 = arith.constant 0 : i32
    %c0_i32_1 = arith.constant 0 : i32
    %c0_i32_2 = arith.constant 0 : i32
    return %arg0, %c0_i32, %c0_i32_0, %c0_i32_1 : i32, i32, i32, i32
  }
  func.func @transform_1(%arg0: i32, %arg1: i32) -> (i32, i32, i32, i32) {
    %c0_i32 = arith.constant 0 : i32
    %c0_i32_0 = arith.constant 0 : i32
    %c0_i32_1 = arith.constant 0 : i32
    return %arg0, %arg1, %c0_i32, %c0_i32_0 : i32, i32, i32, i32
  }
  func.func @transform_2(%arg0: i32, %arg1: i32) -> (i32, i32) {
    %c0_i32 = arith.constant 0 : i32
    %c0_i32_0 = arith.constant 0 : i32
    %c0_i32_1 = arith.constant 0 : i32
    return %c0_i32, %c0_i32_0 : i32, i32
  }
  func.func @transform_3(%arg0: i32, %arg1: i32) -> (i32, i32) {
    %c0_i32 = arith.constant 0 : i32
    %c0_i32_0 = arith.constant 0 : i32
    %c0_i32_1 = arith.constant 0 : i32
    return %c0_i32, %c0_i32_0 : i32, i32
  }
  func.func @transform_4(%arg0: i32, %arg1: i32) -> (i32, i32) {
    %c0_i32 = arith.constant 0 : i32
    %c0_i32_0 = arith.constant 0 : i32
    %c0_i32_1 = arith.constant 0 : i32
    return %c0_i32, %c0_i32_0 : i32, i32
  }
  func.func @transform_5(%arg0: i32, %arg1: i32) -> (i32, i32) {
    %c0_i32 = arith.constant 0 : i32
    %c0_i32_0 = arith.constant 0 : i32
    %c0_i32_1 = arith.constant 0 : i32
    return %c0_i32, %c0_i32_0 : i32, i32
  }
  func.func @transform_6(%arg0: i32, %arg1: i32) -> (i32, i32) {
    %c0_i32 = arith.constant 0 : i32
    %c0_i32_0 = arith.constant 0 : i32
    %c0_i32_1 = arith.constant 0 : i32
    return %c0_i32, %c0_i32_0 : i32, i32
  }
  func.func @transform_7(%arg0: i32, %arg1: i32) -> (i32, i32) {
    %c0_i32 = arith.constant 0 : i32
    %c0_i32_0 = arith.constant 0 : i32
    %c0_i32_1 = arith.constant 0 : i32
    return %c0_i32, %c0_i32_0 : i32, i32
  }
  func.func @transform_8(%arg0: i32, %arg1: i32) -> (i32, i32, i32, i32) {
    %c0_i32 = arith.constant 0 : i32
    %c0_i32_0 = arith.constant 0 : i32
    %c0_i32_1 = arith.constant 0 : i32
    return %arg0, %arg1, %c0_i32, %c0_i32_0 : i32, i32, i32, i32
  }
}

</mosaic_0001>

<llo_original>
// kernel: basic_block_forward.1
$region0: #{basic_block_forward.1}
  #allocation0 [shape = 'u32[]', space=smem, size = 0x4, offset = 0x4, fixed_abs, tag = 'smem constant byte address 0x4 - core index']
  #allocation1 [shape = 'u32[72,128]{1,0:T(1,128)}', space=vmem, size = 0x9000, scoped, tag = 'internal scratch']
  #allocation2 [shape = 'bf16[10,18,128]{2,1,0:T(8,128)(2,1)}', space=vmem, size = 0xf000, scoped, tag = 'scratch operand']
  %s0 = inlined_call_operand.vmem [shape: bf16[2,20,18,128], index: 0, kind: input, shape index: {}]
  %s1 = inlined_call_operand.vmem [shape: bf16[2,16,16,128], index: 1, kind: input, shape index: {}]
  %s2 = inlined_call_operand.vmem [shape: bf16[1152,128], index: 2, kind: input, shape index: {}]
  %s3 = inlined_call_operand.vmem [shape: f32[1,128], index: 3, kind: input, shape index: {}]
  %s4 = inlined_call_operand.vmem [shape: f32[1,128], index: 4, kind: input, shape index: {}]
  %s5 = inlined_call_operand.vmem [shape: bf16[1152,128], index: 5, kind: input, shape index: {}]
  %s6 = inlined_call_operand.vmem [shape: f32[1,128], index: 6, kind: input, shape index: {}]
  %s7 = inlined_call_operand.vmem [shape: f32[1,128], index: 7, kind: input, shape index: {}]
  %s8 = inlined_call_operand.vmem [shape: f32[2,16,16,128], index: 8, kind: output, shape index: {}]
  %s9 = sld [smem:[#allocation0]]
  $region73: #{basic_block_forward.1} parent=0
    _
  %s11 = ssub.s32 1, %s9
  %s12 = scalar_select 0, %s11, %s9
  loop: start=0, step=1, limit=6
  $region2: #{basic_block_forward.1} parent=0 // loop_pre_header
    _
  $region3: #{basic_block_forward.1} parent=0 // loop_header
    %s14 = sphi 0, %s18
    %p15 = scmp.ge.s32.totalorder %s14, 6
    %s21 = sphi 0, %s33
    %s22 = sphi 0, %s29
    %s23 = sphi 0, %s21
    %s24 = sphi 0, %s22
    %s25 = sphi 0, %s23
    %s26 = sphi 0, %s24
    %s36 = sphi 0, %s38
    %s39 = sphi 0, %s36
    %s40 = sphi 0, %s39
    %s56 = sphi 0, %s40
    %s64 = sphi 0, %s66
    %s67 = sphi 0, %s64
    %s68 = sphi 0, %s67
    %s84 = sphi 0, %s68
    %s88 = sphi 0, %s88
    %s90 = sphi 0, %s88
    %s91 = sphi 0, %s90
    %s105 = sphi 0, %s91
    %s109 = sphi 0, %s109
    %s111 = sphi 0, %s109
    %s112 = sphi 0, %s111
    %s126 = sphi 0, %s112
    %s130 = sphi 0, %s130
    %s132 = sphi 0, %s130
    %s133 = sphi 0, %s132
    %s147 = sphi 0, %s133
    %s151 = sphi 0, %s151
    %s153 = sphi 0, %s151
    %s154 = sphi 0, %s153
    %s168 = sphi 0, %s154
    %s172 = sphi 0, %s172
    %s174 = sphi 0, %s172
    %s175 = sphi 0, %s174
    %s189 = sphi 0, %s175
    %s193 = sphi 0, %s193
    %s195 = sphi 0, %s193
    %s196 = sphi 0, %s195
    %s210 = sphi 0, %s196
    %s218 = sphi 0, %s220
    %s221 = sphi 0, %s218
    %s222 = sphi 0, %s221
    %s238 = sphi 0, %s222
  $region4: #{basic_block_forward.1} parent=0 // loop_header_branch
    %17 = sbr.rel (%p15) target = $region8
  $region5: #{basic_block_forward.1} parent=0 // loop_body
    %s19 = ssub.s32 %s14, 1
    %s20 = ssub.s32 %s14, 2
    %s27 = sadd.s32 1, %s22
    %p28 = scmp.ge.s32.totalorder %s27, 2
    %s29 = scalar_select %p28, 0, %s27
    %s30 = sadd.s32 1, %s21
    %s31 = scalar_select %p28, %s30, %s21
    %p32 = scmp.ge.s32.totalorder %s31, 2
    %s33 = scalar_select %p32, 0, %s31
    %s34 = ssub.s32 %s21, %s33
    %p35 = scmp.eq.s32.totalorder %s34, 0
    %s37 = sadd.s32 %s36, 1
    %s38 = scalar_select %p35, %s36, %s37
    %p41 = pneg %p35
    %p42 = scmp.eq.s32.totalorder %s14, 3
    %p43 = por %p41, %p42
    %p44 = scmp.ne.s32.totalorder %s36, %s39
    %p45 = scmp.eq.s32.totalorder %s14, 0
    %p46 = por %p44, %p45
    %p47 = scmp.ne.s32.totalorder %s36, %s39
    %p48 = scmp.eq.s32.totalorder %s19, 3
    %p49 = por %p47, %p48
    %p50 = scmp.ne.s32.totalorder %s39, %s40
    %p51 = scmp.eq.s32.totalorder %s19, 0
    %p52 = por %p50, %p51
    %p53 = scmp.ne.s32.totalorder %s39, %s40
    %p54 = scmp.eq.s32.totalorder %s20, 3
    %p55 = por %p53, %p54
    %p57 = scmp.ne.s32.totalorder %s40, %s56
    %p58 = scmp.eq.s32.totalorder %s20, 0
    %p59 = por %p57, %p58
    %s60 = ssub.s32 %s21, %s33
    %s61 = ssub.s32 %s22, %s29
    %s62 = sor.u32 %s60, %s61
    %p63 = scmp.eq.s32.totalorder %s62, 0
    %s65 = sadd.s32 %s64, 1
    %s66 = scalar_select %p63, %s64, %s65
    %p69 = pneg %p63
    %p70 = scmp.eq.s32.totalorder %s14, 3
    %p71 = por %p69, %p70
    %p72 = scmp.ne.s32.totalorder %s64, %s67
    %p73 = scmp.eq.s32.totalorder %s14, 0
    %p74 = por %p72, %p73
    %p75 = scmp.ne.s32.totalorder %s64, %s67
    %p76 = scmp.eq.s32.totalorder %s19, 3
    %p77 = por %p75, %p76
    %p78 = scmp.ne.s32.totalorder %s67, %s68
    %p79 = scmp.eq.s32.totalorder %s19, 0
    %p80 = por %p78, %p79
    %p81 = scmp.ne.s32.totalorder %s67, %s68
    %p82 = scmp.eq.s32.totalorder %s20, 3
    %p83 = por %p81, %p82
    %p85 = scmp.ne.s32.totalorder %s68, %s84
    %p86 = scmp.eq.s32.totalorder %s20, 0
    %p87 = por %p85, %p86
    %s89 = sadd.s32 %s88, 1
    %p92 = scmp.eq.s32.totalorder %s14, 3
    %p93 = scmp.ne.s32.totalorder %s88, %s90
    %p94 = scmp.eq.s32.totalorder %s14, 0
    %p95 = por %p93, %p94
    %p96 = scmp.ne.s32.totalorder %s88, %s90
    %p97 = scmp.eq.s32.totalorder %s19, 3
    %p98 = por %p96, %p97
    %p99 = scmp.ne.s32.totalorder %s90, %s91
    %p100 = scmp.eq.s32.totalorder %s19, 0
    %p101 = por %p99, %p100
    %p102 = scmp.ne.s32.totalorder %s90, %s91
    %p103 = scmp.eq.s32.totalorder %s20, 3
    %p104 = por %p102, %p103
    %p106 = scmp.ne.s32.totalorder %s91, %s105
    %p107 = scmp.eq.s32.totalorder %s20, 0
    %p108 = por %p106, %p107
    %s110 = sadd.s32 %s109, 1
    %p113 = scmp.eq.s32.totalorder %s14, 3
    %p114 = scmp.ne.s32.totalorder %s109, %s111
    %p115 = scmp.eq.s32.totalorder %s14, 0
    %p116 = por %p114, %p115
    %p117 = scmp.ne.s32.totalorder %s109, %s111
    %p118 = scmp.eq.s32.totalorder %s19, 3
    %p119 = por %p117, %p118
    %p120 = scmp.ne.s32.totalorder %s111, %s112
    %p121 = scmp.eq.s32.totalorder %s19, 0
    %p122 = por %p120, %p121
    %p123 = scmp.ne.s32.totalorder %s111, %s112
    %p124 = scmp.eq.s32.totalorder %s20, 3
    %p125 = por %p123, %p124
    %p127 = scmp.ne.s32.totalorder %s112, %s126
    %p128 = scmp.eq.s32.totalorder %s20, 0
    %p129 = por %p127, %p128
    %s131 = sadd.s32 %s130, 1
    %p134 = scmp.eq.s32.totalorder %s14, 3
    %p135 = scmp.ne.s32.totalorder %s130, %s132
    %p136 = scmp.eq.s32.totalorder %s14, 0
    %p137 = por %p135, %p136
    %p138 = scmp.ne.s32.totalorder %s130, %s132
    %p139 = scmp.eq.s32.totalorder %s19, 3
    %p140 = por %p138, %p139
    %p141 = scmp.ne.s32.totalorder %s132, %s133
    %p142 = scmp.eq.s32.totalorder %s19, 0
    %p143 = por %p141, %p142
    %p144 = scmp.ne.s32.totalorder %s132, %s133
    %p145 = scmp.eq.s32.totalorder %s20, 3
    %p146 = por %p144, %p145
    %p148 = scmp.ne.s32.totalorder %s133, %s147
    %p149 = scmp.eq.s32.totalorder %s20, 0
    %p150 = por %p148, %p149
    %s152 = sadd.s32 %s151, 1
    %p155 = scmp.eq.s32.totalorder %s14, 3
    %p156 = scmp.ne.s32.totalorder %s151, %s153
    %p157 = scmp.eq.s32.totalorder %s14, 0
    %p158 = por %p156, %p157
    %p159 = scmp.ne.s32.totalorder %s151, %s153
    %p160 = scmp.eq.s32.totalorder %s19, 3
    %p161 = por %p159, %p160
    %p162 = scmp.ne.s32.totalorder %s153, %s154
    %p163 = scmp.eq.s32.totalorder %s19, 0
    %p164 = por %p162, %p163
    %p165 = scmp.ne.s32.totalorder %s153, %s154
    %p166 = scmp.eq.s32.totalorder %s20, 3
    %p167 = por %p165, %p166
    %p169 = scmp.ne.s32.totalorder %s154, %s168
    %p170 = scmp.eq.s32.totalorder %s20, 0
    %p171 = por %p169, %p170
    %s173 = sadd.s32 %s172, 1
    %p176 = scmp.eq.s32.totalorder %s14, 3
    %p177 = scmp.ne.s32.totalorder %s172, %s174
    %p178 = scmp.eq.s32.totalorder %s14, 0
    %p179 = por %p177, %p178
    %p180 = scmp.ne.s32.totalorder %s172, %s174
    %p181 = scmp.eq.s32.totalorder %s19, 3
    %p182 = por %p180, %p181
    %p183 = scmp.ne.s32.totalorder %s174, %s175
    %p184 = scmp.eq.s32.totalorder %s19, 0
    %p185 = por %p183, %p184
    %p186 = scmp.ne.s32.totalorder %s174, %s175
    %p187 = scmp.eq.s32.totalorder %s20, 3
    %p188 = por %p186, %p187
    %p190 = scmp.ne.s32.totalorder %s175, %s189
    %p191 = scmp.eq.s32.totalorder %s20, 0
    %p192 = por %p190, %p191
    %s194 = sadd.s32 %s193, 1
    %p197 = scmp.eq.s32.totalorder %s14, 3
    %p198 = scmp.ne.s32.totalorder %s193, %s195
    %p199 = scmp.eq.s32.totalorder %s14, 0
    %p200 = por %p198, %p199
    %p201 = scmp.ne.s32.totalorder %s193, %s195
    %p202 = scmp.eq.s32.totalorder %s19, 3
    %p203 = por %p201, %p202
    %p204 = scmp.ne.s32.totalorder %s195, %s196
    %p205 = scmp.eq.s32.totalorder %s19, 0
    %p206 = por %p204, %p205
    %p207 = scmp.ne.s32.totalorder %s195, %s196
    %p208 = scmp.eq.s32.totalorder %s20, 3
    %p209 = por %p207, %p208
    %p211 = scmp.ne.s32.totalorder %s196, %s210
    %p212 = scmp.eq.s32.totalorder %s20, 0
    %p213 = por %p211, %p212
    %s214 = ssub.s32 %s21, %s33
    %s215 = ssub.s32 %s22, %s29
    %s216 = sor.u32 %s214, %s215
    %p217 = scmp.eq.s32.totalorder %s216, 0
    %s219 = sadd.s32 %s218, 1
    %s220 = scalar_select %p217, %s218, %s219
    %p223 = pneg %p217
    %p224 = scmp.eq.s32.totalorder %s14, 3
    %p225 = por %p223, %p224
    %p226 = scmp.ne.s32.totalorder %s218, %s221
    %p227 = scmp.eq.s32.totalorder %s14, 0
    %p228 = por %p226, %p227
    %p229 = scmp.ne.s32.totalorder %s218, %s221
    %p230 = scmp.eq.s32.totalorder %s19, 3
    %p231 = por %p229, %p230
    %p232 = scmp.ne.s32.totalorder %s221, %s222
    %p233 = scmp.eq.s32.totalorder %s19, 0
    %p234 = por %p232, %p233
    %p235 = scmp.ne.s32.totalorder %s221, %s222
    %p236 = scmp.eq.s32.totalorder %s20, 3
    %p237 = por %p235, %p236
    %p239 = scmp.ne.s32.totalorder %s222, %s238
    %p240 = scmp.eq.s32.totalorder %s20, 0
    %p241 = por %p239, %p240
    %p242 = scmp.le.s32.totalorder 1, %s14
    %p243 = scmp.lt.s32.totalorder %s14, 5
    %p244 = pnand %p242, %p243
    %p245 = pneg %p244
    // Predicated region
    $region9: #{basic_block_forward.1} parent=5 // pred_check
      _
    $region10: #{basic_block_forward.1} parent=5 // pred_check_branch
      %247 = sbr.rel (%p244) target = $region12
    $region11: #{basic_block_forward.1} parent=5 // pred_region
      %s248 = ssub.s32 %s14, 1
      // Predicated region
      $region13: #{basic_block_forward.1} parent=11 // pred_check
        %p249 = pneg %p101
      $region14: #{basic_block_forward.1} parent=11 // pred_check_branch
        %251 = sbr.rel (%p249) target = $region16
      $region15: #{basic_block_forward.1} parent=11 // pred_region
        _
      $region16: #{basic_block_forward.1} parent=11 // pred_fallthru
        _
      // Predicated region
      $region17: #{basic_block_forward.1} parent=11 // pred_check
        %p252 = pneg %p122
      $region18: #{basic_block_forward.1} parent=11 // pred_check_branch
        %254 = sbr.rel (%p252) target = $region20
      $region19: #{basic_block_forward.1} parent=11 // pred_region
        _
      $region20: #{basic_block_forward.1} parent=11 // pred_fallthru
        _
      // Predicated region
      $region21: #{basic_block_forward.1} parent=11 // pred_check
        %p255 = pneg %p143
      $region22: #{basic_block_forward.1} parent=11 // pred_check_branch
        %257 = sbr.rel (%p255) target = $region24
      $region23: #{basic_block_forward.1} parent=11 // pred_region
        _
      $region24: #{basic_block_forward.1} parent=11 // pred_fallthru
        _
      // Predicated region
      $region25: #{basic_block_forward.1} parent=11 // pred_check
        %p258 = pneg %p164
      $region26: #{basic_block_forward.1} parent=11 // pred_check_branch
        %260 = sbr.rel (%p258) target = $region28
      $region27: #{basic_block_forward.1} parent=11 // pred_region
        _
      $region28: #{basic_block_forward.1} parent=11 // pred_fallthru
        _
      // Predicated region
      $region29: #{basic_block_forward.1} parent=11 // pred_check
        %p261 = pneg %p185
      $region30: #{basic_block_forward.1} parent=11 // pred_check_branch
        %263 = sbr.rel (%p261) target = $region32
      $region31: #{basic_block_forward.1} parent=11 // pred_region
        _
      $region32: #{basic_block_forward.1} parent=11 // pred_fallthru
        _
      // Predicated region
      $region33: #{basic_block_forward.1} parent=11 // pred_check
        %p264 = pneg %p206
      $region34: #{basic_block_forward.1} parent=11 // pred_check_branch
        %266 = sbr.rel (%p264) target = $region36
      $region35: #{basic_block_forward.1} parent=11 // pred_region
        _
      $region36: #{basic_block_forward.1} parent=11 // pred_fallthru
        _
    $region12: #{basic_block_forward.1} parent=5 // pred_fallthru
      _
    %p267 = scmp.lt.s32.totalorder %s14, 4
    // Predicated region
    $region37: #{basic_block_forward.1} parent=5 // pred_check
      %p268 = pneg %p267
    $region38: #{basic_block_forward.1} parent=5 // pred_check_branch
      %270 = sbr.rel (%p268) target = $region40
    $region39: #{basic_block_forward.1} parent=5 // pred_region
      // Predicated region
      $region41: #{basic_block_forward.1} parent=39 // pred_check
        %p271 = pneg %p46
      $region42: #{basic_block_forward.1} parent=39 // pred_check_branch
        %273 = sbr.rel (%p271) target = $region44
      $region43: #{basic_block_forward.1} parent=39 // pred_region
        %p274 = scmp.lt.s32.totalorder %s21, 1
        %s275 = scalar_select %p274, %s21, 1
        %s276 = smul.addr %s275, 60
        %s277 = smul.addr %s276, 4
        %s278 = scalar_lea.vmem %s0, %s277
      $region44: #{basic_block_forward.1} parent=39 // pred_fallthru
        _
      // Predicated region
      $region45: #{basic_block_forward.1} parent=39 // pred_check
        %p279 = pneg %p74
      $region46: #{basic_block_forward.1} parent=39 // pred_check_branch
        %281 = sbr.rel (%p279) target = $region48
      $region47: #{basic_block_forward.1} parent=39 // pred_region
        %s282 = smul.u32 8, %s22
        %p283 = scmp.lt.s32.totalorder %s21, 1
        %s284 = scalar_select %p283, %s21, 1
        %p285 = scmp.lt.s32.totalorder %s282, 15
        %s286 = scalar_select %p285, %s282, 15
        %s287 = smul.addr %s286, 2
        %s288 = smul.addr %s284, 32
        %s289 = sadd.s32 %s287, %s288
        %s290 = smul.addr %s289, 4
        %s291 = scalar_lea.vmem %s1, %s290
        %s292 = smul.u32 8, %s22
      $region48: #{basic_block_forward.1} parent=39 // pred_fallthru
        _
    $region40: #{basic_block_forward.1} parent=5 // pred_fallthru
      _
    %p293 = scmp.le.s32.totalorder 1, %s14
    %p294 = scmp.lt.s32.totalorder %s14, 5
    %p295 = pnand %p293, %p294
    %p296 = pneg %p295
    // Predicated region
    $region49: #{basic_block_forward.1} parent=5 // pred_check
      _
    $region50: #{basic_block_forward.1} parent=5 // pred_check_branch
      %298 = sbr.rel (%p295) target = $region52
    $region51: #{basic_block_forward.1} parent=5 // pred_region
      %s299 = ssub.s32 %s14, 1
      %p300 = scmp.lt.s32.totalorder %s23, 1
      %s301 = scalar_select %p300, %s23, 1
      %s302 = smul.addr %s301, 60
      %s303 = smul.addr %s302, 4
      %s304 = scalar_lea.vmem %s0, %s303
      %p305 = pneg %p52
      %p306 = pneg %p49
      %s307 = smul.u32 8, %s24
      %p308 = scmp.lt.s32.totalorder %s23, 1
      %s309 = scalar_select %p308, %s23, 1
      %p310 = scmp.lt.s32.totalorder %s307, 15
      %s311 = scalar_select %p310, %s307, 15
      %s312 = smul.addr %s311, 2
      %s313 = smul.addr %s309, 32
      %s314 = sadd.s32 %s312, %s313
      %s315 = smul.addr %s314, 4
      %s316 = scalar_lea.vmem %s1, %s315
      %p317 = pneg %p80
      %p318 = pneg %p77
      %p319 = pneg %p101
      %p320 = pneg %p98
      %p321 = pneg %p122
      %p322 = pneg %p119
      %p323 = pneg %p143
      %p324 = pneg %p140
      %p325 = pneg %p164
      %p326 = pneg %p161
      %p327 = pneg %p185
      %p328 = pneg %p182
      %p329 = pneg %p206
      %p330 = pneg %p203
      %p331 = pneg %p234
      %p332 = pneg %p231
      %s333 = smul.u32 8, %s24
      %p334 = scmp.lt.s32.totalorder %s23, 1
      %s335 = scalar_select %p334, %s23, 1
      %p336 = scmp.lt.s32.totalorder %s333, 15
      %s337 = scalar_select %p336, %s333, 15
      %s338 = smul.addr %s337, 2
      %s339 = smul.addr %s335, 32
      %s340 = sadd.s32 %s338, %s339
      %s341 = smul.addr %s340, 8
      %s342 = scalar_lea.vmem %s8, %s341
      %p343 = scmp.lt.s32.totalorder %s23, 1
      %s344 = scalar_select %p343, %s23, 1
      %s345 = smul.addr %s344, 60
      %s346 = smul.addr %s345, 4
      %s347 = scalar_lea.vmem %s0, %s346
      %s348 = smul.u32 8, %s24
      %p349 = scmp.lt.s32.totalorder %s23, 1
      %s350 = scalar_select %p349, %s23, 1
      %p351 = scmp.lt.s32.totalorder %s348, 15
      %s352 = scalar_select %p351, %s348, 15
      %s353 = smul.addr %s352, 2
      %s354 = smul.addr %s350, 32
      %s355 = sadd.s32 %s353, %s354
      %s356 = smul.addr %s355, 4
      %s357 = scalar_lea.vmem %s1, %s356
      %s358 = smul.u32 8, %s24
      %s359 = smul.u32 8, %s24
      %p360 = scmp.lt.s32.totalorder %s23, 1
      %s361 = scalar_select %p360, %s23, 1
      %p362 = scmp.lt.s32.totalorder %s359, 15
      %s363 = scalar_select %p362, %s359, 15
      %s364 = smul.addr %s363, 2
      %s365 = smul.addr %s361, 32
      %s366 = sadd.s32 %s364, %s365
      %s367 = smul.addr %s366, 8
      %s368 = scalar_lea.vmem %s8, %s367
      %s369 = smul.u32 8, %s24
      %s371 = smul.u32 %s24, 8
      %v372 = vld [vmem:[%s3] sm:$0x1]
      %v373 = vld [vmem:[%s4] sm:$0x1]
      %v374 = vld [vmem:[%s6] sm:$0x1]
      %v375 = vld [vmem:[%s7] sm:$0x1]
      %s376 = smul.u32 %s371, 3
      %s377 = smul.addr %s376, 4
      %s378 = scalar_lea.vmem %s347, %s377
      %v379 = vld [vmem:[%s378] sm:$0xf]
      %v380 = vld [vmem:[%s378 + $0x4] sm:$0xf]
      %v381 = vld [vmem:[%s378 + $0xc] sm:$0xf]
      %v382 = vld [vmem:[%s378 + $0x10] sm:$0xf]
      %v383 = vld [vmem:[%s378 + $0x18] sm:$0xf]
      %v384 = vld [vmem:[%s378 + $0x1c] sm:$0xf]
      %v385 = vld [vmem:[%s378 + $0x24] sm:$0xf]
      %v386 = vld [vmem:[%s378 + $0x28] sm:$0xf]
      %v387 = vld [vmem:[%s378 + $0x30] sm:$0xf]
      %v388 = vld [vmem:[%s378 + $0x34] sm:$0xf]
      %v389 = vld [vmem:[%s378 + $0x3c] sm:$0xf]
      %v390 = vld [vmem:[%s378 + $0x40] sm:$0xf]
      %v391 = vld [vmem:[%s378 + $0x48] sm:$0xf]
      %v392 = vld [vmem:[%s378 + $0x4c] sm:$0xf]
      %v393 = vld [vmem:[%s378 + $0x54] sm:$0xf]
      %v394 = vld [vmem:[%s378 + $0x58] sm:$0xf]
      %v395 = vld [vmem:[%s378 + $0x60] sm:$0xf]
      %v396 = vld [vmem:[%s378 + $0x64] sm:$0xf]
      %v397 = vld [vmem:[%s378 + $0x6c] sm:$0xf]
      %v398 = vld [vmem:[%s378 + $0x70] sm:$0xf]
      %v399 = vld [vmem:[%s2] sm:$0xf]
      %v400 = vld [vmem:[%s2 + $0x4] sm:$0xf]
      %v401 = vld [vmem:[%s2 + $0x8] sm:$0xf]
      %v402 = vld [vmem:[%s2 + $0xc] sm:$0xf]
      %v403 = vld [vmem:[%s2 + $0x10] sm:$0xf]
      %v404 = vld [vmem:[%s2 + $0x14] sm:$0xf]
      %v405 = vld [vmem:[%s2 + $0x18] sm:$0xf]
      %v406 = vld [vmem:[%s2 + $0x1c] sm:$0xf]
      %v407 = vld [vmem:[%s2 + $0x20] sm:$0xf]
      %v408 = vld [vmem:[%s2 + $0x24] sm:$0xf]
      %v409 = vld [vmem:[%s2 + $0x28] sm:$0xf]
      %v410 = vld [vmem:[%s2 + $0x2c] sm:$0xf]
      %v411 = vld [vmem:[%s2 + $0x30] sm:$0xf]
      %v412 = vld [vmem:[%s2 + $0x34] sm:$0xf]
      %v413 = vld [vmem:[%s2 + $0x38] sm:$0xf]
      %v414 = vld [vmem:[%s2 + $0x3c] sm:$0xf]
      %v415 = vld [vmem:[%s378 + $0x8] sm:$0x1]
      %v416 = vld [vmem:[%s378 + $0x14] sm:$0x1]
      %v417 = vld [vmem:[%s378 + $0x20] sm:$0x1]
      %v418 = vld [vmem:[%s378 + $0x2c] sm:$0x1]
      %v419 = vld [vmem:[%s378 + $0x38] sm:$0x1]
      %v420 = vld [vmem:[%s378 + $0x44] sm:$0x1]
      %v421 = vld [vmem:[%s378 + $0x50] sm:$0x1]
      %v422 = vld [vmem:[%s378 + $0x5c] sm:$0x1]
      %v423 = vld [vmem:[%s378 + $0x68] sm:$0x1]
      %v424 = vld [vmem:[%s378 + $0x74] sm:$0x1]
      %vm425 = vsmask.f32 3328
      %vm426 = vsmask.f32 7440
      %vm427 = vmor %vm425, %vm426
      %v429 = vshrl.u32 %v379, 16
      %v431 = vrot.slane %v429, 4
      %v432 = vshll.u32 %v379, 16
      %v434 = vrot.slane %v432, 5
      %v435 = vor.u32 %v431, %v434
      %v436 = vrot.slane %v435, 4
      %v438 = vshll.u32 %v380, 16
      %v440 = vrot.slane %v438, 5
      %v441 = vsel %vm427, %v436, %v440
      %v442 = vshrl.u32 %v380, 16
      %v444 = vrot.slane %v442, 4
      %v445 = vor.u32 %v444, %v440
      %v446 = vrot.slane %v445, 4
      %v448 = vshll.u32 %v415, 16
      %v450 = vrot.slane %v448, 5
      %v451 = vsel %vm427, %v446, %v450
      %v453 = vshrl.u32 %v381, 16
      %v455 = vrot.slane %v453, 4
      %v456 = vshll.u32 %v381, 16
      %v458 = vrot.slane %v456, 5
      %v459 = vor.u32 %v455, %v458
      %v460 = vrot.slane %v459, 4
      %v462 = vshll.u32 %v382, 16
      %v464 = vrot.slane %v462, 5
      %v465 = vsel %vm427, %v460, %v464
      %v466 = vshrl.u32 %v382, 16
      %v468 = vrot.slane %v466, 4
      %v469 = vor.u32 %v468, %v464
      %v470 = vrot.slane %v469, 4
      %v472 = vshll.u32 %v416, 16
      %v474 = vrot.slane %v472, 5
      %v475 = vsel %vm427, %v470, %v474
      %v477 = vshrl.u32 %v383, 16
      %v479 = vrot.slane %v477, 4
      %v480 = vshll.u32 %v383, 16
      %v482 = vrot.slane %v480, 5
      %v483 = vor.u32 %v479, %v482
      %v484 = vrot.slane %v483, 4
      %v486 = vshll.u32 %v384, 16
      %v488 = vrot.slane %v486, 5
      %v489 = vsel %vm427, %v484, %v488
      %v490 = vshrl.u32 %v384, 16
      %v492 = vrot.slane %v490, 4
      %v493 = vor.u32 %v492, %v488
      %v494 = vrot.slane %v493, 4
      %v496 = vshll.u32 %v417, 16
      %v498 = vrot.slane %v496, 5
      %v499 = vsel %vm427, %v494, %v498
      %v501 = vshrl.u32 %v385, 16
      %v503 = vrot.slane %v501, 4
      %v504 = vshll.u32 %v385, 16
      %v506 = vrot.slane %v504, 5
      %v507 = vor.u32 %v503, %v506
      %v508 = vrot.slane %v507, 4
      %v510 = vshll.u32 %v386, 16
      %v512 = vrot.slane %v510, 5
      %v513 = vsel %vm427, %v508, %v512
      %v514 = vshrl.u32 %v386, 16
      %v516 = vrot.slane %v514, 4
      %v517 = vor.u32 %v516, %v512
      %v518 = vrot.slane %v517, 4
      %v520 = vshll.u32 %v418, 16
      %v522 = vrot.slane %v520, 5
      %v523 = vsel %vm427, %v518, %v522
      %v525 = vshrl.u32 %v387, 16
      %v527 = vrot.slane %v525, 4
      %v528 = vshll.u32 %v387, 16
      %v530 = vrot.slane %v528, 5
      %v531 = vor.u32 %v527, %v530
      %v532 = vrot.slane %v531, 4
      %v534 = vshll.u32 %v388, 16
      %v536 = vrot.slane %v534, 5
      %v537 = vsel %vm427, %v532, %v536
      %v538 = vshrl.u32 %v388, 16
      %v540 = vrot.slane %v538, 4
      %v541 = vor.u32 %v540, %v536
      %v542 = vrot.slane %v541, 4
      %v544 = vshll.u32 %v419, 16
      %v546 = vrot.slane %v544, 5
      %v547 = vsel %vm427, %v542, %v546
      %v549 = vshrl.u32 %v389, 16
      %v551 = vrot.slane %v549, 4
      %v552 = vshll.u32 %v389, 16
      %v554 = vrot.slane %v552, 5
      %v555 = vor.u32 %v551, %v554
      %v556 = vrot.slane %v555, 4
      %v558 = vshll.u32 %v390, 16
      %v560 = vrot.slane %v558, 5
      %v561 = vsel %vm427, %v556, %v560
      %v562 = vshrl.u32 %v390, 16
      %v564 = vrot.slane %v562, 4
      %v565 = vor.u32 %v564, %v560
      %v566 = vrot.slane %v565, 4
      %v568 = vshll.u32 %v420, 16
      %v570 = vrot.slane %v568, 5
      %v571 = vsel %vm427, %v566, %v570
      %v573 = vshrl.u32 %v391, 16
      %v575 = vrot.slane %v573, 4
      %v576 = vshll.u32 %v391, 16
      %v578 = vrot.slane %v576, 5
      %v579 = vor.u32 %v575, %v578
      %v580 = vrot.slane %v579, 4
      %v582 = vshll.u32 %v392, 16
      %v584 = vrot.slane %v582, 5
      %v585 = vsel %vm427, %v580, %v584
      %v586 = vshrl.u32 %v392, 16
      %v588 = vrot.slane %v586, 4
      %v589 = vor.u32 %v588, %v584
      %v590 = vrot.slane %v589, 4
      %v592 = vshll.u32 %v421, 16
      %v594 = vrot.slane %v592, 5
      %v595 = vsel %vm427, %v590, %v594
      %v597 = vshrl.u32 %v393, 16
      %v599 = vrot.slane %v597, 4
      %v600 = vshll.u32 %v393, 16
      %v602 = vrot.slane %v600, 5
      %v603 = vor.u32 %v599, %v602
      %v604 = vrot.slane %v603, 4
      %v606 = vshll.u32 %v394, 16
      %v608 = vrot.slane %v606, 5
      %v609 = vsel %vm427, %v604, %v608
      %v610 = vshrl.u32 %v394, 16
      %v612 = vrot.slane %v610, 4
      %v613 = vor.u32 %v612, %v608
      %v614 = vrot.slane %v613, 4
      %v616 = vshll.u32 %v422, 16
      %v618 = vrot.slane %v616, 5
      %v619 = vsel %vm427, %v614, %v618
      %v621 = vshrl.u32 %v395, 16
      %v623 = vrot.slane %v621, 4
      %v624 = vshll.u32 %v395, 16
      %v626 = vrot.slane %v624, 5
      %v627 = vor.u32 %v623, %v626
      %v628 = vrot.slane %v627, 4
      %v630 = vshll.u32 %v396, 16
      %v632 = vrot.slane %v630, 5
      %v633 = vsel %vm427, %v628, %v632
      %v634 = vshrl.u32 %v396, 16
      %v636 = vrot.slane %v634, 4
      %v637 = vor.u32 %v636, %v632
      %v638 = vrot.slane %v637, 4
      %v640 = vshll.u32 %v423, 16
      %v642 = vrot.slane %v640, 5
      %v643 = vsel %vm427, %v638, %v642
      %v645 = vshrl.u32 %v397, 16
      %v647 = vrot.slane %v645, 4
      %v648 = vshll.u32 %v397, 16
      %v650 = vrot.slane %v648, 5
      %v651 = vor.u32 %v647, %v650
      %v652 = vrot.slane %v651, 4
      %v654 = vshll.u32 %v398, 16
      %v656 = vrot.slane %v654, 5
      %v657 = vsel %vm427, %v652, %v656
      %v658 = vshrl.u32 %v398, 16
      %v660 = vrot.slane %v658, 4
      %v661 = vor.u32 %v660, %v656
      %v662 = vrot.slane %v661, 4
      %v664 = vshll.u32 %v424, 16
      %v666 = vrot.slane %v664, 5
      %v667 = vsel %vm427, %v662, %v666
      %v668 = vld [vmem:[%s2 + $0x40] sm:$0xf]
      %v669 = vld [vmem:[%s2 + $0x44] sm:$0xf]
      %v670 = vld [vmem:[%s2 + $0x48] sm:$0xf]
      %v671 = vld [vmem:[%s2 + $0x4c] sm:$0xf]
      %v672 = vld [vmem:[%s2 + $0x50] sm:$0xf]
      %v673 = vld [vmem:[%s2 + $0x54] sm:$0xf]
      %v674 = vld [vmem:[%s2 + $0x58] sm:$0xf]
      %v675 = vld [vmem:[%s2 + $0x5c] sm:$0xf]
      %v676 = vld [vmem:[%s2 + $0x60] sm:$0xf]
      %v677 = vld [vmem:[%s2 + $0x64] sm:$0xf]
      %v678 = vld [vmem:[%s2 + $0x68] sm:$0xf]
      %v679 = vld [vmem:[%s2 + $0x6c] sm:$0xf]
      %v680 = vld [vmem:[%s2 + $0x70] sm:$0xf]
      %v681 = vld [vmem:[%s2 + $0x74] sm:$0xf]
      %v682 = vld [vmem:[%s2 + $0x78] sm:$0xf]
      %v683 = vld [vmem:[%s2 + $0x7c] sm:$0xf]
      %v684 = vunpack.c.l.b16 %v441
      %v685 = vunpack.c.l.b16 %v451
      %v686 = vunpack.c.l.b16 %v465
      %v687 = vunpack.c.l.b16 %v475
      %v688 = vunpack.c.l.b16 %v489
      %v689 = vunpack.c.l.b16 %v499
      %v690 = vunpack.c.l.b16 %v513
      %v691 = vunpack.c.l.b16 %v523
      %v692 = vunpack.c.l.b16 %v537
      %v693 = vunpack.c.l.b16 %v547
      %v694 = vunpack.c.l.b16 %v561
      %v695 = vunpack.c.l.b16 %v571
      %v696 = vunpack.c.l.b16 %v585
      %v697 = vunpack.c.l.b16 %v595
      %v698 = vunpack.c.l.b16 %v609
      %v699 = vunpack.c.l.b16 %v619
      %v700 = vunpack.c.l.b16 %v633
      %v701 = vunpack.c.l.b16 %v643
      %v702 = vunpack.c.l.b16 %v657
      %v703 = vunpack.c.l.b16 %v667
      %v704 = vpack.c.b16 %v685, %v684
      %v705 = vpack.c.b16 %v687, %v686
      %v706 = vpack.c.b16 %v689, %v688
      %v707 = vpack.c.b16 %v691, %v690
      %v708 = vpack.c.b16 %v693, %v692
      %v709 = vpack.c.b16 %v695, %v694
      %v710 = vpack.c.b16 %v697, %v696
      %v711 = vpack.c.b16 %v699, %v698
      %v712 = vpack.c.b16 %v701, %v700
      %v713 = vpack.c.b16 %v703, %v702
      %v740 = vunpack.c.l.b16 %v668
      %v741 = vunpack.c.l.b16 %v669
      %v742 = vunpack.c.l.b16 %v670
      %v743 = vunpack.c.l.b16 %v671
      %v744 = vunpack.c.l.b16 %v672
      %v745 = vunpack.c.l.b16 %v673
      %v746 = vunpack.c.l.b16 %v674
      %v747 = vunpack.c.l.b16 %v675
      %v748 = vunpack.c.l.b16 %v676
      %v749 = vunpack.c.l.b16 %v677
      %v750 = vunpack.c.l.b16 %v678
      %v751 = vunpack.c.l.b16 %v679
      %v752 = vunpack.c.l.b16 %v680
      %v753 = vunpack.c.l.b16 %v681
      %v754 = vunpack.c.l.b16 %v682
      %v755 = vunpack.c.l.b16 %v683
      %v756 = vpack.c.b16 %v741, %v740
      %v757 = vpack.c.b16 %v743, %v742
      %v758 = vpack.c.b16 %v745, %v744
      %v759 = vpack.c.b16 %v747, %v746
      %v760 = vpack.c.b16 %v749, %v748
      %v761 = vpack.c.b16 %v751, %v750
      %v762 = vpack.c.b16 %v753, %v752
      %v763 = vpack.c.b16 %v755, %v754
      %772 = vmatpush.bf16.msra.mxu0 %v763
      %773 = vmatpush.bf16.msra.mxu0 %v762
      %774 = vmatpush.bf16.msra.mxu0 %v761
      %775 = vmatpush.bf16.msra.mxu0 %v760
      %776 = vmatpush.bf16.msra.mxu0 %v759
      %777 = vmatpush.bf16.msra.mxu0 %v758
      %778 = vmatpush.bf16.msra.mxu0 %v757
      %779 = vmatpush.bf16.msra.mxu0 %v756
      %780 = vmatmul.bf16.gmra.mxu0 %v704
      %v781 = vpop.f32.mrf.mxu0
      %v782 = vadd.f32 0.0, %v781
      %v783 = vpop.f32.mrf.mxu0
      %v784 = vadd.f32 0.0, %v783
      %785 = vmatmul.bf16.gmra.mxu0 %v705
      %v786 = vpop.f32.mrf.mxu0
      %v787 = vadd.f32 0.0, %v786
      %v788 = vpop.f32.mrf.mxu0
      %v789 = vadd.f32 0.0, %v788
      %790 = vmatmul.bf16.gmra.mxu0 %v706
      %v791 = vpop.f32.mrf.mxu0
      %v792 = vadd.f32 0.0, %v791
      %v793 = vpop.f32.mrf.mxu0
      %v794 = vadd.f32 0.0, %v793
      %795 = vmatmul.bf16.gmra.mxu0 %v707
      %v796 = vpop.f32.mrf.mxu0
      %v797 = vadd.f32 0.0, %v796
      %v798 = vpop.f32.mrf.mxu0
      %v799 = vadd.f32 0.0, %v798
      %800 = vmatmul.bf16.gmra.mxu0 %v708
      %v801 = vpop.f32.mrf.mxu0
      %v802 = vadd.f32 0.0, %v801
      %v803 = vpop.f32.mrf.mxu0
      %v804 = vadd.f32 0.0, %v803
      %805 = vmatmul.bf16.gmra.mxu0 %v709
      %v806 = vpop.f32.mrf.mxu0
      %v807 = vadd.f32 0.0, %v806
      %v808 = vpop.f32.mrf.mxu0
      %v809 = vadd.f32 0.0, %v808
      %810 = vmatmul.bf16.gmra.mxu0 %v710
      %v811 = vpop.f32.mrf.mxu0
      %v812 = vadd.f32 0.0, %v811
      %v813 = vpop.f32.mrf.mxu0
      %v814 = vadd.f32 0.0, %v813
      %815 = vmatmul.bf16.gmra.mxu0 %v711
      %v816 = vpop.f32.mrf.mxu0
      %v817 = vadd.f32 0.0, %v816
      %v818 = vpop.f32.mrf.mxu0
      %v819 = vadd.f32 0.0, %v818
      %820 = vmatmul.bf16.gmra.mxu0 %v712
      %v821 = vpop.f32.mrf.mxu0
      %v822 = vadd.f32 0.0, %v821
      %v823 = vpop.f32.mrf.mxu0
      %v824 = vadd.f32 0.0, %v823
      %825 = vmatmul.bf16.gmra.mxu0 %v713
      %v826 = vpop.f32.mrf.mxu0
      %v827 = vadd.f32 0.0, %v826
      %v828 = vpop.f32.mrf.mxu0
      %v829 = vadd.f32 0.0, %v828
      %830 = vdwg.mxu0
      %v851 = vunpack.c.l.b16 %v379
      %v852 = vunpack.c.l.b16 %v380
      %v853 = vunpack.c.l.b16 %v381
      %v854 = vunpack.c.l.b16 %v382
      %v855 = vunpack.c.l.b16 %v383
      %v856 = vunpack.c.l.b16 %v384
      %v857 = vunpack.c.l.b16 %v385
      %v858 = vunpack.c.l.b16 %v386
      %v859 = vunpack.c.l.b16 %v387
      %v860 = vunpack.c.l.b16 %v388
      %v861 = vunpack.c.l.b16 %v389
      %v862 = vunpack.c.l.b16 %v390
      %v863 = vunpack.c.l.b16 %v391
      %v864 = vunpack.c.l.b16 %v392
      %v865 = vunpack.c.l.b16 %v393
      %v866 = vunpack.c.l.b16 %v394
      %v867 = vunpack.c.l.b16 %v395
      %v868 = vunpack.c.l.b16 %v396
      %v869 = vunpack.c.l.b16 %v397
      %v870 = vunpack.c.l.b16 %v398
      %v871 = vpack.c.b16 %v852, %v851
      %v872 = vpack.c.b16 %v854, %v853
      %v873 = vpack.c.b16 %v856, %v855
      %v874 = vpack.c.b16 %v858, %v857
      %v875 = vpack.c.b16 %v860, %v859
      %v876 = vpack.c.b16 %v862, %v861
      %v877 = vpack.c.b16 %v864, %v863
      %v878 = vpack.c.b16 %v866, %v865
      %v879 = vpack.c.b16 %v868, %v867
      %v880 = vpack.c.b16 %v870, %v869
      %v907 = vunpack.c.l.b16 %v399
      %v908 = vunpack.c.l.b16 %v400
      %v909 = vunpack.c.l.b16 %v401
      %v910 = vunpack.c.l.b16 %v402
      %v911 = vunpack.c.l.b16 %v403
      %v912 = vunpack.c.l.b16 %v404
      %v913 = vunpack.c.l.b16 %v405
      %v914 = vunpack.c.l.b16 %v406
      %v915 = vunpack.c.l.b16 %v407
      %v916 = vunpack.c.l.b16 %v408
      %v917 = vunpack.c.l.b16 %v409
      %v918 = vunpack.c.l.b16 %v410
      %v919 = vunpack.c.l.b16 %v411
      %v920 = vunpack.c.l.b16 %v412
      %v921 = vunpack.c.l.b16 %v413
      %v922 = vunpack.c.l.b16 %v414
      %v923 = vpack.c.b16 %v908, %v907
      %v924 = vpack.c.b16 %v910, %v909
      %v925 = vpack.c.b16 %v912, %v911
      %v926 = vpack.c.b16 %v914, %v913
      %v927 = vpack.c.b16 %v916, %v915
      %v928 = vpack.c.b16 %v918, %v917
      %v929 = vpack.c.b16 %v920, %v919
      %v930 = vpack.c.b16 %v922, %v921
      %939 = vmatpush.bf16.msra.mxu0 %v930
      %940 = vmatpush.bf16.msra.mxu0 %v929
      %941 = vmatpush.bf16.msra.mxu0 %v928
      %942 = vmatpush.bf16.msra.mxu0 %v927
      %943 = vmatpush.bf16.msra.mxu0 %v926
      %944 = vmatpush.bf16.msra.mxu0 %v925
      %945 = vmatpush.bf16.msra.mxu0 %v924
      %946 = vmatpush.bf16.msra.mxu0 %v923
      %947 = vmatmul.bf16.gmra.mxu0 %v871
      %v948 = vpop.f32.mrf.mxu0
      %v949 = vadd.f32 %v782, %v948
      %v950 = vpop.f32.mrf.mxu0
      %v951 = vadd.f32 %v784, %v950
      %952 = vmatmul.bf16.gmra.mxu0 %v872
      %v953 = vpop.f32.mrf.mxu0
      %v954 = vadd.f32 %v787, %v953
      %v955 = vpop.f32.mrf.mxu0
      %v956 = vadd.f32 %v789, %v955
      %957 = vmatmul.bf16.gmra.mxu0 %v873
      %v958 = vpop.f32.mrf.mxu0
      %v959 = vadd.f32 %v792, %v958
      %v960 = vpop.f32.mrf.mxu0
      %v961 = vadd.f32 %v794, %v960
      %962 = vmatmul.bf16.gmra.mxu0 %v874
      %v963 = vpop.f32.mrf.mxu0
      %v964 = vadd.f32 %v797, %v963
      %v965 = vpop.f32.mrf.mxu0
      %v966 = vadd.f32 %v799, %v965
      %967 = vmatmul.bf16.gmra.mxu0 %v875
      %v968 = vpop.f32.mrf.mxu0
      %v969 = vadd.f32 %v802, %v968
      %v970 = vpop.f32.mrf.mxu0
      %v971 = vadd.f32 %v804, %v970
      %972 = vmatmul.bf16.gmra.mxu0 %v876
      %v973 = vpop.f32.mrf.mxu0
      %v974 = vadd.f32 %v807, %v973
      %v975 = vpop.f32.mrf.mxu0
      %v976 = vadd.f32 %v809, %v975
      %977 = vmatmul.bf16.gmra.mxu0 %v877
      %v978 = vpop.f32.mrf.mxu0
      %v979 = vadd.f32 %v812, %v978
      %v980 = vpop.f32.mrf.mxu0
      %v981 = vadd.f32 %v814, %v980
      %982 = vmatmul.bf16.gmra.mxu0 %v878
      %v983 = vpop.f32.mrf.mxu0
      %v984 = vadd.f32 %v817, %v983
      %v985 = vpop.f32.mrf.mxu0
      %v986 = vadd.f32 %v819, %v985
      %987 = vmatmul.bf16.gmra.mxu0 %v879
      %v988 = vpop.f32.mrf.mxu0
      %v989 = vadd.f32 %v822, %v988
      %v990 = vpop.f32.mrf.mxu0
      %v991 = vadd.f32 %v824, %v990
      %992 = vmatmul.bf16.gmra.mxu0 %v880
      %v993 = vpop.f32.mrf.mxu0
      %v994 = vadd.f32 %v827, %v993
      %v995 = vpop.f32.mrf.mxu0
      %v996 = vadd.f32 %v829, %v995
      %997 = vdwg.mxu0
      %v998 = vld [vmem:[%s378] sm:$0xe]
      %v999 = vld [vmem:[%s378 + $0xc] sm:$0xe]
      %v1000 = vld [vmem:[%s378 + $0x18] sm:$0xe]
      %v1001 = vld [vmem:[%s378 + $0x24] sm:$0xe]
      %v1002 = vld [vmem:[%s378 + $0x30] sm:$0xe]
      %v1003 = vld [vmem:[%s378 + $0x3c] sm:$0xe]
      %v1004 = vld [vmem:[%s378 + $0x48] sm:$0xe]
      %v1005 = vld [vmem:[%s378 + $0x54] sm:$0xe]
      %v1006 = vld [vmem:[%s378 + $0x60] sm:$0xe]
      %v1007 = vld [vmem:[%s378 + $0x6c] sm:$0xe]
      %vm1028 = vcmask 1042432
      %vm1029 = vcmask 1046532
      %vm1030 = vmor %vm1028, %vm1029
      %v1031 = vrot.slane %v998, 5
      %v1032 = vrot.slane %v1031, 4
      %v1033 = vrot.slane %v380, 5
      %v1034 = vsel %vm1030, %v1032, %v1033
      %v1035 = vrot.slane %v1033, 4
      %v1036 = vrot.slane %v415, 5
      %v1037 = vsel %vm1030, %v1035, %v1036
      %v1038 = vrot.slane %v999, 5
      %v1039 = vrot.slane %v1038, 4
      %v1040 = vrot.slane %v382, 5
      %v1041 = vsel %vm1030, %v1039, %v1040
      %v1042 = vrot.slane %v1040, 4
      %v1043 = vrot.slane %v416, 5
      %v1044 = vsel %vm1030, %v1042, %v1043
      %v1045 = vrot.slane %v1000, 5
      %v1046 = vrot.slane %v1045, 4
      %v1047 = vrot.slane %v384, 5
      %v1048 = vsel %vm1030, %v1046, %v1047
      %v1049 = vrot.slane %v1047, 4
      %v1050 = vrot.slane %v417, 5
      %v1051 = vsel %vm1030, %v1049, %v1050
      %v1052 = vrot.slane %v1001, 5
      %v1053 = vrot.slane %v1052, 4
      %v1054 = vrot.slane %v386, 5
      %v1055 = vsel %vm1030, %v1053, %v1054
      %v1056 = vrot.slane %v1054, 4
      %v1057 = vrot.slane %v418, 5
      %v1058 = vsel %vm1030, %v1056, %v1057
      %v1059 = vrot.slane %v1002, 5
      %v1060 = vrot.slane %v1059, 4
      %v1061 = vrot.slane %v388, 5
      %v1062 = vsel %vm1030, %v1060, %v1061
      %v1063 = vrot.slane %v1061, 4
      %v1064 = vrot.slane %v419, 5
      %v1065 = vsel %vm1030, %v1063, %v1064
      %v1066 = vrot.slane %v1003, 5
      %v1067 = vrot.slane %v1066, 4
      %v1068 = vrot.slane %v390, 5
      %v1069 = vsel %vm1030, %v1067, %v1068
      %v1070 = vrot.slane %v1068, 4
      %v1071 = vrot.slane %v420, 5
      %v1072 = vsel %vm1030, %v1070, %v1071
      %v1073 = vrot.slane %v1004, 5
      %v1074 = vrot.slane %v1073, 4
      %v1075 = vrot.slane %v392, 5
      %v1076 = vsel %vm1030, %v1074, %v1075
      %v1077 = vrot.slane %v1075, 4
      %v1078 = vrot.slane %v421, 5
      %v1079 = vsel %vm1030, %v1077, %v1078
      %v1080 = vrot.slane %v1005, 5
      %v1081 = vrot.slane %v1080, 4
      %v1082 = vrot.slane %v394, 5
      %v1083 = vsel %vm1030, %v1081, %v1082
      %v1084 = vrot.slane %v1082, 4
      %v1085 = vrot.slane %v422, 5
      %v1086 = vsel %vm1030, %v1084, %v1085
      %v1087 = vrot.slane %v1006, 5
      %v1088 = vrot.slane %v1087, 4
      %v1089 = vrot.slane %v396, 5
      %v1090 = vsel %vm1030, %v1088, %v1089
      %v1091 = vrot.slane %v1089, 4
      %v1092 = vrot.slane %v423, 5
      %v1093 = vsel %vm1030, %v1091, %v1092
      %v1094 = vrot.slane %v1007, 5
      %v1095 = vrot.slane %v1094, 4
      %v1096 = vrot.slane %v398, 5
      %v1097 = vsel %vm1030, %v1095, %v1096
      %v1098 = vrot.slane %v1096, 4
      %v1099 = vrot.slane %v424, 5
      %v1100 = vsel %vm1030, %v1098, %v1099
      %v1101 = vld [vmem:[%s2 + $0x80] sm:$0xf]
      %v1102 = vld [vmem:[%s2 + $0x84] sm:$0xf]
      %v1103 = vld [vmem:[%s2 + $0x88] sm:$0xf]
      %v1104 = vld [vmem:[%s2 + $0x8c] sm:$0xf]
      %v1105 = vld [vmem:[%s2 + $0x90] sm:$0xf]
      %v1106 = vld [vmem:[%s2 + $0x94] sm:$0xf]
      %v1107 = vld [vmem:[%s2 + $0x98] sm:$0xf]
      %v1108 = vld [vmem:[%s2 + $0x9c] sm:$0xf]
      %v1109 = vld [vmem:[%s2 + $0xa0] sm:$0xf]
      %v1110 = vld [vmem:[%s2 + $0xa4] sm:$0xf]
      %v1111 = vld [vmem:[%s2 + $0xa8] sm:$0xf]
      %v1112 = vld [vmem:[%s2 + $0xac] sm:$0xf]
      %v1113 = vld [vmem:[%s2 + $0xb0] sm:$0xf]
      %v1114 = vld [vmem:[%s2 + $0xb4] sm:$0xf]
      %v1115 = vld [vmem:[%s2 + $0xb8] sm:$0xf]
      %v1116 = vld [vmem:[%s2 + $0xbc] sm:$0xf]
      %v1117 = vunpack.c.l.b16 %v1034
      %v1118 = vunpack.c.l.b16 %v1037
      %v1119 = vunpack.c.l.b16 %v1041
      %v1120 = vunpack.c.l.b16 %v1044
      %v1121 = vunpack.c.l.b16 %v1048
      %v1122 = vunpack.c.l.b16 %v1051
      %v1123 = vunpack.c.l.b16 %v1055
      %v1124 = vunpack.c.l.b16 %v1058
      %v1125 = vunpack.c.l.b16 %v1062
      %v1126 = vunpack.c.l.b16 %v1065
      %v1127 = vunpack.c.l.b16 %v1069
      %v1128 = vunpack.c.l.b16 %v1072
      %v1129 = vunpack.c.l.b16 %v1076
      %v1130 = vunpack.c.l.b16 %v1079
      %v1131 = vunpack.c.l.b16 %v1083
      %v1132 = vunpack.c.l.b16 %v1086
      %v1133 = vunpack.c.l.b16 %v1090
      %v1134 = vunpack.c.l.b16 %v1093
      %v1135 = vunpack.c.l.b16 %v1097
      %v1136 = vunpack.c.l.b16 %v1100
      %v1137 = vpack.c.b16 %v1118, %v1117
      %v1138 = vpack.c.b16 %v1120, %v1119
      %v1139 = vpack.c.b16 %v1122, %v1121
      %v1140 = vpack.c.b16 %v1124, %v1123
      %v1141 = vpack.c.b16 %v1126, %v1125
      %v1142 = vpack.c.b16 %v1128, %v1127
      %v1143 = vpack.c.b16 %v1130, %v1129
      %v1144 = vpack.c.b16 %v1132, %v1131
      %v1145 = vpack.c.b16 %v1134, %v1133
      %v1146 = vpack.c.b16 %v1136, %v1135
      %v1173 = vunpack.c.l.b16 %v1101
      %v1174 = vunpack.c.l.b16 %v1102
      %v1175 = vunpack.c.l.b16 %v1103
      %v1176 = vunpack.c.l.b16 %v1104
      %v1177 = vunpack.c.l.b16 %v1105
      %v1178 = vunpack.c.l.b16 %v1106
      %v1179 = vunpack.c.l.b16 %v1107
      %v1180 = vunpack.c.l.b16 %v1108
      %v1181 = vunpack.c.l.b16 %v1109
      %v1182 = vunpack.c.l.b16 %v1110
      %v1183 = vunpack.c.l.b16 %v1111
      %v1184 = vunpack.c.l.b16 %v1112
      %v1185 = vunpack.c.l.b16 %v1113
      %v1186 = vunpack.c.l.b16 %v1114
      %v1187 = vunpack.c.l.b16 %v1115
      %v1188 = vunpack.c.l.b16 %v1116
      %v1189 = vpack.c.b16 %v1174, %v1173
      %v1190 = vpack.c.b16 %v1176, %v1175
      %v1191 = vpack.c.b16 %v1178, %v1177
      %v1192 = vpack.c.b16 %v1180, %v1179
      %v1193 = vpack.c.b16 %v1182, %v1181
      %v1194 = vpack.c.b16 %v1184, %v1183
      %v1195 = vpack.c.b16 %v1186, %v1185
      %v1196 = vpack.c.b16 %v1188, %v1187
      %1205 = vmatpush.bf16.msra.mxu0 %v1196
      %1206 = vmatpush.bf16.msra.mxu0 %v1195
      %1207 = vmatpush.bf16.msra.mxu0 %v1194
      %1208 = vmatpush.bf16.msra.mxu0 %v1193
      %1209 = vmatpush.bf16.msra.mxu0 %v1192
      %1210 = vmatpush.bf16.msra.mxu0 %v1191
      %1211 = vmatpush.bf16.msra.mxu0 %v1190
      %1212 = vmatpush.bf16.msra.mxu0 %v1189
      %1213 = vmatmul.bf16.gmra.mxu0 %v1137
      %v1214 = vpop.f32.mrf.mxu0
      %v1215 = vadd.f32 0.0, %v1214
      %v1216 = vpop.f32.mrf.mxu0
      %v1217 = vadd.f32 0.0, %v1216
      %1218 = vmatmul.bf16.gmra.mxu0 %v1138
      %v1219 = vpop.f32.mrf.mxu0
      %v1220 = vadd.f32 0.0, %v1219
      %v1221 = vpop.f32.mrf.mxu0
      %v1222 = vadd.f32 0.0, %v1221
      %1223 = vmatmul.bf16.gmra.mxu0 %v1139
      %v1224 = vpop.f32.mrf.mxu0
      %v1225 = vadd.f32 0.0, %v1224
      %v1226 = vpop.f32.mrf.mxu0
      %v1227 = vadd.f32 0.0, %v1226
      %1228 = vmatmul.bf16.gmra.mxu0 %v1140
      %v1229 = vpop.f32.mrf.mxu0
      %v1230 = vadd.f32 0.0, %v1229
      %v1231 = vpop.f32.mrf.mxu0
      %v1232 = vadd.f32 0.0, %v1231
      %1233 = vmatmul.bf16.gmra.mxu0 %v1141
      %v1234 = vpop.f32.mrf.mxu0
      %v1235 = vadd.f32 0.0, %v1234
      %v1236 = vpop.f32.mrf.mxu0
      %v1237 = vadd.f32 0.0, %v1236
      %1238 = vmatmul.bf16.gmra.mxu0 %v1142
      %v1239 = vpop.f32.mrf.mxu0
      %v1240 = vadd.f32 0.0, %v1239
      %v1241 = vpop.f32.mrf.mxu0
      %v1242 = vadd.f32 0.0, %v1241
      %1243 = vmatmul.bf16.gmra.mxu0 %v1143
      %v1244 = vpop.f32.mrf.mxu0
      %v1245 = vadd.f32 0.0, %v1244
      %v1246 = vpop.f32.mrf.mxu0
      %v1247 = vadd.f32 0.0, %v1246
      %1248 = vmatmul.bf16.gmra.mxu0 %v1144
      %v1249 = vpop.f32.mrf.mxu0
      %v1250 = vadd.f32 0.0, %v1249
      %v1251 = vpop.f32.mrf.mxu0
      %v1252 = vadd.f32 0.0, %v1251
      %1253 = vmatmul.bf16.gmra.mxu0 %v1145
      %v1254 = vpop.f32.mrf.mxu0
      %v1255 = vadd.f32 0.0, %v1254
      %v1256 = vpop.f32.mrf.mxu0
      %v1257 = vadd.f32 0.0, %v1256
      %1258 = vmatmul.bf16.gmra.mxu0 %v1146
      %v1259 = vpop.f32.mrf.mxu0
      %v1260 = vadd.f32 0.0, %v1259
      %v1261 = vpop.f32.mrf.mxu0
      %v1262 = vadd.f32 0.0, %v1261
      %1263 = vdwg.mxu0
      %v1264 = vadd.f32 %v949, %v1215
      %v1265 = vadd.f32 %v951, %v1217
      %v1266 = vadd.f32 %v954, %v1220
      %v1267 = vadd.f32 %v956, %v1222
      %v1268 = vadd.f32 %v959, %v1225
      %v1269 = vadd.f32 %v961, %v1227
      %v1270 = vadd.f32 %v964, %v1230
      %v1271 = vadd.f32 %v966, %v1232
      %v1272 = vadd.f32 %v969, %v1235
      %v1273 = vadd.f32 %v971, %v1237
      %v1274 = vadd.f32 %v974, %v1240
      %v1275 = vadd.f32 %v976, %v1242
      %v1276 = vadd.f32 %v979, %v1245
      %v1277 = vadd.f32 %v981, %v1247
      %v1278 = vadd.f32 %v984, %v1250
      %v1279 = vadd.f32 %v986, %v1252
      %v1280 = vadd.f32 %v989, %v1255
      %v1281 = vadd.f32 %v991, %v1257
      %v1282 = vadd.f32 %v994, %v1260
      %v1283 = vadd.f32 %v996, %v1262
      %s1284 = sadd.s32 %s371, 1
      %s1285 = smul.u32 %s1284, 3
      %s1286 = smul.addr %s1285, 4
      %s1287 = scalar_lea.vmem %s347, %s1286
      %v1288 = vld [vmem:[%s1287] sm:$0xf]
      %v1289 = vld [vmem:[%s1287 + $0x4] sm:$0xf]
      %v1290 = vld [vmem:[%s1287 + $0xc] sm:$0xf]
      %v1291 = vld [vmem:[%s1287 + $0x10] sm:$0xf]
      %v1292 = vld [vmem:[%s1287 + $0x18] sm:$0xf]
      %v1293 = vld [vmem:[%s1287 + $0x1c] sm:$0xf]
      %v1294 = vld [vmem:[%s1287 + $0x24] sm:$0xf]
      %v1295 = vld [vmem:[%s1287 + $0x28] sm:$0xf]
      %v1296 = vld [vmem:[%s1287 + $0x30] sm:$0xf]
      %v1297 = vld [vmem:[%s1287 + $0x34] sm:$0xf]
      %v1298 = vld [vmem:[%s1287 + $0x3c] sm:$0xf]
      %v1299 = vld [vmem:[%s1287 + $0x40] sm:$0xf]
      %v1300 = vld [vmem:[%s1287 + $0x48] sm:$0xf]
      %v1301 = vld [vmem:[%s1287 + $0x4c] sm:$0xf]
      %v1302 = vld [vmem:[%s1287 + $0x54] sm:$0xf]
      %v1303 = vld [vmem:[%s1287 + $0x58] sm:$0xf]
      %v1304 = vld [vmem:[%s1287 + $0x60] sm:$0xf]
      %v1305 = vld [vmem:[%s1287 + $0x64] sm:$0xf]
      %v1306 = vld [vmem:[%s1287 + $0x6c] sm:$0xf]
      %v1307 = vld [vmem:[%s1287 + $0x70] sm:$0xf]
      %v1308 = vld [vmem:[%s2 + $0xc0] sm:$0xf]
      %v1309 = vld [vmem:[%s2 + $0xc4] sm:$0xf]
      %v1310 = vld [vmem:[%s2 + $0xc8] sm:$0xf]
      %v1311 = vld [vmem:[%s2 + $0xcc] sm:$0xf]
      %v1312 = vld [vmem:[%s2 + $0xd0] sm:$0xf]
      %v1313 = vld [vmem:[%s2 + $0xd4] sm:$0xf]
      %v1314 = vld [vmem:[%s2 + $0xd8] sm:$0xf]
      %v1315 = vld [vmem:[%s2 + $0xdc] sm:$0xf]
      %v1316 = vld [vmem:[%s2 + $0xe0] sm:$0xf]
      %v1317 = vld [vmem:[%s2 + $0xe4] sm:$0xf]
      %v1318 = vld [vmem:[%s2 + $0xe8] sm:$0xf]
      %v1319 = vld [vmem:[%s2 + $0xec] sm:$0xf]
      %v1320 = vld [vmem:[%s2 + $0xf0] sm:$0xf]
      %v1321 = vld [vmem:[%s2 + $0xf4] sm:$0xf]
      %v1322 = vld [vmem:[%s2 + $0xf8] sm:$0xf]
      %v1323 = vld [vmem:[%s2 + $0xfc] sm:$0xf]
      %v1344 = vunpack.c.l.b16 %v1288
      %v1345 = vunpack.c.l.b16 %v1289
      %v1346 = vunpack.c.l.b16 %v1290
      %v1347 = vunpack.c.l.b16 %v1291
      %v1348 = vunpack.c.l.b16 %v1292
      %v1349 = vunpack.c.l.b16 %v1293
      %v1350 = vunpack.c.l.b16 %v1294
      %v1351 = vunpack.c.l.b16 %v1295
      %v1352 = vunpack.c.l.b16 %v1296
      %v1353 = vunpack.c.l.b16 %v1297
      %v1354 = vunpack.c.l.b16 %v1298
      %v1355 = vunpack.c.l.b16 %v1299
      %v1356 = vunpack.c.l.b16 %v1300
      %v1357 = vunpack.c.l.b16 %v1301
      %v1358 = vunpack.c.l.b16 %v1302
      %v1359 = vunpack.c.l.b16 %v1303
      %v1360 = vunpack.c.l.b16 %v1304
      %v1361 = vunpack.c.l.b16 %v1305
      %v1362 = vunpack.c.l.b16 %v1306
      %v1363 = vunpack.c.l.b16 %v1307
      %v1364 = vpack.c.b16 %v1345, %v1344
      %v1365 = vpack.c.b16 %v1347, %v1346
      %v1366 = vpack.c.b16 %v1349, %v1348
      %v1367 = vpack.c.b16 %v1351, %v1350
      %v1368 = vpack.c.b16 %v1353, %v1352
      %v1369 = vpack.c.b16 %v1355, %v1354
      %v1370 = vpack.c.b16 %v1357, %v1356
      %v1371 = vpack.c.b16 %v1359, %v1358
      %v1372 = vpack.c.b16 %v1361, %v1360
      %v1373 = vpack.c.b16 %v1363, %v1362
      %v1400 = vunpack.c.l.b16 %v1308
      %v1401 = vunpack.c.l.b16 %v1309
      %v1402 = vunpack.c.l.b16 %v1310
      %v1403 = vunpack.c.l.b16 %v1311
      %v1404 = vunpack.c.l.b16 %v1312
      %v1405 = vunpack.c.l.b16 %v1313
      %v1406 = vunpack.c.l.b16 %v1314
      %v1407 = vunpack.c.l.b16 %v1315
      %v1408 = vunpack.c.l.b16 %v1316
      %v1409 = vunpack.c.l.b16 %v1317
      %v1410 = vunpack.c.l.b16 %v1318
      %v1411 = vunpack.c.l.b16 %v1319
      %v1412 = vunpack.c.l.b16 %v1320
      %v1413 = vunpack.c.l.b16 %v1321
      %v1414 = vunpack.c.l.b16 %v1322
      %v1415 = vunpack.c.l.b16 %v1323
      %v1416 = vpack.c.b16 %v1401, %v1400
      %v1417 = vpack.c.b16 %v1403, %v1402
      %v1418 = vpack.c.b16 %v1405, %v1404
      %v1419 = vpack.c.b16 %v1407, %v1406
      %v1420 = vpack.c.b16 %v1409, %v1408
      %v1421 = vpack.c.b16 %v1411, %v1410
      %v1422 = vpack.c.b16 %v1413, %v1412
      %v1423 = vpack.c.b16 %v1415, %v1414
      %1432 = vmatpush.bf16.msra.mxu0 %v1423
      %1433 = vmatpush.bf16.msra.mxu0 %v1422
      %1434 = vmatpush.bf16.msra.mxu0 %v1421
      %1435 = vmatpush.bf16.msra.mxu0 %v1420
      %1436 = vmatpush.bf16.msra.mxu0 %v1419
      %1437 = vmatpush.bf16.msra.mxu0 %v1418
      %1438 = vmatpush.bf16.msra.mxu0 %v1417
      %1439 = vmatpush.bf16.msra.mxu0 %v1416
      %1440 = vmatmul.bf16.gmra.mxu0 %v1364
      %v1441 = vpop.f32.mrf.mxu0
      %v1442 = vadd.f32 0.0, %v1441
      %v1443 = vpop.f32.mrf.mxu0
      %v1444 = vadd.f32 0.0, %v1443
      %1445 = vmatmul.bf16.gmra.mxu0 %v1365
      %v1446 = vpop.f32.mrf.mxu0
      %v1447 = vadd.f32 0.0, %v1446
      %v1448 = vpop.f32.mrf.mxu0
      %v1449 = vadd.f32 0.0, %v1448
      %1450 = vmatmul.bf16.gmra.mxu0 %v1366
      %v1451 = vpop.f32.mrf.mxu0
      %v1452 = vadd.f32 0.0, %v1451
      %v1453 = vpop.f32.mrf.mxu0
      %v1454 = vadd.f32 0.0, %v1453
      %1455 = vmatmul.bf16.gmra.mxu0 %v1367
      %v1456 = vpop.f32.mrf.mxu0
      %v1457 = vadd.f32 0.0, %v1456
      %v1458 = vpop.f32.mrf.mxu0
      %v1459 = vadd.f32 0.0, %v1458
      %1460 = vmatmul.bf16.gmra.mxu0 %v1368
      %v1461 = vpop.f32.mrf.mxu0
      %v1462 = vadd.f32 0.0, %v1461
      %v1463 = vpop.f32.mrf.mxu0
      %v1464 = vadd.f32 0.0, %v1463
      %1465 = vmatmul.bf16.gmra.mxu0 %v1369
      %v1466 = vpop.f32.mrf.mxu0
      %v1467 = vadd.f32 0.0, %v1466
      %v1468 = vpop.f32.mrf.mxu0
      %v1469 = vadd.f32 0.0, %v1468
      %1470 = vmatmul.bf16.gmra.mxu0 %v1370
      %v1471 = vpop.f32.mrf.mxu0
      %v1472 = vadd.f32 0.0, %v1471
      %v1473 = vpop.f32.mrf.mxu0
      %v1474 = vadd.f32 0.0, %v1473
      %1475 = vmatmul.bf16.gmra.mxu0 %v1371
      %v1476 = vpop.f32.mrf.mxu0
      %v1477 = vadd.f32 0.0, %v1476
      %v1478 = vpop.f32.mrf.mxu0
      %v1479 = vadd.f32 0.0, %v1478
      %1480 = vmatmul.bf16.gmra.mxu0 %v1372
      %v1481 = vpop.f32.mrf.mxu0
      %v1482 = vadd.f32 0.0, %v1481
      %v1483 = vpop.f32.mrf.mxu0
      %v1484 = vadd.f32 0.0, %v1483
      %1485 = vmatmul.bf16.gmra.mxu0 %v1373
      %v1486 = vpop.f32.mrf.mxu0
      %v1487 = vadd.f32 0.0, %v1486
      %v1488 = vpop.f32.mrf.mxu0
      %v1489 = vadd.f32 0.0, %v1488
      %1490 = vdwg.mxu0
      %v1491 = vadd.f32 %v1264, %v1442
      %v1492 = vadd.f32 %v1265, %v1444
      %v1493 = vadd.f32 %v1266, %v1447
      %v1494 = vadd.f32 %v1267, %v1449
      %v1495 = vadd.f32 %v1268, %v1452
      %v1496 = vadd.f32 %v1269, %v1454
      %v1497 = vadd.f32 %v1270, %v1457
      %v1498 = vadd.f32 %v1271, %v1459
      %v1499 = vadd.f32 %v1272, %v1462
      %v1500 = vadd.f32 %v1273, %v1464
      %v1501 = vadd.f32 %v1274, %v1467
      %v1502 = vadd.f32 %v1275, %v1469
      %v1503 = vadd.f32 %v1276, %v1472
      %v1504 = vadd.f32 %v1277, %v1474
      %v1505 = vadd.f32 %v1278, %v1477
      %v1506 = vadd.f32 %v1279, %v1479
      %v1507 = vadd.f32 %v1280, %v1482
      %v1508 = vadd.f32 %v1281, %v1484
      %v1509 = vadd.f32 %v1282, %v1487
      %v1510 = vadd.f32 %v1283, %v1489
      %v1511 = vld [vmem:[%s1287] sm:$0xf]
      %v1512 = vld [vmem:[%s1287 + $0x4] sm:$0xf]
      %v1513 = vld [vmem:[%s1287 + $0x8] sm:$0x1]
      %v1514 = vld [vmem:[%s1287 + $0xc] sm:$0xf]
      %v1515 = vld [vmem:[%s1287 + $0x10] sm:$0xf]
      %v1516 = vld [vmem:[%s1287 + $0x14] sm:$0x1]
      %v1517 = vld [vmem:[%s1287 + $0x18] sm:$0xf]
      %v1518 = vld [vmem:[%s1287 + $0x1c] sm:$0xf]
      %v1519 = vld [vmem:[%s1287 + $0x20] sm:$0x1]
      %v1520 = vld [vmem:[%s1287 + $0x24] sm:$0xf]
      %v1521 = vld [vmem:[%s1287 + $0x28] sm:$0xf]
      %v1522 = vld [vmem:[%s1287 + $0x2c] sm:$0x1]
      %v1523 = vld [vmem:[%s1287 + $0x30] sm:$0xf]
      %v1524 = vld [vmem:[%s1287 + $0x34] sm:$0xf]
      %v1525 = vld [vmem:[%s1287 + $0x38] sm:$0x1]
      %v1526 = vld [vmem:[%s1287 + $0x3c] sm:$0xf]
      %v1527 = vld [vmem:[%s1287 + $0x40] sm:$0xf]
      %v1528 = vld [vmem:[%s1287 + $0x44] sm:$0x1]
      %v1529 = vld [vmem:[%s1287 + $0x48] sm:$0xf]
      %v1530 = vld [vmem:[%s1287 + $0x4c] sm:$0xf]
      %v1531 = vld [vmem:[%s1287 + $0x50] sm:$0x1]
      %v1532 = vld [vmem:[%s1287 + $0x54] sm:$0xf]
      %v1533 = vld [vmem:[%s1287 + $0x58] sm:$0xf]
      %v1534 = vld [vmem:[%s1287 + $0x5c] sm:$0x1]
      %v1535 = vld [vmem:[%s1287 + $0x60] sm:$0xf]
      %v1536 = vld [vmem:[%s1287 + $0x64] sm:$0xf]
      %v1537 = vld [vmem:[%s1287 + $0x68] sm:$0x1]
      %v1538 = vld [vmem:[%s1287 + $0x6c] sm:$0xf]
      %v1539 = vld [vmem:[%s1287 + $0x70] sm:$0xf]
      %v1540 = vld [vmem:[%s1287 + $0x74] sm:$0x1]
      %v1542 = vshrl.u32 %v1511, 16
      %v1544 = vrot.slane %v1542, 4
      %v1545 = vshll.u32 %v1511, 16
      %v1547 = vrot.slane %v1545, 5
      %v1548 = vor.u32 %v1544, %v1547
      %v1549 = vrot.slane %v1548, 4
      %v1551 = vshll.u32 %v1512, 16
      %v1553 = vrot.slane %v1551, 5
      %v1554 = vsel %vm427, %v1549, %v1553
      %v1555 = vshrl.u32 %v1512, 16
      %v1557 = vrot.slane %v1555, 4
      %v1558 = vor.u32 %v1557, %v1553
      %v1559 = vrot.slane %v1558, 4
      %v1561 = vshll.u32 %v1513, 16
      %v1563 = vrot.slane %v1561, 5
      %v1564 = vsel %vm427, %v1559, %v1563
      %v1566 = vshrl.u32 %v1514, 16
      %v1568 = vrot.slane %v1566, 4
      %v1569 = vshll.u32 %v1514, 16
      %v1571 = vrot.slane %v1569, 5
      %v1572 = vor.u32 %v1568, %v1571
      %v1573 = vrot.slane %v1572, 4
      %v1575 = vshll.u32 %v1515, 16
      %v1577 = vrot.slane %v1575, 5
      %v1578 = vsel %vm427, %v1573, %v1577
      %v1579 = vshrl.u32 %v1515, 16
      %v1581 = vrot.slane %v1579, 4
      %v1582 = vor.u32 %v1581, %v1577
      %v1583 = vrot.slane %v1582, 4
      %v1585 = vshll.u32 %v1516, 16
      %v1587 = vrot.slane %v1585, 5
      %v1588 = vsel %vm427, %v1583, %v1587
      %v1590 = vshrl.u32 %v1517, 16
      %v1592 = vrot.slane %v1590, 4
      %v1593 = vshll.u32 %v1517, 16
      %v1595 = vrot.slane %v1593, 5
      %v1596 = vor.u32 %v1592, %v1595
      %v1597 = vrot.slane %v1596, 4
      %v1599 = vshll.u32 %v1518, 16
      %v1601 = vrot.slane %v1599, 5
      %v1602 = vsel %vm427, %v1597, %v1601
      %v1603 = vshrl.u32 %v1518, 16
      %v1605 = vrot.slane %v1603, 4
      %v1606 = vor.u32 %v1605, %v1601
      %v1607 = vrot.slane %v1606, 4
      %v1609 = vshll.u32 %v1519, 16
      %v1611 = vrot.slane %v1609, 5
      %v1612 = vsel %vm427, %v1607, %v1611
      %v1614 = vshrl.u32 %v1520, 16
      %v1616 = vrot.slane %v1614, 4
      %v1617 = vshll.u32 %v1520, 16
      %v1619 = vrot.slane %v1617, 5
      %v1620 = vor.u32 %v1616, %v1619
      %v1621 = vrot.slane %v1620, 4
      %v1623 = vshll.u32 %v1521, 16
      %v1625 = vrot.slane %v1623, 5
      %v1626 = vsel %vm427, %v1621, %v1625
      %v1627 = vshrl.u32 %v1521, 16
      %v1629 = vrot.slane %v1627, 4
      %v1630 = vor.u32 %v1629, %v1625
      %v1631 = vrot.slane %v1630, 4
      %v1633 = vshll.u32 %v1522, 16
      %v1635 = vrot.slane %v1633, 5
      %v1636 = vsel %vm427, %v1631, %v1635
      %v1638 = vshrl.u32 %v1523, 16
      %v1640 = vrot.slane %v1638, 4
      %v1641 = vshll.u32 %v1523, 16
      %v1643 = vrot.slane %v1641, 5
      %v1644 = vor.u32 %v1640, %v1643
      %v1645 = vrot.slane %v1644, 4
      %v1647 = vshll.u32 %v1524, 16
      %v1649 = vrot.slane %v1647, 5
      %v1650 = vsel %vm427, %v1645, %v1649
      %v1651 = vshrl.u32 %v1524, 16
      %v1653 = vrot.slane %v1651, 4
      %v1654 = vor.u32 %v1653, %v1649
      %v1655 = vrot.slane %v1654, 4
      %v1657 = vshll.u32 %v1525, 16
      %v1659 = vrot.slane %v1657, 5
      %v1660 = vsel %vm427, %v1655, %v1659
      %v1662 = vshrl.u32 %v1526, 16
      %v1664 = vrot.slane %v1662, 4
      %v1665 = vshll.u32 %v1526, 16
      %v1667 = vrot.slane %v1665, 5
      %v1668 = vor.u32 %v1664, %v1667
      %v1669 = vrot.slane %v1668, 4
      %v1671 = vshll.u32 %v1527, 16
      %v1673 = vrot.slane %v1671, 5
      %v1674 = vsel %vm427, %v1669, %v1673
      %v1675 = vshrl.u32 %v1527, 16
      %v1677 = vrot.slane %v1675, 4
      %v1678 = vor.u32 %v1677, %v1673
      %v1679 = vrot.slane %v1678, 4
      %v1681 = vshll.u32 %v1528, 16
      %v1683 = vrot.slane %v1681, 5
      %v1684 = vsel %vm427, %v1679, %v1683
      %v1686 = vshrl.u32 %v1529, 16
      %v1688 = vrot.slane %v1686, 4
      %v1689 = vshll.u32 %v1529, 16
      %v1691 = vrot.slane %v1689, 5
      %v1692 = vor.u32 %v1688, %v1691
      %v1693 = vrot.slane %v1692, 4
      %v1695 = vshll.u32 %v1530, 16
      %v1697 = vrot.slane %v1695, 5
      %v1698 = vsel %vm427, %v1693, %v1697
      %v1699 = vshrl.u32 %v1530, 16
      %v1701 = vrot.slane %v1699, 4
      %v1702 = vor.u32 %v1701, %v1697
      %v1703 = vrot.slane %v1702, 4
      %v1705 = vshll.u32 %v1531, 16
      %v1707 = vrot.slane %v1705, 5
      %v1708 = vsel %vm427, %v1703, %v1707
      %v1710 = vshrl.u32 %v1532, 16
      %v1712 = vrot.slane %v1710, 4
      %v1713 = vshll.u32 %v1532, 16
      %v1715 = vrot.slane %v1713, 5
      %v1716 = vor.u32 %v1712, %v1715
      %v1717 = vrot.slane %v1716, 4
      %v1719 = vshll.u32 %v1533, 16
      %v1721 = vrot.slane %v1719, 5
      %v1722 = vsel %vm427, %v1717, %v1721
      %v1723 = vshrl.u32 %v1533, 16
      %v1725 = vrot.slane %v1723, 4
      %v1726 = vor.u32 %v1725, %v1721
      %v1727 = vrot.slane %v1726, 4
      %v1729 = vshll.u32 %v1534, 16
      %v1731 = vrot.slane %v1729, 5
      %v1732 = vsel %vm427, %v1727, %v1731
      %v1734 = vshrl.u32 %v1535, 16
      %v1736 = vrot.slane %v1734, 4
      %v1737 = vshll.u32 %v1535, 16
      %v1739 = vrot.slane %v1737, 5
      %v1740 = vor.u32 %v1736, %v1739
      %v1741 = vrot.slane %v1740, 4
      %v1743 = vshll.u32 %v1536, 16
      %v1745 = vrot.slane %v1743, 5
      %v1746 = vsel %vm427, %v1741, %v1745
      %v1747 = vshrl.u32 %v1536, 16
      %v1749 = vrot.slane %v1747, 4
      %v1750 = vor.u32 %v1749, %v1745
      %v1751 = vrot.slane %v1750, 4
      %v1753 = vshll.u32 %v1537, 16
      %v1755 = vrot.slane %v1753, 5
      %v1756 = vsel %vm427, %v1751, %v1755
      %v1758 = vshrl.u32 %v1538, 16
      %v1760 = vrot.slane %v1758, 4
      %v1761 = vshll.u32 %v1538, 16
      %v1763 = vrot.slane %v1761, 5
      %v1764 = vor.u32 %v1760, %v1763
      %v1765 = vrot.slane %v1764, 4
      %v1767 = vshll.u32 %v1539, 16
      %v1769 = vrot.slane %v1767, 5
      %v1770 = vsel %vm427, %v1765, %v1769
      %v1771 = vshrl.u32 %v1539, 16
      %v1773 = vrot.slane %v1771, 4
      %v1774 = vor.u32 %v1773, %v1769
      %v1775 = vrot.slane %v1774, 4
      %v1777 = vshll.u32 %v1540, 16
      %v1779 = vrot.slane %v1777, 5
      %v1780 = vsel %vm427, %v1775, %v1779
      %v1781 = vld [vmem:[%s2 + $0x100] sm:$0xf]
      %v1782 = vld [vmem:[%s2 + $0x104] sm:$0xf]
      %v1783 = vld [vmem:[%s2 + $0x108] sm:$0xf]
      %v1784 = vld [vmem:[%s2 + $0x10c] sm:$0xf]
      %v1785 = vld [vmem:[%s2 + $0x110] sm:$0xf]
      %v1786 = vld [vmem:[%s2 + $0x114] sm:$0xf]
      %v1787 = vld [vmem:[%s2 + $0x118] sm:$0xf]
      %v1788 = vld [vmem:[%s2 + $0x11c] sm:$0xf]
      %v1789 = vld [vmem:[%s2 + $0x120] sm:$0xf]
      %v1790 = vld [vmem:[%s2 + $0x124] sm:$0xf]
      %v1791 = vld [vmem:[%s2 + $0x128] sm:$0xf]
      %v1792 = vld [vmem:[%s2 + $0x12c] sm:$0xf]
      %v1793 = vld [vmem:[%s2 + $0x130] sm:$0xf]
      %v1794 = vld [vmem:[%s2 + $0x134] sm:$0xf]
      %v1795 = vld [vmem:[%s2 + $0x138] sm:$0xf]
      %v1796 = vld [vmem:[%s2 + $0x13c] sm:$0xf]
      %v1797 = vunpack.c.l.b16 %v1554
      %v1798 = vunpack.c.l.b16 %v1564
      %v1799 = vunpack.c.l.b16 %v1578
      %v1800 = vunpack.c.l.b16 %v1588
      %v1801 = vunpack.c.l.b16 %v1602
      %v1802 = vunpack.c.l.b16 %v1612
      %v1803 = vunpack.c.l.b16 %v1626
      %v1804 = vunpack.c.l.b16 %v1636
      %v1805 = vunpack.c.l.b16 %v1650
      %v1806 = vunpack.c.l.b16 %v1660
      %v1807 = vunpack.c.l.b16 %v1674
      %v1808 = vunpack.c.l.b16 %v1684
      %v1809 = vunpack.c.l.b16 %v1698
      %v1810 = vunpack.c.l.b16 %v1708
      %v1811 = vunpack.c.l.b16 %v1722
      %v1812 = vunpack.c.l.b16 %v1732
      %v1813 = vunpack.c.l.b16 %v1746
      %v1814 = vunpack.c.l.b16 %v1756
      %v1815 = vunpack.c.l.b16 %v1770
      %v1816 = vunpack.c.l.b16 %v1780
      %v1817 = vpack.c.b16 %v1798, %v1797
      %v1818 = vpack.c.b16 %v1800, %v1799
      %v1819 = vpack.c.b16 %v1802, %v1801
      %v1820 = vpack.c.b16 %v1804, %v1803
      %v1821 = vpack.c.b16 %v1806, %v1805
      %v1822 = vpack.c.b16 %v1808, %v1807
      %v1823 = vpack.c.b16 %v1810, %v1809
      %v1824 = vpack.c.b16 %v1812, %v1811
      %v1825 = vpack.c.b16 %v1814, %v1813
      %v1826 = vpack.c.b16 %v1816, %v1815
      %v1853 = vunpack.c.l.b16 %v1781
      %v1854 = vunpack.c.l.b16 %v1782
      %v1855 = vunpack.c.l.b16 %v1783
      %v1856 = vunpack.c.l.b16 %v1784
      %v1857 = vunpack.c.l.b16 %v1785
      %v1858 = vunpack.c.l.b16 %v1786
      %v1859 = vunpack.c.l.b16 %v1787
      %v1860 = vunpack.c.l.b16 %v1788
      %v1861 = vunpack.c.l.b16 %v1789
      %v1862 = vunpack.c.l.b16 %v1790
      %v1863 = vunpack.c.l.b16 %v1791
      %v1864 = vunpack.c.l.b16 %v1792
      %v1865 = vunpack.c.l.b16 %v1793
      %v1866 = vunpack.c.l.b16 %v1794
      %v1867 = vunpack.c.l.b16 %v1795
      %v1868 = vunpack.c.l.b16 %v1796
      %v1869 = vpack.c.b16 %v1854, %v1853
      %v1870 = vpack.c.b16 %v1856, %v1855
      %v1871 = vpack.c.b16 %v1858, %v1857
      %v1872 = vpack.c.b16 %v1860, %v1859
      %v1873 = vpack.c.b16 %v1862, %v1861
      %v1874 = vpack.c.b16 %v1864, %v1863
      %v1875 = vpack.c.b16 %v1866, %v1865
      %v1876 = vpack.c.b16 %v1868, %v1867
      %1885 = vmatpush.bf16.msra.mxu0 %v1876
      %1886 = vmatpush.bf16.msra.mxu0 %v1875
      %1887 = vmatpush.bf16.msra.mxu0 %v1874
      %1888 = vmatpush.bf16.msra.mxu0 %v1873
      %1889 = vmatpush.bf16.msra.mxu0 %v1872
      %1890 = vmatpush.bf16.msra.mxu0 %v1871
      %1891 = vmatpush.bf16.msra.mxu0 %v1870
      %1892 = vmatpush.bf16.msra.mxu0 %v1869
      %1893 = vmatmul.bf16.gmra.mxu0 %v1817
      %v1894 = vpop.f32.mrf.mxu0
      %v1895 = vadd.f32 0.0, %v1894
      %v1896 = vpop.f32.mrf.mxu0
      %v1897 = vadd.f32 0.0, %v1896
      %1898 = vmatmul.bf16.gmra.mxu0 %v1818
      %v1899 = vpop.f32.mrf.mxu0
      %v1900 = vadd.f32 0.0, %v1899
      %v1901 = vpop.f32.mrf.mxu0
      %v1902 = vadd.f32 0.0, %v1901
      %1903 = vmatmul.bf16.gmra.mxu0 %v1819
      %v1904 = vpop.f32.mrf.mxu0
      %v1905 = vadd.f32 0.0, %v1904
      %v1906 = vpop.f32.mrf.mxu0
      %v1907 = vadd.f32 0.0, %v1906
      %1908 = vmatmul.bf16.gmra.mxu0 %v1820
      %v1909 = vpop.f32.mrf.mxu0
      %v1910 = vadd.f32 0.0, %v1909
      %v1911 = vpop.f32.mrf.mxu0
      %v1912 = vadd.f32 0.0, %v1911
      %1913 = vmatmul.bf16.gmra.mxu0 %v1821
      %v1914 = vpop.f32.mrf.mxu0
      %v1915 = vadd.f32 0.0, %v1914
      %v1916 = vpop.f32.mrf.mxu0
      %v1917 = vadd.f32 0.0, %v1916
      %1918 = vmatmul.bf16.gmra.mxu0 %v1822
      %v1919 = vpop.f32.mrf.mxu0
      %v1920 = vadd.f32 0.0, %v1919
      %v1921 = vpop.f32.mrf.mxu0
      %v1922 = vadd.f32 0.0, %v1921
      %1923 = vmatmul.bf16.gmra.mxu0 %v1823
      %v1924 = vpop.f32.mrf.mxu0
      %v1925 = vadd.f32 0.0, %v1924
      %v1926 = vpop.f32.mrf.mxu0
      %v1927 = vadd.f32 0.0, %v1926
      %1928 = vmatmul.bf16.gmra.mxu0 %v1824
      %v1929 = vpop.f32.mrf.mxu0
      %v1930 = vadd.f32 0.0, %v1929
      %v1931 = vpop.f32.mrf.mxu0
      %v1932 = vadd.f32 0.0, %v1931
      %1933 = vmatmul.bf16.gmra.mxu0 %v1825
      %v1934 = vpop.f32.mrf.mxu0
      %v1935 = vadd.f32 0.0, %v1934
      %v1936 = vpop.f32.mrf.mxu0
      %v1937 = vadd.f32 0.0, %v1936
      %1938 = vmatmul.bf16.gmra.mxu0 %v1826
      %v1939 = vpop.f32.mrf.mxu0
      %v1940 = vadd.f32 0.0, %v1939
      %v1941 = vpop.f32.mrf.mxu0
      %v1942 = vadd.f32 0.0, %v1941
      %1943 = vdwg.mxu0
      %v1944 = vadd.f32 %v1491, %v1895
      %v1945 = vadd.f32 %v1492, %v1897
      %v1946 = vadd.f32 %v1493, %v1900
      %v1947 = vadd.f32 %v1494, %v1902
      %v1948 = vadd.f32 %v1495, %v1905
      %v1949 = vadd.f32 %v1496, %v1907
      %v1950 = vadd.f32 %v1497, %v1910
      %v1951 = vadd.f32 %v1498, %v1912
      %v1952 = vadd.f32 %v1499, %v1915
      %v1953 = vadd.f32 %v1500, %v1917
      %v1954 = vadd.f32 %v1501, %v1920
      %v1955 = vadd.f32 %v1502, %v1922
      %v1956 = vadd.f32 %v1503, %v1925
      %v1957 = vadd.f32 %v1504, %v1927
      %v1958 = vadd.f32 %v1505, %v1930
      %v1959 = vadd.f32 %v1506, %v1932
      %v1960 = vadd.f32 %v1507, %v1935
      %v1961 = vadd.f32 %v1508, %v1937
      %v1962 = vadd.f32 %v1509, %v1940
      %v1963 = vadd.f32 %v1510, %v1942
      %v1964 = vld [vmem:[%s1287] sm:$0xe]
      %v1965 = vld [vmem:[%s1287 + $0xc] sm:$0xe]
      %v1966 = vld [vmem:[%s1287 + $0x18] sm:$0xe]
      %v1967 = vld [vmem:[%s1287 + $0x24] sm:$0xe]
      %v1968 = vld [vmem:[%s1287 + $0x30] sm:$0xe]
      %v1969 = vld [vmem:[%s1287 + $0x3c] sm:$0xe]
      %v1970 = vld [vmem:[%s1287 + $0x48] sm:$0xe]
      %v1971 = vld [vmem:[%s1287 + $0x54] sm:$0xe]
      %v1972 = vld [vmem:[%s1287 + $0x60] sm:$0xe]
      %v1973 = vld [vmem:[%s1287 + $0x6c] sm:$0xe]
      %v2004 = vrot.slane %v1964, 5
      %v2005 = vrot.slane %v2004, 4
      %v2006 = vrot.slane %v1512, 5
      %v2007 = vsel %vm1030, %v2005, %v2006
      %v2008 = vrot.slane %v2006, 4
      %v2009 = vrot.slane %v1513, 5
      %v2010 = vsel %vm1030, %v2008, %v2009
      %v2011 = vrot.slane %v1965, 5
      %v2012 = vrot.slane %v2011, 4
      %v2013 = vrot.slane %v1515, 5
      %v2014 = vsel %vm1030, %v2012, %v2013
      %v2015 = vrot.slane %v2013, 4
      %v2016 = vrot.slane %v1516, 5
      %v2017 = vsel %vm1030, %v2015, %v2016
      %v2018 = vrot.slane %v1966, 5
      %v2019 = vrot.slane %v2018, 4
      %v2020 = vrot.slane %v1518, 5
      %v2021 = vsel %vm1030, %v2019, %v2020
      %v2022 = vrot.slane %v2020, 4
      %v2023 = vrot.slane %v1519, 5
      %v2024 = vsel %vm1030, %v2022, %v2023
      %v2025 = vrot.slane %v1967, 5
      %v2026 = vrot.slane %v2025, 4
      %v2027 = vrot.slane %v1521, 5
      %v2028 = vsel %vm1030, %v2026, %v2027
      %v2029 = vrot.slane %v2027, 4
      %v2030 = vrot.slane %v1522, 5
      %v2031 = vsel %vm1030, %v2029, %v2030
      %v2032 = vrot.slane %v1968, 5
      %v2033 = vrot.slane %v2032, 4
      %v2034 = vrot.slane %v1524, 5
      %v2035 = vsel %vm1030, %v2033, %v2034
      %v2036 = vrot.slane %v2034, 4
      %v2037 = vrot.slane %v1525, 5
      %v2038 = vsel %vm1030, %v2036, %v2037
      %v2039 = vrot.slane %v1969, 5
      %v2040 = vrot.slane %v2039, 4
      %v2041 = vrot.slane %v1527, 5
      %v2042 = vsel %vm1030, %v2040, %v2041
      %v2043 = vrot.slane %v2041, 4
      %v2044 = vrot.slane %v1528, 5
      %v2045 = vsel %vm1030, %v2043, %v2044
      %v2046 = vrot.slane %v1970, 5
      %v2047 = vrot.slane %v2046, 4
      %v2048 = vrot.slane %v1530, 5
      %v2049 = vsel %vm1030, %v2047, %v2048
      %v2050 = vrot.slane %v2048, 4
      %v2051 = vrot.slane %v1531, 5
      %v2052 = vsel %vm1030, %v2050, %v2051
      %v2053 = vrot.slane %v1971, 5
      %v2054 = vrot.slane %v2053, 4
      %v2055 = vrot.slane %v1533, 5
      %v2056 = vsel %vm1030, %v2054, %v2055
      %v2057 = vrot.slane %v2055, 4
      %v2058 = vrot.slane %v1534, 5
      %v2059 = vsel %vm1030, %v2057, %v2058
      %v2060 = vrot.slane %v1972, 5
      %v2061 = vrot.slane %v2060, 4
      %v2062 = vrot.slane %v1536, 5
      %v2063 = vsel %vm1030, %v2061, %v2062
      %v2064 = vrot.slane %v2062, 4
      %v2065 = vrot.slane %v1537, 5
      %v2066 = vsel %vm1030, %v2064, %v2065
      %v2067 = vrot.slane %v1973, 5
      %v2068 = vrot.slane %v2067, 4
      %v2069 = vrot.slane %v1539, 5
      %v2070 = vsel %vm1030, %v2068, %v2069
      %v2071 = vrot.slane %v2069, 4
      %v2072 = vrot.slane %v1540, 5
      %v2073 = vsel %vm1030, %v2071, %v2072
      %v2074 = vld [vmem:[%s2 + $0x140] sm:$0xf]
      %v2075 = vld [vmem:[%s2 + $0x144] sm:$0xf]
      %v2076 = vld [vmem:[%s2 + $0x148] sm:$0xf]
      %v2077 = vld [vmem:[%s2 + $0x14c] sm:$0xf]
      %v2078 = vld [vmem:[%s2 + $0x150] sm:$0xf]
      %v2079 = vld [vmem:[%s2 + $0x154] sm:$0xf]
      %v2080 = vld [vmem:[%s2 + $0x158] sm:$0xf]
      %v2081 = vld [vmem:[%s2 + $0x15c] sm:$0xf]
      %v2082 = vld [vmem:[%s2 + $0x160] sm:$0xf]
      %v2083 = vld [vmem:[%s2 + $0x164] sm:$0xf]
      %v2084 = vld [vmem:[%s2 + $0x168] sm:$0xf]
      %v2085 = vld [vmem:[%s2 + $0x16c] sm:$0xf]
      %v2086 = vld [vmem:[%s2 + $0x170] sm:$0xf]
      %v2087 = vld [vmem:[%s2 + $0x174] sm:$0xf]
      %v2088 = vld [vmem:[%s2 + $0x178] sm:$0xf]
      %v2089 = vld [vmem:[%s2 + $0x17c] sm:$0xf]
      %v2090 = vunpack.c.l.b16 %v2007
      %v2091 = vunpack.c.l.b16 %v2010
      %v2092 = vunpack.c.l.b16 %v2014
      %v2093 = vunpack.c.l.b16 %v2017
      %v2094 = vunpack.c.l.b16 %v2021
      %v2095 = vunpack.c.l.b16 %v2024
      %v2096 = vunpack.c.l.b16 %v2028
      %v2097 = vunpack.c.l.b16 %v2031
      %v2098 = vunpack.c.l.b16 %v2035
      %v2099 = vunpack.c.l.b16 %v2038
      %v2100 = vunpack.c.l.b16 %v2042
      %v2101 = vunpack.c.l.b16 %v2045
      %v2102 = vunpack.c.l.b16 %v2049
      %v2103 = vunpack.c.l.b16 %v2052
      %v2104 = vunpack.c.l.b16 %v2056
      %v2105 = vunpack.c.l.b16 %v2059
      %v2106 = vunpack.c.l.b16 %v2063
      %v2107 = vunpack.c.l.b16 %v2066
      %v2108 = vunpack.c.l.b16 %v2070
      %v2109 = vunpack.c.l.b16 %v2073
      %v2110 = vpack.c.b16 %v2091, %v2090
      %v2111 = vpack.c.b16 %v2093, %v2092
      %v2112 = vpack.c.b16 %v2095, %v2094
      %v2113 = vpack.c.b16 %v2097, %v2096
      %v2114 = vpack.c.b16 %v2099, %v2098
      %v2115 = vpack.c.b16 %v2101, %v2100
      %v2116 = vpack.c.b16 %v2103, %v2102
      %v2117 = vpack.c.b16 %v2105, %v2104
      %v2118 = vpack.c.b16 %v2107, %v2106
      %v2119 = vpack.c.b16 %v2109, %v2108
      %v2146 = vunpack.c.l.b16 %v2074
      %v2147 = vunpack.c.l.b16 %v2075
      %v2148 = vunpack.c.l.b16 %v2076
      %v2149 = vunpack.c.l.b16 %v2077
      %v2150 = vunpack.c.l.b16 %v2078
      %v2151 = vunpack.c.l.b16 %v2079
      %v2152 = vunpack.c.l.b16 %v2080
      %v2153 = vunpack.c.l.b16 %v2081
      %v2154 = vunpack.c.l.b16 %v2082
      %v2155 = vunpack.c.l.b16 %v2083
      %v2156 = vunpack.c.l.b16 %v2084
      %v2157 = vunpack.c.l.b16 %v2085
      %v2158 = vunpack.c.l.b16 %v2086
      %v2159 = vunpack.c.l.b16 %v2087
      %v2160 = vunpack.c.l.b16 %v2088
      %v2161 = vunpack.c.l.b16 %v2089
      %v2162 = vpack.c.b16 %v2147, %v2146
      %v2163 = vpack.c.b16 %v2149, %v2148
      %v2164 = vpack.c.b16 %v2151, %v2150
      %v2165 = vpack.c.b16 %v2153, %v2152
      %v2166 = vpack.c.b16 %v2155, %v2154
      %v2167 = vpack.c.b16 %v2157, %v2156
      %v2168 = vpack.c.b16 %v2159, %v2158
      %v2169 = vpack.c.b16 %v2161, %v2160
      %2178 = vmatpush.bf16.msra.mxu0 %v2169
      %2179 = vmatpush.bf16.msra.mxu0 %v2168
      %2180 = vmatpush.bf16.msra.mxu0 %v2167
      %2181 = vmatpush.bf16.msra.mxu0 %v2166
      %2182 = vmatpush.bf16.msra.mxu0 %v2165
      %2183 = vmatpush.bf16.msra.mxu0 %v2164
      %2184 = vmatpush.bf16.msra.mxu0 %v2163
      %2185 = vmatpush.bf16.msra.mxu0 %v2162
      %2186 = vmatmul.bf16.gmra.mxu0 %v2110
      %v2187 = vpop.f32.mrf.mxu0
      %v2188 = vadd.f32 0.0, %v2187
      %v2189 = vpop.f32.mrf.mxu0
      %v2190 = vadd.f32 0.0, %v2189
      %2191 = vmatmul.bf16.gmra.mxu0 %v2111
      %v2192 = vpop.f32.mrf.mxu0
      %v2193 = vadd.f32 0.0, %v2192
      %v2194 = vpop.f32.mrf.mxu0
      %v2195 = vadd.f32 0.0, %v2194
      %2196 = vmatmul.bf16.gmra.mxu0 %v2112
      %v2197 = vpop.f32.mrf.mxu0
      %v2198 = vadd.f32 0.0, %v2197
      %v2199 = vpop.f32.mrf.mxu0
      %v2200 = vadd.f32 0.0, %v2199
      %2201 = vmatmul.bf16.gmra.mxu0 %v2113
      %v2202 = vpop.f32.mrf.mxu0
      %v2203 = vadd.f32 0.0, %v2202
      %v2204 = vpop.f32.mrf.mxu0
      %v2205 = vadd.f32 0.0, %v2204
      %2206 = vmatmul.bf16.gmra.mxu0 %v2114
      %v2207 = vpop.f32.mrf.mxu0
      %v2208 = vadd.f32 0.0, %v2207
      %v2209 = vpop.f32.mrf.mxu0
      %v2210 = vadd.f32 0.0, %v2209
      %2211 = vmatmul.bf16.gmra.mxu0 %v2115
      %v2212 = vpop.f32.mrf.mxu0
      %v2213 = vadd.f32 0.0, %v2212
      %v2214 = vpop.f32.mrf.mxu0
      %v2215 = vadd.f32 0.0, %v2214
      %2216 = vmatmul.bf16.gmra.mxu0 %v2116
      %v2217 = vpop.f32.mrf.mxu0
      %v2218 = vadd.f32 0.0, %v2217
      %v2219 = vpop.f32.mrf.mxu0
      %v2220 = vadd.f32 0.0, %v2219
      %2221 = vmatmul.bf16.gmra.mxu0 %v2117
      %v2222 = vpop.f32.mrf.mxu0
      %v2223 = vadd.f32 0.0, %v2222
      %v2224 = vpop.f32.mrf.mxu0
      %v2225 = vadd.f32 0.0, %v2224
      %2226 = vmatmul.bf16.gmra.mxu0 %v2118
      %v2227 = vpop.f32.mrf.mxu0
      %v2228 = vadd.f32 0.0, %v2227
      %v2229 = vpop.f32.mrf.mxu0
      %v2230 = vadd.f32 0.0, %v2229
      %2231 = vmatmul.bf16.gmra.mxu0 %v2119
      %v2232 = vpop.f32.mrf.mxu0
      %v2233 = vadd.f32 0.0, %v2232
      %v2234 = vpop.f32.mrf.mxu0
      %v2235 = vadd.f32 0.0, %v2234
      %2236 = vdwg.mxu0
      %v2237 = vadd.f32 %v1944, %v2188
      %v2238 = vadd.f32 %v1945, %v2190
      %v2239 = vadd.f32 %v1946, %v2193
      %v2240 = vadd.f32 %v1947, %v2195
      %v2241 = vadd.f32 %v1948, %v2198
      %v2242 = vadd.f32 %v1949, %v2200
      %v2243 = vadd.f32 %v1950, %v2203
      %v2244 = vadd.f32 %v1951, %v2205
      %v2245 = vadd.f32 %v1952, %v2208
      %v2246 = vadd.f32 %v1953, %v2210
      %v2247 = vadd.f32 %v1954, %v2213
      %v2248 = vadd.f32 %v1955, %v2215
      %v2249 = vadd.f32 %v1956, %v2218
      %v2250 = vadd.f32 %v1957, %v2220
      %v2251 = vadd.f32 %v1958, %v2223
      %v2252 = vadd.f32 %v1959, %v2225
      %v2253 = vadd.f32 %v1960, %v2228
      %v2254 = vadd.f32 %v1961, %v2230
      %v2255 = vadd.f32 %v1962, %v2233
      %v2256 = vadd.f32 %v1963, %v2235
      %s2257 = sadd.s32 %s371, 2
      %s2258 = smul.u32 %s2257, 3
      %s2259 = smul.addr %s2258, 4
      %s2260 = scalar_lea.vmem %s347, %s2259
      %v2261 = vld [vmem:[%s2260] sm:$0xf]
      %v2262 = vld [vmem:[%s2260 + $0x4] sm:$0xf]
      %v2263 = vld [vmem:[%s2260 + $0xc] sm:$0xf]
      %v2264 = vld [vmem:[%s2260 + $0x10] sm:$0xf]
      %v2265 = vld [vmem:[%s2260 + $0x18] sm:$0xf]
      %v2266 = vld [vmem:[%s2260 + $0x1c] sm:$0xf]
      %v2267 = vld [vmem:[%s2260 + $0x24] sm:$0xf]
      %v2268 = vld [vmem:[%s2260 + $0x28] sm:$0xf]
      %v2269 = vld [vmem:[%s2260 + $0x30] sm:$0xf]
      %v2270 = vld [vmem:[%s2260 + $0x34] sm:$0xf]
      %v2271 = vld [vmem:[%s2260 + $0x3c] sm:$0xf]
      %v2272 = vld [vmem:[%s2260 + $0x40] sm:$0xf]
      %v2273 = vld [vmem:[%s2260 + $0x48] sm:$0xf]
      %v2274 = vld [vmem:[%s2260 + $0x4c] sm:$0xf]
      %v2275 = vld [vmem:[%s2260 + $0x54] sm:$0xf]
      %v2276 = vld [vmem:[%s2260 + $0x58] sm:$0xf]
      %v2277 = vld [vmem:[%s2260 + $0x60] sm:$0xf]
      %v2278 = vld [vmem:[%s2260 + $0x64] sm:$0xf]
      %v2279 = vld [vmem:[%s2260 + $0x6c] sm:$0xf]
      %v2280 = vld [vmem:[%s2260 + $0x70] sm:$0xf]
      %v2281 = vld [vmem:[%s2 + $0x180] sm:$0xf]
      %v2282 = vld [vmem:[%s2 + $0x184] sm:$0xf]
      %v2283 = vld [vmem:[%s2 + $0x188] sm:$0xf]
      %v2284 = vld [vmem:[%s2 + $0x18c] sm:$0xf]
      %v2285 = vld [vmem:[%s2 + $0x190] sm:$0xf]
      %v2286 = vld [vmem:[%s2 + $0x194] sm:$0xf]
      %v2287 = vld [vmem:[%s2 + $0x198] sm:$0xf]
      %v2288 = vld [vmem:[%s2 + $0x19c] sm:$0xf]
      %v2289 = vld [vmem:[%s2 + $0x1a0] sm:$0xf]
      %v2290 = vld [vmem:[%s2 + $0x1a4] sm:$0xf]
      %v2291 = vld [vmem:[%s2 + $0x1a8] sm:$0xf]
      %v2292 = vld [vmem:[%s2 + $0x1ac] sm:$0xf]
      %v2293 = vld [vmem:[%s2 + $0x1b0] sm:$0xf]
      %v2294 = vld [vmem:[%s2 + $0x1b4] sm:$0xf]
      %v2295 = vld [vmem:[%s2 + $0x1b8] sm:$0xf]
      %v2296 = vld [vmem:[%s2 + $0x1bc] sm:$0xf]
      %v2317 = vunpack.c.l.b16 %v2261
      %v2318 = vunpack.c.l.b16 %v2262
      %v2319 = vunpack.c.l.b16 %v2263
      %v2320 = vunpack.c.l.b16 %v2264
      %v2321 = vunpack.c.l.b16 %v2265
      %v2322 = vunpack.c.l.b16 %v2266
      %v2323 = vunpack.c.l.b16 %v2267
      %v2324 = vunpack.c.l.b16 %v2268
      %v2325 = vunpack.c.l.b16 %v2269
      %v2326 = vunpack.c.l.b16 %v2270
      %v2327 = vunpack.c.l.b16 %v2271
      %v2328 = vunpack.c.l.b16 %v2272
      %v2329 = vunpack.c.l.b16 %v2273
      %v2330 = vunpack.c.l.b16 %v2274
      %v2331 = vunpack.c.l.b16 %v2275
      %v2332 = vunpack.c.l.b16 %v2276
      %v2333 = vunpack.c.l.b16 %v2277
      %v2334 = vunpack.c.l.b16 %v2278
      %v2335 = vunpack.c.l.b16 %v2279
      %v2336 = vunpack.c.l.b16 %v2280
      %v2337 = vpack.c.b16 %v2318, %v2317
      %v2338 = vpack.c.b16 %v2320, %v2319
      %v2339 = vpack.c.b16 %v2322, %v2321
      %v2340 = vpack.c.b16 %v2324, %v2323
      %v2341 = vpack.c.b16 %v2326, %v2325
      %v2342 = vpack.c.b16 %v2328, %v2327
      %v2343 = vpack.c.b16 %v2330, %v2329
      %v2344 = vpack.c.b16 %v2332, %v2331
      %v2345 = vpack.c.b16 %v2334, %v2333
      %v2346 = vpack.c.b16 %v2336, %v2335
      %v2373 = vunpack.c.l.b16 %v2281
      %v2374 = vunpack.c.l.b16 %v2282
      %v2375 = vunpack.c.l.b16 %v2283
      %v2376 = vunpack.c.l.b16 %v2284
      %v2377 = vunpack.c.l.b16 %v2285
      %v2378 = vunpack.c.l.b16 %v2286
      %v2379 = vunpack.c.l.b16 %v2287
      %v2380 = vunpack.c.l.b16 %v2288
      %v2381 = vunpack.c.l.b16 %v2289
      %v2382 = vunpack.c.l.b16 %v2290
      %v2383 = vunpack.c.l.b16 %v2291
      %v2384 = vunpack.c.l.b16 %v2292
      %v2385 = vunpack.c.l.b16 %v2293
      %v2386 = vunpack.c.l.b16 %v2294
      %v2387 = vunpack.c.l.b16 %v2295
      %v2388 = vunpack.c.l.b16 %v2296
      %v2389 = vpack.c.b16 %v2374, %v2373
      %v2390 = vpack.c.b16 %v2376, %v2375
      %v2391 = vpack.c.b16 %v2378, %v2377
      %v2392 = vpack.c.b16 %v2380, %v2379
      %v2393 = vpack.c.b16 %v2382, %v2381
      %v2394 = vpack.c.b16 %v2384, %v2383
      %v2395 = vpack.c.b16 %v2386, %v2385
      %v2396 = vpack.c.b16 %v2388, %v2387
      %2405 = vmatpush.bf16.msra.mxu0 %v2396
      %2406 = vmatpush.bf16.msra.mxu0 %v2395
      %2407 = vmatpush.bf16.msra.mxu0 %v2394
      %2408 = vmatpush.bf16.msra.mxu0 %v2393
      %2409 = vmatpush.bf16.msra.mxu0 %v2392
      %2410 = vmatpush.bf16.msra.mxu0 %v2391
      %2411 = vmatpush.bf16.msra.mxu0 %v2390
      %2412 = vmatpush.bf16.msra.mxu0 %v2389
      %2413 = vmatmul.bf16.gmra.mxu0 %v2337
      %v2414 = vpop.f32.mrf.mxu0
      %v2415 = vadd.f32 0.0, %v2414
      %v2416 = vpop.f32.mrf.mxu0
      %v2417 = vadd.f32 0.0, %v2416
      %2418 = vmatmul.bf16.gmra.mxu0 %v2338
      %v2419 = vpop.f32.mrf.mxu0
      %v2420 = vadd.f32 0.0, %v2419
      %v2421 = vpop.f32.mrf.mxu0
      %v2422 = vadd.f32 0.0, %v2421
      %2423 = vmatmul.bf16.gmra.mxu0 %v2339
      %v2424 = vpop.f32.mrf.mxu0
      %v2425 = vadd.f32 0.0, %v2424
      %v2426 = vpop.f32.mrf.mxu0
      %v2427 = vadd.f32 0.0, %v2426
      %2428 = vmatmul.bf16.gmra.mxu0 %v2340
      %v2429 = vpop.f32.mrf.mxu0
      %v2430 = vadd.f32 0.0, %v2429
      %v2431 = vpop.f32.mrf.mxu0
      %v2432 = vadd.f32 0.0, %v2431
      %2433 = vmatmul.bf16.gmra.mxu0 %v2341
      %v2434 = vpop.f32.mrf.mxu0
      %v2435 = vadd.f32 0.0, %v2434
      %v2436 = vpop.f32.mrf.mxu0
      %v2437 = vadd.f32 0.0, %v2436
      %2438 = vmatmul.bf16.gmra.mxu0 %v2342
      %v2439 = vpop.f32.mrf.mxu0
      %v2440 = vadd.f32 0.0, %v2439
      %v2441 = vpop.f32.mrf.mxu0
      %v2442 = vadd.f32 0.0, %v2441
      %2443 = vmatmul.bf16.gmra.mxu0 %v2343
      %v2444 = vpop.f32.mrf.mxu0
      %v2445 = vadd.f32 0.0, %v2444
      %v2446 = vpop.f32.mrf.mxu0
      %v2447 = vadd.f32 0.0, %v2446
      %2448 = vmatmul.bf16.gmra.mxu0 %v2344
      %v2449 = vpop.f32.mrf.mxu0
      %v2450 = vadd.f32 0.0, %v2449
      %v2451 = vpop.f32.mrf.mxu0
      %v2452 = vadd.f32 0.0, %v2451
      %2453 = vmatmul.bf16.gmra.mxu0 %v2345
      %v2454 = vpop.f32.mrf.mxu0
      %v2455 = vadd.f32 0.0, %v2454
      %v2456 = vpop.f32.mrf.mxu0
      %v2457 = vadd.f32 0.0, %v2456
      %2458 = vmatmul.bf16.gmra.mxu0 %v2346
      %v2459 = vpop.f32.mrf.mxu0
      %v2460 = vadd.f32 0.0, %v2459
      %v2461 = vpop.f32.mrf.mxu0
      %v2462 = vadd.f32 0.0, %v2461
      %2463 = vdwg.mxu0
      %v2464 = vadd.f32 %v2237, %v2415
      %v2465 = vadd.f32 %v2238, %v2417
      %v2466 = vadd.f32 %v2239, %v2420
      %v2467 = vadd.f32 %v2240, %v2422
      %v2468 = vadd.f32 %v2241, %v2425
      %v2469 = vadd.f32 %v2242, %v2427
      %v2470 = vadd.f32 %v2243, %v2430
      %v2471 = vadd.f32 %v2244, %v2432
      %v2472 = vadd.f32 %v2245, %v2435
      %v2473 = vadd.f32 %v2246, %v2437
      %v2474 = vadd.f32 %v2247, %v2440
      %v2475 = vadd.f32 %v2248, %v2442
      %v2476 = vadd.f32 %v2249, %v2445
      %v2477 = vadd.f32 %v2250, %v2447
      %v2478 = vadd.f32 %v2251, %v2450
      %v2479 = vadd.f32 %v2252, %v2452
      %v2480 = vadd.f32 %v2253, %v2455
      %v2481 = vadd.f32 %v2254, %v2457
      %v2482 = vadd.f32 %v2255, %v2460
      %v2483 = vadd.f32 %v2256, %v2462
      %v2484 = vld [vmem:[%s2260] sm:$0xf]
      %v2485 = vld [vmem:[%s2260 + $0x4] sm:$0xf]
      %v2486 = vld [vmem:[%s2260 + $0x8] sm:$0x1]
      %v2487 = vld [vmem:[%s2260 + $0xc] sm:$0xf]
      %v2488 = vld [vmem:[%s2260 + $0x10] sm:$0xf]
      %v2489 = vld [vmem:[%s2260 + $0x14] sm:$0x1]
      %v2490 = vld [vmem:[%s2260 + $0x18] sm:$0xf]
      %v2491 = vld [vmem:[%s2260 + $0x1c] sm:$0xf]
      %v2492 = vld [vmem:[%s2260 + $0x20] sm:$0x1]
      %v2493 = vld [vmem:[%s2260 + $0x24] sm:$0xf]
      %v2494 = vld [vmem:[%s2260 + $0x28] sm:$0xf]
      %v2495 = vld [vmem:[%s2260 + $0x2c] sm:$0x1]
      %v2496 = vld [vmem:[%s2260 + $0x30] sm:$0xf]
      %v2497 = vld [vmem:[%s2260 + $0x34] sm:$0xf]
      %v2498 = vld [vmem:[%s2260 + $0x38] sm:$0x1]
      %v2499 = vld [vmem:[%s2260 + $0x3c] sm:$0xf]
      %v2500 = vld [vmem:[%s2260 + $0x40] sm:$0xf]
      %v2501 = vld [vmem:[%s2260 + $0x44] sm:$0x1]
      %v2502 = vld [vmem:[%s2260 + $0x48] sm:$0xf]
      %v2503 = vld [vmem:[%s2260 + $0x4c] sm:$0xf]
      %v2504 = vld [vmem:[%s2260 + $0x50] sm:$0x1]
      %v2505 = vld [vmem:[%s2260 + $0x54] sm:$0xf]
      %v2506 = vld [vmem:[%s2260 + $0x58] sm:$0xf]
      %v2507 = vld [vmem:[%s2260 + $0x5c] sm:$0x1]
      %v2508 = vld [vmem:[%s2260 + $0x60] sm:$0xf]
      %v2509 = vld [vmem:[%s2260 + $0x64] sm:$0xf]
      %v2510 = vld [vmem:[%s2260 + $0x68] sm:$0x1]
      %v2511 = vld [vmem:[%s2260 + $0x6c] sm:$0xf]
      %v2512 = vld [vmem:[%s2260 + $0x70] sm:$0xf]
      %v2513 = vld [vmem:[%s2260 + $0x74] sm:$0x1]
      %v2515 = vshrl.u32 %v2484, 16
      %v2517 = vrot.slane %v2515, 4
      %v2518 = vshll.u32 %v2484, 16
      %v2520 = vrot.slane %v2518, 5
      %v2521 = vor.u32 %v2517, %v2520
      %v2522 = vrot.slane %v2521, 4
      %v2524 = vshll.u32 %v2485, 16
      %v2526 = vrot.slane %v2524, 5
      %v2527 = vsel %vm427, %v2522, %v2526
      %v2528 = vshrl.u32 %v2485, 16
      %v2530 = vrot.slane %v2528, 4
      %v2531 = vor.u32 %v2530, %v2526
      %v2532 = vrot.slane %v2531, 4
      %v2534 = vshll.u32 %v2486, 16
      %v2536 = vrot.slane %v2534, 5
      %v2537 = vsel %vm427, %v2532, %v2536
      %v2539 = vshrl.u32 %v2487, 16
      %v2541 = vrot.slane %v2539, 4
      %v2542 = vshll.u32 %v2487, 16
      %v2544 = vrot.slane %v2542, 5
      %v2545 = vor.u32 %v2541, %v2544
      %v2546 = vrot.slane %v2545, 4
      %v2548 = vshll.u32 %v2488, 16
      %v2550 = vrot.slane %v2548, 5
      %v2551 = vsel %vm427, %v2546, %v2550
      %v2552 = vshrl.u32 %v2488, 16
      %v2554 = vrot.slane %v2552, 4
      %v2555 = vor.u32 %v2554, %v2550
      %v2556 = vrot.slane %v2555, 4
      %v2558 = vshll.u32 %v2489, 16
      %v2560 = vrot.slane %v2558, 5
      %v2561 = vsel %vm427, %v2556, %v2560
      %v2563 = vshrl.u32 %v2490, 16
      %v2565 = vrot.slane %v2563, 4
      %v2566 = vshll.u32 %v2490, 16
      %v2568 = vrot.slane %v2566, 5
      %v2569 = vor.u32 %v2565, %v2568
      %v2570 = vrot.slane %v2569, 4
      %v2572 = vshll.u32 %v2491, 16
      %v2574 = vrot.slane %v2572, 5
      %v2575 = vsel %vm427, %v2570, %v2574
      %v2576 = vshrl.u32 %v2491, 16
      %v2578 = vrot.slane %v2576, 4
      %v2579 = vor.u32 %v2578, %v2574
      %v2580 = vrot.slane %v2579, 4
      %v2582 = vshll.u32 %v2492, 16
      %v2584 = vrot.slane %v2582, 5
      %v2585 = vsel %vm427, %v2580, %v2584
      %v2587 = vshrl.u32 %v2493, 16
      %v2589 = vrot.slane %v2587, 4
      %v2590 = vshll.u32 %v2493, 16
      %v2592 = vrot.slane %v2590, 5
      %v2593 = vor.u32 %v2589, %v2592
      %v2594 = vrot.slane %v2593, 4
      %v2596 = vshll.u32 %v2494, 16
      %v2598 = vrot.slane %v2596, 5
      %v2599 = vsel %vm427, %v2594, %v2598
      %v2600 = vshrl.u32 %v2494, 16
      %v2602 = vrot.slane %v2600, 4
      %v2603 = vor.u32 %v2602, %v2598
      %v2604 = vrot.slane %v2603, 4
      %v2606 = vshll.u32 %v2495, 16
      %v2608 = vrot.slane %v2606, 5
      %v2609 = vsel %vm427, %v2604, %v2608
      %v2611 = vshrl.u32 %v2496, 16
      %v2613 = vrot.slane %v2611, 4
      %v2614 = vshll.u32 %v2496, 16
      %v2616 = vrot.slane %v2614, 5
      %v2617 = vor.u32 %v2613, %v2616
      %v2618 = vrot.slane %v2617, 4
      %v2620 = vshll.u32 %v2497, 16
      %v2622 = vrot.slane %v2620, 5
      %v2623 = vsel %vm427, %v2618, %v2622
      %v2624 = vshrl.u32 %v2497, 16
      %v2626 = vrot.slane %v2624, 4
      %v2627 = vor.u32 %v2626, %v2622
      %v2628 = vrot.slane %v2627, 4
      %v2630 = vshll.u32 %v2498, 16
      %v2632 = vrot.slane %v2630, 5
      %v2633 = vsel %vm427, %v2628, %v2632
      %v2635 = vshrl.u32 %v2499, 16
      %v2637 = vrot.slane %v2635, 4
      %v2638 = vshll.u32 %v2499, 16
      %v2640 = vrot.slane %v2638, 5
      %v2641 = vor.u32 %v2637, %v2640
      %v2642 = vrot.slane %v2641, 4
      %v2644 = vshll.u32 %v2500, 16
      %v2646 = vrot.slane %v2644, 5
      %v2647 = vsel %vm427, %v2642, %v2646
      %v2648 = vshrl.u32 %v2500, 16
      %v2650 = vrot.slane %v2648, 4
      %v2651 = vor.u32 %v2650, %v2646
      %v2652 = vrot.slane %v2651, 4
      %v2654 = vshll.u32 %v2501, 16
      %v2656 = vrot.slane %v2654, 5
      %v2657 = vsel %vm427, %v2652, %v2656
      %v2659 = vshrl.u32 %v2502, 16
      %v2661 = vrot.slane %v2659, 4
      %v2662 = vshll.u32 %v2502, 16
      %v2664 = vrot.slane %v2662, 5
      %v2665 = vor.u32 %v2661, %v2664
      %v2666 = vrot.slane %v2665, 4
      %v2668 = vshll.u32 %v2503, 16
      %v2670 = vrot.slane %v2668, 5
      %v2671 = vsel %vm427, %v2666, %v2670
      %v2672 = vshrl.u32 %v2503, 16
      %v2674 = vrot.slane %v2672, 4
      %v2675 = vor.u32 %v2674, %v2670
      %v2676 = vrot.slane %v2675, 4
      %v2678 = vshll.u32 %v2504, 16
      %v2680 = vrot.slane %v2678, 5
      %v2681 = vsel %vm427, %v2676, %v2680
      %v2683 = vshrl.u32 %v2505, 16
      %v2685 = vrot.slane %v2683, 4
      %v2686 = vshll.u32 %v2505, 16
      %v2688 = vrot.slane %v2686, 5
      %v2689 = vor.u32 %v2685, %v2688
      %v2690 = vrot.slane %v2689, 4
      %v2692 = vshll.u32 %v2506, 16
      %v2694 = vrot.slane %v2692, 5
      %v2695 = vsel %vm427, %v2690, %v2694
      %v2696 = vshrl.u32 %v2506, 16
      %v2698 = vrot.slane %v2696, 4
      %v2699 = vor.u32 %v2698, %v2694
      %v2700 = vrot.slane %v2699, 4
      %v2702 = vshll.u32 %v2507, 16
      %v2704 = vrot.slane %v2702, 5
      %v2705 = vsel %vm427, %v2700, %v2704
      %v2707 = vshrl.u32 %v2508, 16
      %v2709 = vrot.slane %v2707, 4
      %v2710 = vshll.u32 %v2508, 16
      %v2712 = vrot.slane %v2710, 5
      %v2713 = vor.u32 %v2709, %v2712
      %v2714 = vrot.slane %v2713, 4
      %v2716 = vshll.u32 %v2509, 16
      %v2718 = vrot.slane %v2716, 5
      %v2719 = vsel %vm427, %v2714, %v2718
      %v2720 = vshrl.u32 %v2509, 16
      %v2722 = vrot.slane %v2720, 4
      %v2723 = vor.u32 %v2722, %v2718
      %v2724 = vrot.slane %v2723, 4
      %v2726 = vshll.u32 %v2510, 16
      %v2728 = vrot.slane %v2726, 5
      %v2729 = vsel %vm427, %v2724, %v2728
      %v2731 = vshrl.u32 %v2511, 16
      %v2733 = vrot.slane %v2731, 4
      %v2734 = vshll.u32 %v2511, 16
      %v2736 = vrot.slane %v2734, 5
      %v2737 = vor.u32 %v2733, %v2736
      %v2738 = vrot.slane %v2737, 4
      %v2740 = vshll.u32 %v2512, 16
      %v2742 = vrot.slane %v2740, 5
      %v2743 = vsel %vm427, %v2738, %v2742
      %v2744 = vshrl.u32 %v2512, 16
      %v2746 = vrot.slane %v2744, 4
      %v2747 = vor.u32 %v2746, %v2742
      %v2748 = vrot.slane %v2747, 4
      %v2750 = vshll.u32 %v2513, 16
      %v2752 = vrot.slane %v2750, 5
      %v2753 = vsel %vm427, %v2748, %v2752
      %v2754 = vld [vmem:[%s2 + $0x1c0] sm:$0xf]
      %v2755 = vld [vmem:[%s2 + $0x1c4] sm:$0xf]
      %v2756 = vld [vmem:[%s2 + $0x1c8] sm:$0xf]
      %v2757 = vld [vmem:[%s2 + $0x1cc] sm:$0xf]
      %v2758 = vld [vmem:[%s2 + $0x1d0] sm:$0xf]
      %v2759 = vld [vmem:[%s2 + $0x1d4] sm:$0xf]
      %v2760 = vld [vmem:[%s2 + $0x1d8] sm:$0xf]
      %v2761 = vld [vmem:[%s2 + $0x1dc] sm:$0xf]
      %v2762 = vld [vmem:[%s2 + $0x1e0] sm:$0xf]
      %v2763 = vld [vmem:[%s2 + $0x1e4] sm:$0xf]
      %v2764 = vld [vmem:[%s2 + $0x1e8] sm:$0xf]
      %v2765 = vld [vmem:[%s2 + $0x1ec] sm:$0xf]
      %v2766 = vld [vmem:[%s2 + $0x1f0] sm:$0xf]
      %v2767 = vld [vmem:[%s2 + $0x1f4] sm:$0xf]
      %v2768 = vld [vmem:[%s2 + $0x1f8] sm:$0xf]
      %v2769 = vld [vmem:[%s2 + $0x1fc] sm:$0xf]
      %v2770 = vunpack.c.l.b16 %v2527
      %v2771 = vunpack.c.l.b16 %v2537
      %v2772 = vunpack.c.l.b16 %v2551
      %v2773 = vunpack.c.l.b16 %v2561
      %v2774 = vunpack.c.l.b16 %v2575
      %v2775 = vunpack.c.l.b16 %v2585
      %v2776 = vunpack.c.l.b16 %v2599
      %v2777 = vunpack.c.l.b16 %v2609
      %v2778 = vunpack.c.l.b16 %v2623
      %v2779 = vunpack.c.l.b16 %v2633
      %v2780 = vunpack.c.l.b16 %v2647
      %v2781 = vunpack.c.l.b16 %v2657
      %v2782 = vunpack.c.l.b16 %v2671
      %v2783 = vunpack.c.l.b16 %v2681
      %v2784 = vunpack.c.l.b16 %v2695
      %v2785 = vunpack.c.l.b16 %v2705
      %v2786 = vunpack.c.l.b16 %v2719
      %v2787 = vunpack.c.l.b16 %v2729
      %v2788 = vunpack.c.l.b16 %v2743
      %v2789 = vunpack.c.l.b16 %v2753
      %v2790 = vpack.c.b16 %v2771, %v2770
      %v2791 = vpack.c.b16 %v2773, %v2772
      %v2792 = vpack.c.b16 %v2775, %v2774
      %v2793 = vpack.c.b16 %v2777, %v2776
      %v2794 = vpack.c.b16 %v2779, %v2778
      %v2795 = vpack.c.b16 %v2781, %v2780
      %v2796 = vpack.c.b16 %v2783, %v2782
      %v2797 = vpack.c.b16 %v2785, %v2784
      %v2798 = vpack.c.b16 %v2787, %v2786
      %v2799 = vpack.c.b16 %v2789, %v2788
      %v2826 = vunpack.c.l.b16 %v2754
      %v2827 = vunpack.c.l.b16 %v2755
      %v2828 = vunpack.c.l.b16 %v2756
      %v2829 = vunpack.c.l.b16 %v2757
      %v2830 = vunpack.c.l.b16 %v2758
      %v2831 = vunpack.c.l.b16 %v2759
      %v2832 = vunpack.c.l.b16 %v2760
      %v2833 = vunpack.c.l.b16 %v2761
      %v2834 = vunpack.c.l.b16 %v2762
      %v2835 = vunpack.c.l.b16 %v2763
      %v2836 = vunpack.c.l.b16 %v2764
      %v2837 = vunpack.c.l.b16 %v2765
      %v2838 = vunpack.c.l.b16 %v2766
      %v2839 = vunpack.c.l.b16 %v2767
      %v2840 = vunpack.c.l.b16 %v2768
      %v2841 = vunpack.c.l.b16 %v2769
      %v2842 = vpack.c.b16 %v2827, %v2826
      %v2843 = vpack.c.b16 %v2829, %v2828
      %v2844 = vpack.c.b16 %v2831, %v2830
      %v2845 = vpack.c.b16 %v2833, %v2832
      %v2846 = vpack.c.b16 %v2835, %v2834
      %v2847 = vpack.c.b16 %v2837, %v2836
      %v2848 = vpack.c.b16 %v2839, %v2838
      %v2849 = vpack.c.b16 %v2841, %v2840
      %2858 = vmatpush.bf16.msra.mxu0 %v2849
      %2859 = vmatpush.bf16.msra.mxu0 %v2848
      %2860 = vmatpush.bf16.msra.mxu0 %v2847
      %2861 = vmatpush.bf16.msra.mxu0 %v2846
      %2862 = vmatpush.bf16.msra.mxu0 %v2845
      %2863 = vmatpush.bf16.msra.mxu0 %v2844
      %2864 = vmatpush.bf16.msra.mxu0 %v2843
      %2865 = vmatpush.bf16.msra.mxu0 %v2842
      %2866 = vmatmul.bf16.gmra.mxu0 %v2790
      %v2867 = vpop.f32.mrf.mxu0
      %v2868 = vadd.f32 0.0, %v2867
      %v2869 = vpop.f32.mrf.mxu0
      %v2870 = vadd.f32 0.0, %v2869
      %2871 = vmatmul.bf16.gmra.mxu0 %v2791
      %v2872 = vpop.f32.mrf.mxu0
      %v2873 = vadd.f32 0.0, %v2872
      %v2874 = vpop.f32.mrf.mxu0
      %v2875 = vadd.f32 0.0, %v2874
      %2876 = vmatmul.bf16.gmra.mxu0 %v2792
      %v2877 = vpop.f32.mrf.mxu0
      %v2878 = vadd.f32 0.0, %v2877
      %v2879 = vpop.f32.mrf.mxu0
      %v2880 = vadd.f32 0.0, %v2879
      %2881 = vmatmul.bf16.gmra.mxu0 %v2793
      %v2882 = vpop.f32.mrf.mxu0
      %v2883 = vadd.f32 0.0, %v2882
      %v2884 = vpop.f32.mrf.mxu0
      %v2885 = vadd.f32 0.0, %v2884
      %2886 = vmatmul.bf16.gmra.mxu0 %v2794
      %v2887 = vpop.f32.mrf.mxu0
      %v2888 = vadd.f32 0.0, %v2887
      %v2889 = vpop.f32.mrf.mxu0
      %v2890 = vadd.f32 0.0, %v2889
      %2891 = vmatmul.bf16.gmra.mxu0 %v2795
      %v2892 = vpop.f32.mrf.mxu0
      %v2893 = vadd.f32 0.0, %v2892
      %v2894 = vpop.f32.mrf.mxu0
      %v2895 = vadd.f32 0.0, %v2894
      %2896 = vmatmul.bf16.gmra.mxu0 %v2796
      %v2897 = vpop.f32.mrf.mxu0
      %v2898 = vadd.f32 0.0, %v2897
      %v2899 = vpop.f32.mrf.mxu0
      %v2900 = vadd.f32 0.0, %v2899
      %2901 = vmatmul.bf16.gmra.mxu0 %v2797
      %v2902 = vpop.f32.mrf.mxu0
      %v2903 = vadd.f32 0.0, %v2902
      %v2904 = vpop.f32.mrf.mxu0
      %v2905 = vadd.f32 0.0, %v2904
      %2906 = vmatmul.bf16.gmra.mxu0 %v2798
      %v2907 = vpop.f32.mrf.mxu0
      %v2908 = vadd.f32 0.0, %v2907
      %v2909 = vpop.f32.mrf.mxu0
      %v2910 = vadd.f32 0.0, %v2909
      %2911 = vmatmul.bf16.gmra.mxu0 %v2799
      %v2912 = vpop.f32.mrf.mxu0
      %v2913 = vadd.f32 0.0, %v2912
      %v2914 = vpop.f32.mrf.mxu0
      %v2915 = vadd.f32 0.0, %v2914
      %2916 = vdwg.mxu0
      %v2917 = vadd.f32 %v2464, %v2868
      %v2918 = vadd.f32 %v2465, %v2870
      %v2919 = vadd.f32 %v2466, %v2873
      %v2920 = vadd.f32 %v2467, %v2875
      %v2921 = vadd.f32 %v2468, %v2878
      %v2922 = vadd.f32 %v2469, %v2880
      %v2923 = vadd.f32 %v2470, %v2883
      %v2924 = vadd.f32 %v2471, %v2885
      %v2925 = vadd.f32 %v2472, %v2888
      %v2926 = vadd.f32 %v2473, %v2890
      %v2927 = vadd.f32 %v2474, %v2893
      %v2928 = vadd.f32 %v2475, %v2895
      %v2929 = vadd.f32 %v2476, %v2898
      %v2930 = vadd.f32 %v2477, %v2900
      %v2931 = vadd.f32 %v2478, %v2903
      %v2932 = vadd.f32 %v2479, %v2905
      %v2933 = vadd.f32 %v2480, %v2908
      %v2934 = vadd.f32 %v2481, %v2910
      %v2935 = vadd.f32 %v2482, %v2913
      %v2936 = vadd.f32 %v2483, %v2915
      %v2937 = vld [vmem:[%s2260] sm:$0xe]
      %v2938 = vld [vmem:[%s2260 + $0xc] sm:$0xe]
      %v2939 = vld [vmem:[%s2260 + $0x18] sm:$0xe]
      %v2940 = vld [vmem:[%s2260 + $0x24] sm:$0xe]
      %v2941 = vld [vmem:[%s2260 + $0x30] sm:$0xe]
      %v2942 = vld [vmem:[%s2260 + $0x3c] sm:$0xe]
      %v2943 = vld [vmem:[%s2260 + $0x48] sm:$0xe]
      %v2944 = vld [vmem:[%s2260 + $0x54] sm:$0xe]
      %v2945 = vld [vmem:[%s2260 + $0x60] sm:$0xe]
      %v2946 = vld [vmem:[%s2260 + $0x6c] sm:$0xe]
      %v2977 = vrot.slane %v2937, 5
      %v2978 = vrot.slane %v2977, 4
      %v2979 = vrot.slane %v2485, 5
      %v2980 = vsel %vm1030, %v2978, %v2979
      %v2981 = vrot.slane %v2979, 4
      %v2982 = vrot.slane %v2486, 5
      %v2983 = vsel %vm1030, %v2981, %v2982
      %v2984 = vrot.slane %v2938, 5
      %v2985 = vrot.slane %v2984, 4
      %v2986 = vrot.slane %v2488, 5
      %v2987 = vsel %vm1030, %v2985, %v2986
      %v2988 = vrot.slane %v2986, 4
      %v2989 = vrot.slane %v2489, 5
      %v2990 = vsel %vm1030, %v2988, %v2989
      %v2991 = vrot.slane %v2939, 5
      %v2992 = vrot.slane %v2991, 4
      %v2993 = vrot.slane %v2491, 5
      %v2994 = vsel %vm1030, %v2992, %v2993
      %v2995 = vrot.slane %v2993, 4
      %v2996 = vrot.slane %v2492, 5
      %v2997 = vsel %vm1030, %v2995, %v2996
      %v2998 = vrot.slane %v2940, 5
      %v2999 = vrot.slane %v2998, 4
      %v3000 = vrot.slane %v2494, 5
      %v3001 = vsel %vm1030, %v2999, %v3000
      %v3002 = vrot.slane %v3000, 4
      %v3003 = vrot.slane %v2495, 5
      %v3004 = vsel %vm1030, %v3002, %v3003
      %v3005 = vrot.slane %v2941, 5
      %v3006 = vrot.slane %v3005, 4
      %v3007 = vrot.slane %v2497, 5
      %v3008 = vsel %vm1030, %v3006, %v3007
      %v3009 = vrot.slane %v3007, 4
      %v3010 = vrot.slane %v2498, 5
      %v3011 = vsel %vm1030, %v3009, %v3010
      %v3012 = vrot.slane %v2942, 5
      %v3013 = vrot.slane %v3012, 4
      %v3014 = vrot.slane %v2500, 5
      %v3015 = vsel %vm1030, %v3013, %v3014
      %v3016 = vrot.slane %v3014, 4
      %v3017 = vrot.slane %v2501, 5
      %v3018 = vsel %vm1030, %v3016, %v3017
      %v3019 = vrot.slane %v2943, 5
      %v3020 = vrot.slane %v3019, 4
      %v3021 = vrot.slane %v2503, 5
      %v3022 = vsel %vm1030, %v3020, %v3021
      %v3023 = vrot.slane %v3021, 4
      %v3024 = vrot.slane %v2504, 5
      %v3025 = vsel %vm1030, %v3023, %v3024
      %v3026 = vrot.slane %v2944, 5
      %v3027 = vrot.slane %v3026, 4
      %v3028 = vrot.slane %v2506, 5
      %v3029 = vsel %vm1030, %v3027, %v3028
      %v3030 = vrot.slane %v3028, 4
      %v3031 = vrot.slane %v2507, 5
      %v3032 = vsel %vm1030, %v3030, %v3031
      %v3033 = vrot.slane %v2945, 5
      %v3034 = vrot.slane %v3033, 4
      %v3035 = vrot.slane %v2509, 5
      %v3036 = vsel %vm1030, %v3034, %v3035
      %v3037 = vrot.slane %v3035, 4
      %v3038 = vrot.slane %v2510, 5
      %v3039 = vsel %vm1030, %v3037, %v3038
      %v3040 = vrot.slane %v2946, 5
      %v3041 = vrot.slane %v3040, 4
      %v3042 = vrot.slane %v2512, 5
      %v3043 = vsel %vm1030, %v3041, %v3042
      %v3044 = vrot.slane %v3042, 4
      %v3045 = vrot.slane %v2513, 5
      %v3046 = vsel %vm1030, %v3044, %v3045
      %v3047 = vld [vmem:[%s2 + $0x200] sm:$0xf]
      %v3048 = vld [vmem:[%s2 + $0x204] sm:$0xf]
      %v3049 = vld [vmem:[%s2 + $0x208] sm:$0xf]
      %v3050 = vld [vmem:[%s2 + $0x20c] sm:$0xf]
      %v3051 = vld [vmem:[%s2 + $0x210] sm:$0xf]
      %v3052 = vld [vmem:[%s2 + $0x214] sm:$0xf]
      %v3053 = vld [vmem:[%s2 + $0x218] sm:$0xf]
      %v3054 = vld [vmem:[%s2 + $0x21c] sm:$0xf]
      %v3055 = vld [vmem:[%s2 + $0x220] sm:$0xf]
      %v3056 = vld [vmem:[%s2 + $0x224] sm:$0xf]
      %v3057 = vld [vmem:[%s2 + $0x228] sm:$0xf]
      %v3058 = vld [vmem:[%s2 + $0x22c] sm:$0xf]
      %v3059 = vld [vmem:[%s2 + $0x230] sm:$0xf]
      %v3060 = vld [vmem:[%s2 + $0x234] sm:$0xf]
      %v3061 = vld [vmem:[%s2 + $0x238] sm:$0xf]
      %v3062 = vld [vmem:[%s2 + $0x23c] sm:$0xf]
      %v3063 = vunpack.c.l.b16 %v2980
      %v3064 = vunpack.c.l.b16 %v2983
      %v3065 = vunpack.c.l.b16 %v2987
      %v3066 = vunpack.c.l.b16 %v2990
      %v3067 = vunpack.c.l.b16 %v2994
      %v3068 = vunpack.c.l.b16 %v2997
      %v3069 = vunpack.c.l.b16 %v3001
      %v3070 = vunpack.c.l.b16 %v3004
      %v3071 = vunpack.c.l.b16 %v3008
      %v3072 = vunpack.c.l.b16 %v3011
      %v3073 = vunpack.c.l.b16 %v3015
      %v3074 = vunpack.c.l.b16 %v3018
      %v3075 = vunpack.c.l.b16 %v3022
      %v3076 = vunpack.c.l.b16 %v3025
      %v3077 = vunpack.c.l.b16 %v3029
      %v3078 = vunpack.c.l.b16 %v3032
      %v3079 = vunpack.c.l.b16 %v3036
      %v3080 = vunpack.c.l.b16 %v3039
      %v3081 = vunpack.c.l.b16 %v3043
      %v3082 = vunpack.c.l.b16 %v3046
      %v3083 = vpack.c.b16 %v3064, %v3063
      %v3084 = vpack.c.b16 %v3066, %v3065
      %v3085 = vpack.c.b16 %v3068, %v3067
      %v3086 = vpack.c.b16 %v3070, %v3069
      %v3087 = vpack.c.b16 %v3072, %v3071
      %v3088 = vpack.c.b16 %v3074, %v3073
      %v3089 = vpack.c.b16 %v3076, %v3075
      %v3090 = vpack.c.b16 %v3078, %v3077
      %v3091 = vpack.c.b16 %v3080, %v3079
      %v3092 = vpack.c.b16 %v3082, %v3081
      %v3119 = vunpack.c.l.b16 %v3047
      %v3120 = vunpack.c.l.b16 %v3048
      %v3121 = vunpack.c.l.b16 %v3049
      %v3122 = vunpack.c.l.b16 %v3050
      %v3123 = vunpack.c.l.b16 %v3051
      %v3124 = vunpack.c.l.b16 %v3052
      %v3125 = vunpack.c.l.b16 %v3053
      %v3126 = vunpack.c.l.b16 %v3054
      %v3127 = vunpack.c.l.b16 %v3055
      %v3128 = vunpack.c.l.b16 %v3056
      %v3129 = vunpack.c.l.b16 %v3057
      %v3130 = vunpack.c.l.b16 %v3058
      %v3131 = vunpack.c.l.b16 %v3059
      %v3132 = vunpack.c.l.b16 %v3060
      %v3133 = vunpack.c.l.b16 %v3061
      %v3134 = vunpack.c.l.b16 %v3062
      %v3135 = vpack.c.b16 %v3120, %v3119
      %v3136 = vpack.c.b16 %v3122, %v3121
      %v3137 = vpack.c.b16 %v3124, %v3123
      %v3138 = vpack.c.b16 %v3126, %v3125
      %v3139 = vpack.c.b16 %v3128, %v3127
      %v3140 = vpack.c.b16 %v3130, %v3129
      %v3141 = vpack.c.b16 %v3132, %v3131
      %v3142 = vpack.c.b16 %v3134, %v3133
      %3151 = vmatpush.bf16.msra.mxu0 %v3142
      %3152 = vmatpush.bf16.msra.mxu0 %v3141
      %3153 = vmatpush.bf16.msra.mxu0 %v3140
      %3154 = vmatpush.bf16.msra.mxu0 %v3139
      %3155 = vmatpush.bf16.msra.mxu0 %v3138
      %3156 = vmatpush.bf16.msra.mxu0 %v3137
      %3157 = vmatpush.bf16.msra.mxu0 %v3136
      %3158 = vmatpush.bf16.msra.mxu0 %v3135
      %3159 = vmatmul.bf16.gmra.mxu0 %v3083
      %v3160 = vpop.f32.mrf.mxu0
      %v3161 = vadd.f32 0.0, %v3160
      %v3162 = vpop.f32.mrf.mxu0
      %v3163 = vadd.f32 0.0, %v3162
      %3164 = vmatmul.bf16.gmra.mxu0 %v3084
      %v3165 = vpop.f32.mrf.mxu0
      %v3166 = vadd.f32 0.0, %v3165
      %v3167 = vpop.f32.mrf.mxu0
      %v3168 = vadd.f32 0.0, %v3167
      %3169 = vmatmul.bf16.gmra.mxu0 %v3085
      %v3170 = vpop.f32.mrf.mxu0
      %v3171 = vadd.f32 0.0, %v3170
      %v3172 = vpop.f32.mrf.mxu0
      %v3173 = vadd.f32 0.0, %v3172
      %3174 = vmatmul.bf16.gmra.mxu0 %v3086
      %v3175 = vpop.f32.mrf.mxu0
      %v3176 = vadd.f32 0.0, %v3175
      %v3177 = vpop.f32.mrf.mxu0
      %v3178 = vadd.f32 0.0, %v3177
      %3179 = vmatmul.bf16.gmra.mxu0 %v3087
      %v3180 = vpop.f32.mrf.mxu0
      %v3181 = vadd.f32 0.0, %v3180
      %v3182 = vpop.f32.mrf.mxu0
      %v3183 = vadd.f32 0.0, %v3182
      %3184 = vmatmul.bf16.gmra.mxu0 %v3088
      %v3185 = vpop.f32.mrf.mxu0
      %v3186 = vadd.f32 0.0, %v3185
      %v3187 = vpop.f32.mrf.mxu0
      %v3188 = vadd.f32 0.0, %v3187
      %3189 = vmatmul.bf16.gmra.mxu0 %v3089
      %v3190 = vpop.f32.mrf.mxu0
      %v3191 = vadd.f32 0.0, %v3190
      %v3192 = vpop.f32.mrf.mxu0
      %v3193 = vadd.f32 0.0, %v3192
      %3194 = vmatmul.bf16.gmra.mxu0 %v3090
      %v3195 = vpop.f32.mrf.mxu0
      %v3196 = vadd.f32 0.0, %v3195
      %v3197 = vpop.f32.mrf.mxu0
      %v3198 = vadd.f32 0.0, %v3197
      %3199 = vmatmul.bf16.gmra.mxu0 %v3091
      %v3200 = vpop.f32.mrf.mxu0
      %v3201 = vadd.f32 0.0, %v3200
      %v3202 = vpop.f32.mrf.mxu0
      %v3203 = vadd.f32 0.0, %v3202
      %3204 = vmatmul.bf16.gmra.mxu0 %v3092
      %v3205 = vpop.f32.mrf.mxu0
      %v3206 = vadd.f32 0.0, %v3205
      %v3207 = vpop.f32.mrf.mxu0
      %v3208 = vadd.f32 0.0, %v3207
      %3209 = vdwg.mxu0
      %v3210 = vadd.f32 %v2917, %v3161
      %v3211 = vadd.f32 %v2918, %v3163
      %v3212 = vadd.f32 %v2919, %v3166
      %v3213 = vadd.f32 %v2920, %v3168
      %v3214 = vadd.f32 %v2921, %v3171
      %v3215 = vadd.f32 %v2922, %v3173
      %v3216 = vadd.f32 %v2923, %v3176
      %v3217 = vadd.f32 %v2924, %v3178
      %v3218 = vadd.f32 %v2925, %v3181
      %v3219 = vadd.f32 %v2926, %v3183
      %v3220 = vadd.f32 %v2927, %v3186
      %v3221 = vadd.f32 %v2928, %v3188
      %v3222 = vadd.f32 %v2929, %v3191
      %v3223 = vadd.f32 %v2930, %v3193
      %v3224 = vadd.f32 %v2931, %v3196
      %v3225 = vadd.f32 %v2932, %v3198
      %v3226 = vadd.f32 %v2933, %v3201
      %v3227 = vadd.f32 %v2934, %v3203
      %v3228 = vadd.f32 %v2935, %v3206
      %v3229 = vadd.f32 %v2936, %v3208
      %v3231 = vperm.slane %v372, 0
      %v3233 = vmul.f32 %v3210, %v3231
      %v3234 = vmul.f32 %v3211, %v3231
      %v3235 = vmul.f32 %v3212, %v3231
      %v3236 = vmul.f32 %v3213, %v3231
      %v3237 = vmul.f32 %v3214, %v3231
      %v3238 = vmul.f32 %v3215, %v3231
      %v3239 = vmul.f32 %v3216, %v3231
      %v3240 = vmul.f32 %v3217, %v3231
      %v3241 = vmul.f32 %v3218, %v3231
      %v3242 = vmul.f32 %v3219, %v3231
      %v3243 = vmul.f32 %v3220, %v3231
      %v3244 = vmul.f32 %v3221, %v3231
      %v3245 = vmul.f32 %v3222, %v3231
      %v3246 = vmul.f32 %v3223, %v3231
      %v3247 = vmul.f32 %v3224, %v3231
      %v3248 = vmul.f32 %v3225, %v3231
      %v3249 = vmul.f32 %v3226, %v3231
      %v3250 = vmul.f32 %v3227, %v3231
      %v3251 = vmul.f32 %v3228, %v3231
      %v3252 = vmul.f32 %v3229, %v3231
      %v3254 = vperm.slane %v373, 0
      %v3256 = vadd.f32 %v3233, %v3254
      %v3257 = vadd.f32 %v3234, %v3254
      %v3258 = vadd.f32 %v3235, %v3254
      %v3259 = vadd.f32 %v3236, %v3254
      %v3260 = vadd.f32 %v3237, %v3254
      %v3261 = vadd.f32 %v3238, %v3254
      %v3262 = vadd.f32 %v3239, %v3254
      %v3263 = vadd.f32 %v3240, %v3254
      %v3264 = vadd.f32 %v3241, %v3254
      %v3265 = vadd.f32 %v3242, %v3254
      %v3266 = vadd.f32 %v3243, %v3254
      %v3267 = vadd.f32 %v3244, %v3254
      %v3268 = vadd.f32 %v3245, %v3254
      %v3269 = vadd.f32 %v3246, %v3254
      %v3270 = vadd.f32 %v3247, %v3254
      %v3271 = vadd.f32 %v3248, %v3254
      %v3272 = vadd.f32 %v3249, %v3254
      %v3273 = vadd.f32 %v3250, %v3254
      %v3274 = vadd.f32 %v3251, %v3254
      %v3275 = vadd.f32 %v3252, %v3254
      %v3276 = vmax.f32 %v3256, 0.0
      %v3277 = vmax.f32 %v3257, 0.0
      %v3278 = vmax.f32 %v3258, 0.0
      %v3279 = vmax.f32 %v3259, 0.0
      %v3280 = vmax.f32 %v3260, 0.0
      %v3281 = vmax.f32 %v3261, 0.0
      %v3282 = vmax.f32 %v3262, 0.0
      %v3283 = vmax.f32 %v3263, 0.0
      %v3284 = vmax.f32 %v3264, 0.0
      %v3285 = vmax.f32 %v3265, 0.0
      %v3286 = vmax.f32 %v3266, 0.0
      %v3287 = vmax.f32 %v3267, 0.0
      %v3288 = vmax.f32 %v3268, 0.0
      %v3289 = vmax.f32 %v3269, 0.0
      %v3290 = vmax.f32 %v3270, 0.0
      %v3291 = vmax.f32 %v3271, 0.0
      %v3292 = vmax.f32 %v3272, 0.0
      %v3293 = vmax.f32 %v3273, 0.0
      %v3294 = vmax.f32 %v3274, 0.0
      %v3295 = vmax.f32 %v3275, 0.0
      %v3296 = vpack.c.bf16 %v3276, %v3276
      %v3297 = vpack.c.bf16 %v3277, %v3277
      %v3298 = vpack.c.bf16 %v3278, %v3278
      %v3299 = vpack.c.bf16 %v3279, %v3279
      %v3300 = vpack.c.bf16 %v3280, %v3280
      %v3301 = vpack.c.bf16 %v3281, %v3281
      %v3302 = vpack.c.bf16 %v3282, %v3282
      %v3303 = vpack.c.bf16 %v3283, %v3283
      %v3304 = vpack.c.bf16 %v3284, %v3284
      %v3305 = vpack.c.bf16 %v3285, %v3285
      %v3306 = vpack.c.bf16 %v3286, %v3286
      %v3307 = vpack.c.bf16 %v3287, %v3287
      %v3308 = vpack.c.bf16 %v3288, %v3288
      %v3309 = vpack.c.bf16 %v3289, %v3289
      %v3310 = vpack.c.bf16 %v3290, %v3290
      %v3311 = vpack.c.bf16 %v3291, %v3291
      %v3312 = vpack.c.bf16 %v3292, %v3292
      %v3313 = vpack.c.bf16 %v3293, %v3293
      %v3314 = vpack.c.bf16 %v3294, %v3294
      %v3315 = vpack.c.bf16 %v3295, %v3295
      %vm3316 = vsmask.f32 256
      %vm3317 = vsmask.f32 4368
      %vm3318 = vmor %vm3316, %vm3317
      %v3320 = vshrl.u32 %v3296, 16
      %v3322 = vrot.slane %v3320, 7
      %v3323 = vshll.u32 %v3296, 16
      %v3325 = vor.u32 %v3322, %v3323
      %v3326 = vrot.slane %v3322, 4
      %v3328 = vshrl.u32 %v3297, 16
      %v3330 = vrot.slane %v3328, 7
      %v3331 = vshll.u32 %v3297, 16
      %v3333 = vor.u32 %v3330, %v3331
      %v3334 = vsel %vm3318, %v3326, %v3333
      %v3335 = vrot.slane %v3330, 4
      %v3337 = vshrl.u32 %v3298, 16
      %v3339 = vrot.slane %v3337, 7
      %v3340 = vshll.u32 %v3298, 16
      %v3342 = vor.u32 %v3339, %v3340
      %v3343 = vrot.slane %v3339, 4
      %v3345 = vshrl.u32 %v3299, 16
      %v3347 = vrot.slane %v3345, 7
      %v3348 = vshll.u32 %v3299, 16
      %v3350 = vor.u32 %v3347, %v3348
      %v3351 = vsel %vm3318, %v3343, %v3350
      %v3352 = vrot.slane %v3347, 4
      %v3354 = vshrl.u32 %v3300, 16
      %v3356 = vrot.slane %v3354, 7
      %v3357 = vshll.u32 %v3300, 16
      %v3359 = vor.u32 %v3356, %v3357
      %v3360 = vrot.slane %v3356, 4
      %v3362 = vshrl.u32 %v3301, 16
      %v3364 = vrot.slane %v3362, 7
      %v3365 = vshll.u32 %v3301, 16
      %v3367 = vor.u32 %v3364, %v3365
      %v3368 = vsel %vm3318, %v3360, %v3367
      %v3369 = vrot.slane %v3364, 4
      %v3371 = vshrl.u32 %v3302, 16
      %v3373 = vrot.slane %v3371, 7
      %v3374 = vshll.u32 %v3302, 16
      %v3376 = vor.u32 %v3373, %v3374
      %v3377 = vrot.slane %v3373, 4
      %v3379 = vshrl.u32 %v3303, 16
      %v3381 = vrot.slane %v3379, 7
      %v3382 = vshll.u32 %v3303, 16
      %v3384 = vor.u32 %v3381, %v3382
      %v3385 = vsel %vm3318, %v3377, %v3384
      %v3386 = vrot.slane %v3381, 4
      %v3388 = vshrl.u32 %v3304, 16
      %v3390 = vrot.slane %v3388, 7
      %v3391 = vshll.u32 %v3304, 16
      %v3393 = vor.u32 %v3390, %v3391
      %v3394 = vrot.slane %v3390, 4
      %v3396 = vshrl.u32 %v3305, 16
      %v3398 = vrot.slane %v3396, 7
      %v3399 = vshll.u32 %v3305, 16
      %v3401 = vor.u32 %v3398, %v3399
      %v3402 = vsel %vm3318, %v3394, %v3401
      %v3403 = vrot.slane %v3398, 4
      %v3405 = vshrl.u32 %v3306, 16
      %v3407 = vrot.slane %v3405, 7
      %v3408 = vshll.u32 %v3306, 16
      %v3410 = vor.u32 %v3407, %v3408
      %v3411 = vrot.slane %v3407, 4
      %v3413 = vshrl.u32 %v3307, 16
      %v3415 = vrot.slane %v3413, 7
      %v3416 = vshll.u32 %v3307, 16
      %v3418 = vor.u32 %v3415, %v3416
      %v3419 = vsel %vm3318, %v3411, %v3418
      %v3420 = vrot.slane %v3415, 4
      %v3422 = vshrl.u32 %v3308, 16
      %v3424 = vrot.slane %v3422, 7
      %v3425 = vshll.u32 %v3308, 16
      %v3427 = vor.u32 %v3424, %v3425
      %v3428 = vrot.slane %v3424, 4
      %v3430 = vshrl.u32 %v3309, 16
      %v3432 = vrot.slane %v3430, 7
      %v3433 = vshll.u32 %v3309, 16
      %v3435 = vor.u32 %v3432, %v3433
      %v3436 = vsel %vm3318, %v3428, %v3435
      %v3437 = vrot.slane %v3432, 4
      %v3439 = vshrl.u32 %v3310, 16
      %v3441 = vrot.slane %v3439, 7
      %v3442 = vshll.u32 %v3310, 16
      %v3444 = vor.u32 %v3441, %v3442
      %v3445 = vrot.slane %v3441, 4
      %v3447 = vshrl.u32 %v3311, 16
      %v3449 = vrot.slane %v3447, 7
      %v3450 = vshll.u32 %v3311, 16
      %v3452 = vor.u32 %v3449, %v3450
      %v3453 = vsel %vm3318, %v3445, %v3452
      %v3454 = vrot.slane %v3449, 4
      %v3456 = vshrl.u32 %v3312, 16
      %v3458 = vrot.slane %v3456, 7
      %v3459 = vshll.u32 %v3312, 16
      %v3461 = vor.u32 %v3458, %v3459
      %v3462 = vrot.slane %v3458, 4
      %v3464 = vshrl.u32 %v3313, 16
      %v3466 = vrot.slane %v3464, 7
      %v3467 = vshll.u32 %v3313, 16
      %v3469 = vor.u32 %v3466, %v3467
      %v3470 = vsel %vm3318, %v3462, %v3469
      %v3471 = vrot.slane %v3466, 4
      %v3473 = vshrl.u32 %v3314, 16
      %v3475 = vrot.slane %v3473, 7
      %v3476 = vshll.u32 %v3314, 16
      %v3478 = vor.u32 %v3475, %v3476
      %v3479 = vrot.slane %v3475, 4
      %v3481 = vshrl.u32 %v3315, 16
      %v3483 = vrot.slane %v3481, 7
      %v3484 = vshll.u32 %v3315, 16
      %v3486 = vor.u32 %v3483, %v3484
      %v3487 = vsel %vm3318, %v3479, %v3486
      %v3488 = vrot.slane %v3483, 4
      %vm3519 = vcmask 1043456
      %vm3520 = vsmask.f32 7938
      %vm3521 = vmand %vm3519, %vm3520
      %v3522 = vld [vmem:[#allocation2] sm:$0xf]
      %v3523 = vsel %vm3521, %v3325, %v3522
      %3524 = vst [vmem:[#allocation2] sm:$0xf] %v3523
      %3525 = vst [vmem:[#allocation2 + $0x4] sm:$0xf] %v3334
      %vm3526 = vcmask 1040384
      %vm3527 = vmand %vm3526, %vm3316
      %v3528 = vld [vmem:[#allocation2 + $0x8] sm:$0x1]
      %v3529 = vsel %vm3527, %v3335, %v3528
      %3530 = vst [vmem:[#allocation2 + $0x8] sm:$0x1] %v3529
      %v3531 = vld [vmem:[#allocation2 + $0xc] sm:$0xf]
      %v3532 = vsel %vm3521, %v3342, %v3531
      %3533 = vst [vmem:[#allocation2 + $0xc] sm:$0xf] %v3532
      %3534 = vst [vmem:[#allocation2 + $0x10] sm:$0xf] %v3351
      %v3535 = vld [vmem:[#allocation2 + $0x14] sm:$0x1]
      %v3536 = vsel %vm3527, %v3352, %v3535
      %3537 = vst [vmem:[#allocation2 + $0x14] sm:$0x1] %v3536
      %v3538 = vld [vmem:[#allocation2 + $0x18] sm:$0xf]
      %v3539 = vsel %vm3521, %v3359, %v3538
      %3540 = vst [vmem:[#allocation2 + $0x18] sm:$0xf] %v3539
      %3541 = vst [vmem:[#allocation2 + $0x1c] sm:$0xf] %v3368
      %v3542 = vld [vmem:[#allocation2 + $0x20] sm:$0x1]
      %v3543 = vsel %vm3527, %v3369, %v3542
      %3544 = vst [vmem:[#allocation2 + $0x20] sm:$0x1] %v3543
      %v3545 = vld [vmem:[#allocation2 + $0x24] sm:$0xf]
      %v3546 = vsel %vm3521, %v3376, %v3545
      %3547 = vst [vmem:[#allocation2 + $0x24] sm:$0xf] %v3546
      %3548 = vst [vmem:[#allocation2 + $0x28] sm:$0xf] %v3385
      %v3549 = vld [vmem:[#allocation2 + $0x2c] sm:$0x1]
      %v3550 = vsel %vm3527, %v3386, %v3549
      %3551 = vst [vmem:[#allocation2 + $0x2c] sm:$0x1] %v3550
      %v3552 = vld [vmem:[#allocation2 + $0x30] sm:$0xf]
      %v3553 = vsel %vm3521, %v3393, %v3552
      %3554 = vst [vmem:[#allocation2 + $0x30] sm:$0xf] %v3553
      %3555 = vst [vmem:[#allocation2 + $0x34] sm:$0xf] %v3402
      %v3556 = vld [vmem:[#allocation2 + $0x38] sm:$0x1]
      %v3557 = vsel %vm3527, %v3403, %v3556
      %3558 = vst [vmem:[#allocation2 + $0x38] sm:$0x1] %v3557
      %v3559 = vld [vmem:[#allocation2 + $0x3c] sm:$0xf]
      %v3560 = vsel %vm3521, %v3410, %v3559
      %3561 = vst [vmem:[#allocation2 + $0x3c] sm:$0xf] %v3560
      %3562 = vst [vmem:[#allocation2 + $0x40] sm:$0xf] %v3419
      %v3563 = vld [vmem:[#allocation2 + $0x44] sm:$0x1]
      %v3564 = vsel %vm3527, %v3420, %v3563
      %3565 = vst [vmem:[#allocation2 + $0x44] sm:$0x1] %v3564
      %v3566 = vld [vmem:[#allocation2 + $0x48] sm:$0xf]
      %v3567 = vsel %vm3521, %v3427, %v3566
      %3568 = vst [vmem:[#allocation2 + $0x48] sm:$0xf] %v3567
      %3569 = vst [vmem:[#allocation2 + $0x4c] sm:$0xf] %v3436
      %v3570 = vld [vmem:[#allocation2 + $0x50] sm:$0x1]
      %v3571 = vsel %vm3527, %v3437, %v3570
      %3572 = vst [vmem:[#allocation2 + $0x50] sm:$0x1] %v3571
      %v3573 = vld [vmem:[#allocation2 + $0x54] sm:$0xf]
      %v3574 = vsel %vm3521, %v3444, %v3573
      %3575 = vst [vmem:[#allocation2 + $0x54] sm:$0xf] %v3574
      %3576 = vst [vmem:[#allocation2 + $0x58] sm:$0xf] %v3453
      %v3577 = vld [vmem:[#allocation2 + $0x5c] sm:$0x1]
      %v3578 = vsel %vm3527, %v3454, %v3577
      %3579 = vst [vmem:[#allocation2 + $0x5c] sm:$0x1] %v3578
      %v3580 = vld [vmem:[#allocation2 + $0x60] sm:$0xf]
      %v3581 = vsel %vm3521, %v3461, %v3580
      %3582 = vst [vmem:[#allocation2 + $0x60] sm:$0xf] %v3581
      %3583 = vst [vmem:[#allocation2 + $0x64] sm:$0xf] %v3470
      %v3584 = vld [vmem:[#allocation2 + $0x68] sm:$0x1]
      %v3585 = vsel %vm3527, %v3471, %v3584
      %3586 = vst [vmem:[#allocation2 + $0x68] sm:$0x1] %v3585
      %v3587 = vld [vmem:[#allocation2 + $0x6c] sm:$0xf]
      %v3588 = vsel %vm3521, %v3478, %v3587
      %3589 = vst [vmem:[#allocation2 + $0x6c] sm:$0xf] %v3588
      %3590 = vst [vmem:[#allocation2 + $0x70] sm:$0xf] %v3487
      %v3591 = vld [vmem:[#allocation2 + $0x74] sm:$0x1]
      %v3592 = vsel %vm3527, %v3488, %v3591
      %3593 = vst [vmem:[#allocation2 + $0x74] sm:$0x1] %v3592
      %v3594 = vld [vmem:[#allocation2] sm:$0x1]
      %v3595 = vsel %vm3527, 0, %v3594
      %3596 = vst [vmem:[#allocation2] sm:$0x1] %v3595
      %v3597 = vld [vmem:[#allocation2 + $0xc] sm:$0x1]
      %v3598 = vsel %vm3527, 0, %v3597
      %3599 = vst [vmem:[#allocation2 + $0xc] sm:$0x1] %v3598
      %v3600 = vld [vmem:[#allocation2 + $0x18] sm:$0x1]
      %v3601 = vsel %vm3527, 0, %v3600
      %3602 = vst [vmem:[#allocation2 + $0x18] sm:$0x1] %v3601
      %v3603 = vld [vmem:[#allocation2 + $0x24] sm:$0x1]
      %v3604 = vsel %vm3527, 0, %v3603
      %3605 = vst [vmem:[#allocation2 + $0x24] sm:$0x1] %v3604
      %v3606 = vld [vmem:[#allocation2 + $0x30] sm:$0x1]
      %v3607 = vsel %vm3527, 0, %v3606
      %3608 = vst [vmem:[#allocation2 + $0x30] sm:$0x1] %v3607
      %v3609 = vld [vmem:[#allocation2 + $0x3c] sm:$0x1]
      %v3610 = vsel %vm3527, 0, %v3609
      %3611 = vst [vmem:[#allocation2 + $0x3c] sm:$0x1] %v3610
      %v3612 = vld [vmem:[#allocation2 + $0x48] sm:$0x1]
      %v3613 = vsel %vm3527, 0, %v3612
      %3614 = vst [vmem:[#allocation2 + $0x48] sm:$0x1] %v3613
      %v3615 = vld [vmem:[#allocation2 + $0x54] sm:$0x1]
      %v3616 = vsel %vm3527, 0, %v3615
      %3617 = vst [vmem:[#allocation2 + $0x54] sm:$0x1] %v3616
      %v3618 = vld [vmem:[#allocation2 + $0x60] sm:$0x1]
      %v3619 = vsel %vm3527, 0, %v3618
      %3620 = vst [vmem:[#allocation2 + $0x60] sm:$0x1] %v3619
      %v3621 = vld [vmem:[#allocation2 + $0x6c] sm:$0x1]
      %v3622 = vsel %vm3527, 0, %v3621
      %3623 = vst [vmem:[#allocation2 + $0x6c] sm:$0x1] %v3622
      %vm3624 = vmand %vm3526, %vm3520
      %v3625 = vld [vmem:[#allocation2 + $0x8] sm:$0x1]
      %v3626 = vsel %vm3624, 0, %v3625
      %3627 = vst [vmem:[#allocation2 + $0x8] sm:$0x1] %v3626
      %v3628 = vld [vmem:[#allocation2 + $0x14] sm:$0x1]
      %v3629 = vsel %vm3624, 0, %v3628
      %3630 = vst [vmem:[#allocation2 + $0x14] sm:$0x1] %v3629
      %v3631 = vld [vmem:[#allocation2 + $0x20] sm:$0x1]
      %v3632 = vsel %vm3624, 0, %v3631
      %3633 = vst [vmem:[#allocation2 + $0x20] sm:$0x1] %v3632
      %v3634 = vld [vmem:[#allocation2 + $0x2c] sm:$0x1]
      %v3635 = vsel %vm3624, 0, %v3634
      %3636 = vst [vmem:[#allocation2 + $0x2c] sm:$0x1] %v3635
      %v3637 = vld [vmem:[#allocation2 + $0x38] sm:$0x1]
      %v3638 = vsel %vm3624, 0, %v3637
      %3639 = vst [vmem:[#allocation2 + $0x38] sm:$0x1] %v3638
      %v3640 = vld [vmem:[#allocation2 + $0x44] sm:$0x1]
      %v3641 = vsel %vm3624, 0, %v3640
      %3642 = vst [vmem:[#allocation2 + $0x44] sm:$0x1] %v3641
      %v3643 = vld [vmem:[#allocation2 + $0x50] sm:$0x1]
      %v3644 = vsel %vm3624, 0, %v3643
      %3645 = vst [vmem:[#allocation2 + $0x50] sm:$0x1] %v3644
      %v3646 = vld [vmem:[#allocation2 + $0x5c] sm:$0x1]
      %v3647 = vsel %vm3624, 0, %v3646
      %3648 = vst [vmem:[#allocation2 + $0x5c] sm:$0x1] %v3647
      %v3649 = vld [vmem:[#allocation2 + $0x68] sm:$0x1]
      %v3650 = vsel %vm3624, 0, %v3649
      %3651 = vst [vmem:[#allocation2 + $0x68] sm:$0x1] %v3650
      %v3652 = vld [vmem:[#allocation2 + $0x74] sm:$0x1]
      %v3653 = vsel %vm3624, 0, %v3652
      %3654 = vst [vmem:[#allocation2 + $0x74] sm:$0x1] %v3653
      %p3655 = scmp.eq.s32.totalorder %s24, 0
      // Predicated region
      $region53: #{basic_block_forward.1} parent=51 // pred_check
        %p3656 = pneg %p3655
      $region54: #{basic_block_forward.1} parent=51 // pred_check_branch
        %3658 = sbr.rel (%p3656) target = $region56
      $region55: #{basic_block_forward.1} parent=51 // pred_region
        %v3659 = vld [vmem:[#allocation2] sm:$0xf]
        %v3660 = vsel %vm3521, 0, %v3659
        %3661 = vst [vmem:[#allocation2] sm:$0xf] %v3660
        %3662 = vst [vmem:[#allocation2 + $0x4] sm:$0xf] 0
        %v3663 = vld [vmem:[#allocation2 + $0x8] sm:$0x1]
        %v3664 = vsel %vm3527, 0, %v3663
        %3665 = vst [vmem:[#allocation2 + $0x8] sm:$0x1] %v3664
      $region56: #{basic_block_forward.1} parent=51 // pred_fallthru
        _
      %p3666 = scmp.eq.s32.totalorder %s24, 1
      // Predicated region
      $region57: #{basic_block_forward.1} parent=51 // pred_check
        %p3667 = pneg %p3666
      $region58: #{basic_block_forward.1} parent=51 // pred_check_branch
        %3669 = sbr.rel (%p3667) target = $region60
      $region59: #{basic_block_forward.1} parent=51 // pred_region
        %s3670 = scalar_lea.vmem [#allocation2], 108
        %v3671 = vld [vmem:[%s3670] sm:$0xf]
        %v3672 = vsel %vm3521, 0, %v3671
        %3673 = vst [vmem:[%s3670] sm:$0xf] %v3672
        %3674 = vst [vmem:[%s3670 + $0x4] sm:$0xf] 0
        %v3675 = vld [vmem:[%s3670 + $0x8] sm:$0x1]
        %v3676 = vsel %vm3527, 0, %v3675
        %3677 = vst [vmem:[%s3670 + $0x8] sm:$0x1] %v3676
      $region60: #{basic_block_forward.1} parent=51 // pred_fallthru
        _
      %v3678 = vld [vmem:[#allocation2] sm:$0xf]
      %v3679 = vld [vmem:[#allocation2 + $0x4] sm:$0xf]
      %v3680 = vld [vmem:[#allocation2 + $0xc] sm:$0xf]
      %v3681 = vld [vmem:[#allocation2 + $0x10] sm:$0xf]
      %v3682 = vld [vmem:[#allocation2 + $0x18] sm:$0xf]
      %v3683 = vld [vmem:[#allocation2 + $0x1c] sm:$0xf]
      %v3684 = vld [vmem:[#allocation2 + $0x24] sm:$0xf]
      %v3685 = vld [vmem:[#allocation2 + $0x28] sm:$0xf]
      %v3686 = vld [vmem:[#allocation2 + $0x30] sm:$0xf]
      %v3687 = vld [vmem:[#allocation2 + $0x34] sm:$0xf]
      %v3688 = vld [vmem:[#allocation2 + $0x3c] sm:$0xf]
      %v3689 = vld [vmem:[#allocation2 + $0x40] sm:$0xf]
      %v3690 = vld [vmem:[#allocation2 + $0x48] sm:$0xf]
      %v3691 = vld [vmem:[#allocation2 + $0x4c] sm:$0xf]
      %v3692 = vld [vmem:[#allocation2 + $0x54] sm:$0xf]
      %v3693 = vld [vmem:[#allocation2 + $0x58] sm:$0xf]
      %v3694 = vld [vmem:[%s5] sm:$0xf]
      %v3695 = vld [vmem:[%s5 + $0x4] sm:$0xf]
      %v3696 = vld [vmem:[%s5 + $0x8] sm:$0xf]
      %v3697 = vld [vmem:[%s5 + $0xc] sm:$0xf]
      %v3698 = vld [vmem:[%s5 + $0x10] sm:$0xf]
      %v3699 = vld [vmem:[%s5 + $0x14] sm:$0xf]
      %v3700 = vld [vmem:[%s5 + $0x18] sm:$0xf]
      %v3701 = vld [vmem:[%s5 + $0x1c] sm:$0xf]
      %v3702 = vld [vmem:[%s5 + $0x20] sm:$0xf]
      %v3703 = vld [vmem:[%s5 + $0x24] sm:$0xf]
      %v3704 = vld [vmem:[%s5 + $0x28] sm:$0xf]
      %v3705 = vld [vmem:[%s5 + $0x2c] sm:$0xf]
      %v3706 = vld [vmem:[%s5 + $0x30] sm:$0xf]
      %v3707 = vld [vmem:[%s5 + $0x34] sm:$0xf]
      %v3708 = vld [vmem:[%s5 + $0x38] sm:$0xf]
      %v3709 = vld [vmem:[%s5 + $0x3c] sm:$0xf]
      %v3710 = vld [vmem:[#allocation2 + $0x8] sm:$0x1]
      %v3711 = vld [vmem:[#allocation2 + $0x14] sm:$0x1]
      %v3712 = vld [vmem:[#allocation2 + $0x20] sm:$0x1]
      %v3713 = vld [vmem:[#allocation2 + $0x2c] sm:$0x1]
      %v3714 = vld [vmem:[#allocation2 + $0x38] sm:$0x1]
      %v3715 = vld [vmem:[#allocation2 + $0x44] sm:$0x1]
      %v3716 = vld [vmem:[#allocation2 + $0x50] sm:$0x1]
      %v3717 = vld [vmem:[#allocation2 + $0x5c] sm:$0x1]
      %v3719 = vshrl.u32 %v3678, 16
      %v3721 = vrot.slane %v3719, 4
      %v3722 = vshll.u32 %v3678, 16
      %v3724 = vrot.slane %v3722, 5
      %v3725 = vor.u32 %v3721, %v3724
      %v3726 = vrot.slane %v3725, 4
      %v3728 = vshll.u32 %v3679, 16
      %v3730 = vrot.slane %v3728, 5
      %v3731 = vsel %vm427, %v3726, %v3730
      %v3732 = vshrl.u32 %v3679, 16
      %v3734 = vrot.slane %v3732, 4
      %v3735 = vor.u32 %v3734, %v3730
      %v3736 = vrot.slane %v3735, 4
      %v3738 = vshll.u32 %v3710, 16
      %v3740 = vrot.slane %v3738, 5
      %v3741 = vsel %vm427, %v3736, %v3740
      %v3743 = vshrl.u32 %v3680, 16
      %v3745 = vrot.slane %v3743, 4
      %v3746 = vshll.u32 %v3680, 16
      %v3748 = vrot.slane %v3746, 5
      %v3749 = vor.u32 %v3745, %v3748
      %v3750 = vrot.slane %v3749, 4
      %v3752 = vshll.u32 %v3681, 16
      %v3754 = vrot.slane %v3752, 5
      %v3755 = vsel %vm427, %v3750, %v3754
      %v3756 = vshrl.u32 %v3681, 16
      %v3758 = vrot.slane %v3756, 4
      %v3759 = vor.u32 %v3758, %v3754
      %v3760 = vrot.slane %v3759, 4
      %v3762 = vshll.u32 %v3711, 16
      %v3764 = vrot.slane %v3762, 5
      %v3765 = vsel %vm427, %v3760, %v3764
      %v3767 = vshrl.u32 %v3682, 16
      %v3769 = vrot.slane %v3767, 4
      %v3770 = vshll.u32 %v3682, 16
      %v3772 = vrot.slane %v3770, 5
      %v3773 = vor.u32 %v3769, %v3772
      %v3774 = vrot.slane %v3773, 4
      %v3776 = vshll.u32 %v3683, 16
      %v3778 = vrot.slane %v3776, 5
      %v3779 = vsel %vm427, %v3774, %v3778
      %v3780 = vshrl.u32 %v3683, 16
      %v3782 = vrot.slane %v3780, 4
      %v3783 = vor.u32 %v3782, %v3778
      %v3784 = vrot.slane %v3783, 4
      %v3786 = vshll.u32 %v3712, 16
      %v3788 = vrot.slane %v3786, 5
      %v3789 = vsel %vm427, %v3784, %v3788
      %v3791 = vshrl.u32 %v3684, 16
      %v3793 = vrot.slane %v3791, 4
      %v3794 = vshll.u32 %v3684, 16
      %v3796 = vrot.slane %v3794, 5
      %v3797 = vor.u32 %v3793, %v3796
      %v3798 = vrot.slane %v3797, 4
      %v3800 = vshll.u32 %v3685, 16
      %v3802 = vrot.slane %v3800, 5
      %v3803 = vsel %vm427, %v3798, %v3802
      %v3804 = vshrl.u32 %v3685, 16
      %v3806 = vrot.slane %v3804, 4
      %v3807 = vor.u32 %v3806, %v3802
      %v3808 = vrot.slane %v3807, 4
      %v3810 = vshll.u32 %v3713, 16
      %v3812 = vrot.slane %v3810, 5
      %v3813 = vsel %vm427, %v3808, %v3812
      %v3815 = vshrl.u32 %v3686, 16
      %v3817 = vrot.slane %v3815, 4
      %v3818 = vshll.u32 %v3686, 16
      %v3820 = vrot.slane %v3818, 5
      %v3821 = vor.u32 %v3817, %v3820
      %v3822 = vrot.slane %v3821, 4
      %v3824 = vshll.u32 %v3687, 16
      %v3826 = vrot.slane %v3824, 5
      %v3827 = vsel %vm427, %v3822, %v3826
      %v3828 = vshrl.u32 %v3687, 16
      %v3830 = vrot.slane %v3828, 4
      %v3831 = vor.u32 %v3830, %v3826
      %v3832 = vrot.slane %v3831, 4
      %v3834 = vshll.u32 %v3714, 16
      %v3836 = vrot.slane %v3834, 5
      %v3837 = vsel %vm427, %v3832, %v3836
      %v3839 = vshrl.u32 %v3688, 16
      %v3841 = vrot.slane %v3839, 4
      %v3842 = vshll.u32 %v3688, 16
      %v3844 = vrot.slane %v3842, 5
      %v3845 = vor.u32 %v3841, %v3844
      %v3846 = vrot.slane %v3845, 4
      %v3848 = vshll.u32 %v3689, 16
      %v3850 = vrot.slane %v3848, 5
      %v3851 = vsel %vm427, %v3846, %v3850
      %v3852 = vshrl.u32 %v3689, 16
      %v3854 = vrot.slane %v3852, 4
      %v3855 = vor.u32 %v3854, %v3850
      %v3856 = vrot.slane %v3855, 4
      %v3858 = vshll.u32 %v3715, 16
      %v3860 = vrot.slane %v3858, 5
      %v3861 = vsel %vm427, %v3856, %v3860
      %v3863 = vshrl.u32 %v3690, 16
      %v3865 = vrot.slane %v3863, 4
      %v3866 = vshll.u32 %v3690, 16
      %v3868 = vrot.slane %v3866, 5
      %v3869 = vor.u32 %v3865, %v3868
      %v3870 = vrot.slane %v3869, 4
      %v3872 = vshll.u32 %v3691, 16
      %v3874 = vrot.slane %v3872, 5
      %v3875 = vsel %vm427, %v3870, %v3874
      %v3876 = vshrl.u32 %v3691, 16
      %v3878 = vrot.slane %v3876, 4
      %v3879 = vor.u32 %v3878, %v3874
      %v3880 = vrot.slane %v3879, 4
      %v3882 = vshll.u32 %v3716, 16
      %v3884 = vrot.slane %v3882, 5
      %v3885 = vsel %vm427, %v3880, %v3884
      %v3887 = vshrl.u32 %v3692, 16
      %v3889 = vrot.slane %v3887, 4
      %v3890 = vshll.u32 %v3692, 16
      %v3892 = vrot.slane %v3890, 5
      %v3893 = vor.u32 %v3889, %v3892
      %v3894 = vrot.slane %v3893, 4
      %v3896 = vshll.u32 %v3693, 16
      %v3898 = vrot.slane %v3896, 5
      %v3899 = vsel %vm427, %v3894, %v3898
      %v3900 = vshrl.u32 %v3693, 16
      %v3902 = vrot.slane %v3900, 4
      %v3903 = vor.u32 %v3902, %v3898
      %v3904 = vrot.slane %v3903, 4
      %v3906 = vshll.u32 %v3717, 16
      %v3908 = vrot.slane %v3906, 5
      %v3909 = vsel %vm427, %v3904, %v3908
      %v3910 = vld [vmem:[%s5 + $0x40] sm:$0xf]
      %v3911 = vld [vmem:[%s5 + $0x44] sm:$0xf]
      %v3912 = vld [vmem:[%s5 + $0x48] sm:$0xf]
      %v3913 = vld [vmem:[%s5 + $0x4c] sm:$0xf]
      %v3914 = vld [vmem:[%s5 + $0x50] sm:$0xf]
      %v3915 = vld [vmem:[%s5 + $0x54] sm:$0xf]
      %v3916 = vld [vmem:[%s5 + $0x58] sm:$0xf]
      %v3917 = vld [vmem:[%s5 + $0x5c] sm:$0xf]
      %v3918 = vld [vmem:[%s5 + $0x60] sm:$0xf]
      %v3919 = vld [vmem:[%s5 + $0x64] sm:$0xf]
      %v3920 = vld [vmem:[%s5 + $0x68] sm:$0xf]
      %v3921 = vld [vmem:[%s5 + $0x6c] sm:$0xf]
      %v3922 = vld [vmem:[%s5 + $0x70] sm:$0xf]
      %v3923 = vld [vmem:[%s5 + $0x74] sm:$0xf]
      %v3924 = vld [vmem:[%s5 + $0x78] sm:$0xf]
      %v3925 = vld [vmem:[%s5 + $0x7c] sm:$0xf]
      %v3926 = vunpack.c.l.b16 %v3731
      %v3927 = vunpack.c.l.b16 %v3741
      %v3928 = vunpack.c.l.b16 %v3755
      %v3929 = vunpack.c.l.b16 %v3765
      %v3930 = vunpack.c.l.b16 %v3779
      %v3931 = vunpack.c.l.b16 %v3789
      %v3932 = vunpack.c.l.b16 %v3803
      %v3933 = vunpack.c.l.b16 %v3813
      %v3934 = vunpack.c.l.b16 %v3827
      %v3935 = vunpack.c.l.b16 %v3837
      %v3936 = vunpack.c.l.b16 %v3851
      %v3937 = vunpack.c.l.b16 %v3861
      %v3938 = vunpack.c.l.b16 %v3875
      %v3939 = vunpack.c.l.b16 %v3885
      %v3940 = vunpack.c.l.b16 %v3899
      %v3941 = vunpack.c.l.b16 %v3909
      %v3942 = vpack.c.b16 %v3927, %v3926
      %v3943 = vpack.c.b16 %v3929, %v3928
      %v3944 = vpack.c.b16 %v3931, %v3930
      %v3945 = vpack.c.b16 %v3933, %v3932
      %v3946 = vpack.c.b16 %v3935, %v3934
      %v3947 = vpack.c.b16 %v3937, %v3936
      %v3948 = vpack.c.b16 %v3939, %v3938
      %v3949 = vpack.c.b16 %v3941, %v3940
      %v3974 = vunpack.c.l.b16 %v3910
      %v3975 = vunpack.c.l.b16 %v3911
      %v3976 = vunpack.c.l.b16 %v3912
      %v3977 = vunpack.c.l.b16 %v3913
      %v3978 = vunpack.c.l.b16 %v3914
      %v3979 = vunpack.c.l.b16 %v3915
      %v3980 = vunpack.c.l.b16 %v3916
      %v3981 = vunpack.c.l.b16 %v3917
      %v3982 = vunpack.c.l.b16 %v3918
      %v3983 = vunpack.c.l.b16 %v3919
      %v3984 = vunpack.c.l.b16 %v3920
      %v3985 = vunpack.c.l.b16 %v3921
      %v3986 = vunpack.c.l.b16 %v3922
      %v3987 = vunpack.c.l.b16 %v3923
      %v3988 = vunpack.c.l.b16 %v3924
      %v3989 = vunpack.c.l.b16 %v3925
      %v3990 = vpack.c.b16 %v3975, %v3974
      %v3991 = vpack.c.b16 %v3977, %v3976
      %v3992 = vpack.c.b16 %v3979, %v3978
      %v3993 = vpack.c.b16 %v3981, %v3980
      %v3994 = vpack.c.b16 %v3983, %v3982
      %v3995 = vpack.c.b16 %v3985, %v3984
      %v3996 = vpack.c.b16 %v3987, %v3986
      %v3997 = vpack.c.b16 %v3989, %v3988
      %4006 = vmatpush.bf16.msra.mxu0 %v3997
      %4007 = vmatpush.bf16.msra.mxu0 %v3996
      %4008 = vmatpush.bf16.msra.mxu0 %v3995
      %4009 = vmatpush.bf16.msra.mxu0 %v3994
      %4010 = vmatpush.bf16.msra.mxu0 %v3993
      %4011 = vmatpush.bf16.msra.mxu0 %v3992
      %4012 = vmatpush.bf16.msra.mxu0 %v3991
      %4013 = vmatpush.bf16.msra.mxu0 %v3990
      %4014 = vmatmul.bf16.gmra.mxu0 %v3942
      %v4015 = vpop.f32.mrf.mxu0
      %v4016 = vadd.f32 0.0, %v4015
      %v4017 = vpop.f32.mrf.mxu0
      %v4018 = vadd.f32 0.0, %v4017
      %4019 = vmatmul.bf16.gmra.mxu0 %v3943
      %v4020 = vpop.f32.mrf.mxu0
      %v4021 = vadd.f32 0.0, %v4020
      %v4022 = vpop.f32.mrf.mxu0
      %v4023 = vadd.f32 0.0, %v4022
      %4024 = vmatmul.bf16.gmra.mxu0 %v3944
      %v4025 = vpop.f32.mrf.mxu0
      %v4026 = vadd.f32 0.0, %v4025
      %v4027 = vpop.f32.mrf.mxu0
      %v4028 = vadd.f32 0.0, %v4027
      %4029 = vmatmul.bf16.gmra.mxu0 %v3945
      %v4030 = vpop.f32.mrf.mxu0
      %v4031 = vadd.f32 0.0, %v4030
      %v4032 = vpop.f32.mrf.mxu0
      %v4033 = vadd.f32 0.0, %v4032
      %4034 = vmatmul.bf16.gmra.mxu0 %v3946
      %v4035 = vpop.f32.mrf.mxu0
      %v4036 = vadd.f32 0.0, %v4035
      %v4037 = vpop.f32.mrf.mxu0
      %v4038 = vadd.f32 0.0, %v4037
      %4039 = vmatmul.bf16.gmra.mxu0 %v3947
      %v4040 = vpop.f32.mrf.mxu0
      %v4041 = vadd.f32 0.0, %v4040
      %v4042 = vpop.f32.mrf.mxu0
      %v4043 = vadd.f32 0.0, %v4042
      %4044 = vmatmul.bf16.gmra.mxu0 %v3948
      %v4045 = vpop.f32.mrf.mxu0
      %v4046 = vadd.f32 0.0, %v4045
      %v4047 = vpop.f32.mrf.mxu0
      %v4048 = vadd.f32 0.0, %v4047
      %4049 = vmatmul.bf16.gmra.mxu0 %v3949
      %v4050 = vpop.f32.mrf.mxu0
      %v4051 = vadd.f32 0.0, %v4050
      %v4052 = vpop.f32.mrf.mxu0
      %v4053 = vadd.f32 0.0, %v4052
      %4054 = vdwg.mxu0
      %v4071 = vunpack.c.l.b16 %v3678
      %v4072 = vunpack.c.l.b16 %v3679
      %v4073 = vunpack.c.l.b16 %v3680
      %v4074 = vunpack.c.l.b16 %v3681
      %v4075 = vunpack.c.l.b16 %v3682
      %v4076 = vunpack.c.l.b16 %v3683
      %v4077 = vunpack.c.l.b16 %v3684
      %v4078 = vunpack.c.l.b16 %v3685
      %v4079 = vunpack.c.l.b16 %v3686
      %v4080 = vunpack.c.l.b16 %v3687
      %v4081 = vunpack.c.l.b16 %v3688
      %v4082 = vunpack.c.l.b16 %v3689
      %v4083 = vunpack.c.l.b16 %v3690
      %v4084 = vunpack.c.l.b16 %v3691
      %v4085 = vunpack.c.l.b16 %v3692
      %v4086 = vunpack.c.l.b16 %v3693
      %v4087 = vpack.c.b16 %v4072, %v4071
      %v4088 = vpack.c.b16 %v4074, %v4073
      %v4089 = vpack.c.b16 %v4076, %v4075
      %v4090 = vpack.c.b16 %v4078, %v4077
      %v4091 = vpack.c.b16 %v4080, %v4079
      %v4092 = vpack.c.b16 %v4082, %v4081
      %v4093 = vpack.c.b16 %v4084, %v4083
      %v4094 = vpack.c.b16 %v4086, %v4085
      %v4119 = vunpack.c.l.b16 %v3694
      %v4120 = vunpack.c.l.b16 %v3695
      %v4121 = vunpack.c.l.b16 %v3696
      %v4122 = vunpack.c.l.b16 %v3697
      %v4123 = vunpack.c.l.b16 %v3698
      %v4124 = vunpack.c.l.b16 %v3699
      %v4125 = vunpack.c.l.b16 %v3700
      %v4126 = vunpack.c.l.b16 %v3701
      %v4127 = vunpack.c.l.b16 %v3702
      %v4128 = vunpack.c.l.b16 %v3703
      %v4129 = vunpack.c.l.b16 %v3704
      %v4130 = vunpack.c.l.b16 %v3705
      %v4131 = vunpack.c.l.b16 %v3706
      %v4132 = vunpack.c.l.b16 %v3707
      %v4133 = vunpack.c.l.b16 %v3708
      %v4134 = vunpack.c.l.b16 %v3709
      %v4135 = vpack.c.b16 %v4120, %v4119
      %v4136 = vpack.c.b16 %v4122, %v4121
      %v4137 = vpack.c.b16 %v4124, %v4123
      %v4138 = vpack.c.b16 %v4126, %v4125
      %v4139 = vpack.c.b16 %v4128, %v4127
      %v4140 = vpack.c.b16 %v4130, %v4129
      %v4141 = vpack.c.b16 %v4132, %v4131
      %v4142 = vpack.c.b16 %v4134, %v4133
      %4151 = vmatpush.bf16.msra.mxu0 %v4142
      %4152 = vmatpush.bf16.msra.mxu0 %v4141
      %4153 = vmatpush.bf16.msra.mxu0 %v4140
      %4154 = vmatpush.bf16.msra.mxu0 %v4139
      %4155 = vmatpush.bf16.msra.mxu0 %v4138
      %4156 = vmatpush.bf16.msra.mxu0 %v4137
      %4157 = vmatpush.bf16.msra.mxu0 %v4136
      %4158 = vmatpush.bf16.msra.mxu0 %v4135
      %4159 = vmatmul.bf16.gmra.mxu0 %v4087
      %v4160 = vpop.f32.mrf.mxu0
      %v4161 = vadd.f32 %v4016, %v4160
      %v4162 = vpop.f32.mrf.mxu0
      %v4163 = vadd.f32 %v4018, %v4162
      %4164 = vmatmul.bf16.gmra.mxu0 %v4088
      %v4165 = vpop.f32.mrf.mxu0
      %v4166 = vadd.f32 %v4021, %v4165
      %v4167 = vpop.f32.mrf.mxu0
      %v4168 = vadd.f32 %v4023, %v4167
      %4169 = vmatmul.bf16.gmra.mxu0 %v4089
      %v4170 = vpop.f32.mrf.mxu0
      %v4171 = vadd.f32 %v4026, %v4170
      %v4172 = vpop.f32.mrf.mxu0
      %v4173 = vadd.f32 %v4028, %v4172
      %4174 = vmatmul.bf16.gmra.mxu0 %v4090
      %v4175 = vpop.f32.mrf.mxu0
      %v4176 = vadd.f32 %v4031, %v4175
      %v4177 = vpop.f32.mrf.mxu0
      %v4178 = vadd.f32 %v4033, %v4177
      %4179 = vmatmul.bf16.gmra.mxu0 %v4091
      %v4180 = vpop.f32.mrf.mxu0
      %v4181 = vadd.f32 %v4036, %v4180
      %v4182 = vpop.f32.mrf.mxu0
      %v4183 = vadd.f32 %v4038, %v4182
      %4184 = vmatmul.bf16.gmra.mxu0 %v4092
      %v4185 = vpop.f32.mrf.mxu0
      %v4186 = vadd.f32 %v4041, %v4185
      %v4187 = vpop.f32.mrf.mxu0
      %v4188 = vadd.f32 %v4043, %v4187
      %4189 = vmatmul.bf16.gmra.mxu0 %v4093
      %v4190 = vpop.f32.mrf.mxu0
      %v4191 = vadd.f32 %v4046, %v4190
      %v4192 = vpop.f32.mrf.mxu0
      %v4193 = vadd.f32 %v4048, %v4192
      %4194 = vmatmul.bf16.gmra.mxu0 %v4094
      %v4195 = vpop.f32.mrf.mxu0
      %v4196 = vadd.f32 %v4051, %v4195
      %v4197 = vpop.f32.mrf.mxu0
      %v4198 = vadd.f32 %v4053, %v4197
      %4199 = vdwg.mxu0
      %v4200 = vld [vmem:[#allocation2] sm:$0xe]
      %v4201 = vld [vmem:[#allocation2 + $0xc] sm:$0xe]
      %v4202 = vld [vmem:[#allocation2 + $0x18] sm:$0xe]
      %v4203 = vld [vmem:[#allocation2 + $0x24] sm:$0xe]
      %v4204 = vld [vmem:[#allocation2 + $0x30] sm:$0xe]
      %v4205 = vld [vmem:[#allocation2 + $0x3c] sm:$0xe]
      %v4206 = vld [vmem:[#allocation2 + $0x48] sm:$0xe]
      %v4207 = vld [vmem:[#allocation2 + $0x54] sm:$0xe]
      %v4224 = vrot.slane %v4200, 5
      %v4225 = vrot.slane %v4224, 4
      %v4226 = vrot.slane %v3679, 5
      %v4227 = vsel %vm1030, %v4225, %v4226
      %v4228 = vrot.slane %v4226, 4
      %v4229 = vrot.slane %v3710, 5
      %v4230 = vsel %vm1030, %v4228, %v4229
      %v4231 = vrot.slane %v4201, 5
      %v4232 = vrot.slane %v4231, 4
      %v4233 = vrot.slane %v3681, 5
      %v4234 = vsel %vm1030, %v4232, %v4233
      %v4235 = vrot.slane %v4233, 4
      %v4236 = vrot.slane %v3711, 5
      %v4237 = vsel %vm1030, %v4235, %v4236
      %v4238 = vrot.slane %v4202, 5
      %v4239 = vrot.slane %v4238, 4
      %v4240 = vrot.slane %v3683, 5
      %v4241 = vsel %vm1030, %v4239, %v4240
      %v4242 = vrot.slane %v4240, 4
      %v4243 = vrot.slane %v3712, 5
      %v4244 = vsel %vm1030, %v4242, %v4243
      %v4245 = vrot.slane %v4203, 5
      %v4246 = vrot.slane %v4245, 4
      %v4247 = vrot.slane %v3685, 5
      %v4248 = vsel %vm1030, %v4246, %v4247
      %v4249 = vrot.slane %v4247, 4
      %v4250 = vrot.slane %v3713, 5
      %v4251 = vsel %vm1030, %v4249, %v4250
      %v4252 = vrot.slane %v4204, 5
      %v4253 = vrot.slane %v4252, 4
      %v4254 = vrot.slane %v3687, 5
      %v4255 = vsel %vm1030, %v4253, %v4254
      %v4256 = vrot.slane %v4254, 4
      %v4257 = vrot.slane %v3714, 5
      %v4258 = vsel %vm1030, %v4256, %v4257
      %v4259 = vrot.slane %v4205, 5
      %v4260 = vrot.slane %v4259, 4
      %v4261 = vrot.slane %v3689, 5
      %v4262 = vsel %vm1030, %v4260, %v4261
      %v4263 = vrot.slane %v4261, 4
      %v4264 = vrot.slane %v3715, 5
      %v4265 = vsel %vm1030, %v4263, %v4264
      %v4266 = vrot.slane %v4206, 5
      %v4267 = vrot.slane %v4266, 4
      %v4268 = vrot.slane %v3691, 5
      %v4269 = vsel %vm1030, %v4267, %v4268
      %v4270 = vrot.slane %v4268, 4
      %v4271 = vrot.slane %v3716, 5
      %v4272 = vsel %vm1030, %v4270, %v4271
      %v4273 = vrot.slane %v4207, 5
      %v4274 = vrot.slane %v4273, 4
      %v4275 = vrot.slane %v3693, 5
      %v4276 = vsel %vm1030, %v4274, %v4275
      %v4277 = vrot.slane %v4275, 4
      %v4278 = vrot.slane %v3717, 5
      %v4279 = vsel %vm1030, %v4277, %v4278
      %v4280 = vld [vmem:[%s5 + $0x80] sm:$0xf]
      %v4281 = vld [vmem:[%s5 + $0x84] sm:$0xf]
      %v4282 = vld [vmem:[%s5 + $0x88] sm:$0xf]
      %v4283 = vld [vmem:[%s5 + $0x8c] sm:$0xf]
      %v4284 = vld [vmem:[%s5 + $0x90] sm:$0xf]
      %v4285 = vld [vmem:[%s5 + $0x94] sm:$0xf]
      %v4286 = vld [vmem:[%s5 + $0x98] sm:$0xf]
      %v4287 = vld [vmem:[%s5 + $0x9c] sm:$0xf]
      %v4288 = vld [vmem:[%s5 + $0xa0] sm:$0xf]
      %v4289 = vld [vmem:[%s5 + $0xa4] sm:$0xf]
      %v4290 = vld [vmem:[%s5 + $0xa8] sm:$0xf]
      %v4291 = vld [vmem:[%s5 + $0xac] sm:$0xf]
      %v4292 = vld [vmem:[%s5 + $0xb0] sm:$0xf]
      %v4293 = vld [vmem:[%s5 + $0xb4] sm:$0xf]
      %v4294 = vld [vmem:[%s5 + $0xb8] sm:$0xf]
      %v4295 = vld [vmem:[%s5 + $0xbc] sm:$0xf]
      %v4296 = vunpack.c.l.b16 %v4227
      %v4297 = vunpack.c.l.b16 %v4230
      %v4298 = vunpack.c.l.b16 %v4234
      %v4299 = vunpack.c.l.b16 %v4237
      %v4300 = vunpack.c.l.b16 %v4241
      %v4301 = vunpack.c.l.b16 %v4244
      %v4302 = vunpack.c.l.b16 %v4248
      %v4303 = vunpack.c.l.b16 %v4251
      %v4304 = vunpack.c.l.b16 %v4255
      %v4305 = vunpack.c.l.b16 %v4258
      %v4306 = vunpack.c.l.b16 %v4262
      %v4307 = vunpack.c.l.b16 %v4265
      %v4308 = vunpack.c.l.b16 %v4269
      %v4309 = vunpack.c.l.b16 %v4272
      %v4310 = vunpack.c.l.b16 %v4276
      %v4311 = vunpack.c.l.b16 %v4279
      %v4312 = vpack.c.b16 %v4297, %v4296
      %v4313 = vpack.c.b16 %v4299, %v4298
      %v4314 = vpack.c.b16 %v4301, %v4300
      %v4315 = vpack.c.b16 %v4303, %v4302
      %v4316 = vpack.c.b16 %v4305, %v4304
      %v4317 = vpack.c.b16 %v4307, %v4306
      %v4318 = vpack.c.b16 %v4309, %v4308
      %v4319 = vpack.c.b16 %v4311, %v4310
      %v4344 = vunpack.c.l.b16 %v4280
      %v4345 = vunpack.c.l.b16 %v4281
      %v4346 = vunpack.c.l.b16 %v4282
      %v4347 = vunpack.c.l.b16 %v4283
      %v4348 = vunpack.c.l.b16 %v4284
      %v4349 = vunpack.c.l.b16 %v4285
      %v4350 = vunpack.c.l.b16 %v4286
      %v4351 = vunpack.c.l.b16 %v4287
      %v4352 = vunpack.c.l.b16 %v4288
      %v4353 = vunpack.c.l.b16 %v4289
      %v4354 = vunpack.c.l.b16 %v4290
      %v4355 = vunpack.c.l.b16 %v4291
      %v4356 = vunpack.c.l.b16 %v4292
      %v4357 = vunpack.c.l.b16 %v4293
      %v4358 = vunpack.c.l.b16 %v4294
      %v4359 = vunpack.c.l.b16 %v4295
      %v4360 = vpack.c.b16 %v4345, %v4344
      %v4361 = vpack.c.b16 %v4347, %v4346
      %v4362 = vpack.c.b16 %v4349, %v4348
      %v4363 = vpack.c.b16 %v4351, %v4350
      %v4364 = vpack.c.b16 %v4353, %v4352
      %v4365 = vpack.c.b16 %v4355, %v4354
      %v4366 = vpack.c.b16 %v4357, %v4356
      %v4367 = vpack.c.b16 %v4359, %v4358
      %4376 = vmatpush.bf16.msra.mxu0 %v4367
      %4377 = vmatpush.bf16.msra.mxu0 %v4366
      %4378 = vmatpush.bf16.msra.mxu0 %v4365
      %4379 = vmatpush.bf16.msra.mxu0 %v4364
      %4380 = vmatpush.bf16.msra.mxu0 %v4363
      %4381 = vmatpush.bf16.msra.mxu0 %v4362
      %4382 = vmatpush.bf16.msra.mxu0 %v4361
      %4383 = vmatpush.bf16.msra.mxu0 %v4360
      %4384 = vmatmul.bf16.gmra.mxu0 %v4312
      %v4385 = vpop.f32.mrf.mxu0
      %v4386 = vadd.f32 0.0, %v4385
      %v4387 = vpop.f32.mrf.mxu0
      %v4388 = vadd.f32 0.0, %v4387
      %4389 = vmatmul.bf16.gmra.mxu0 %v4313
      %v4390 = vpop.f32.mrf.mxu0
      %v4391 = vadd.f32 0.0, %v4390
      %v4392 = vpop.f32.mrf.mxu0
      %v4393 = vadd.f32 0.0, %v4392
      %4394 = vmatmul.bf16.gmra.mxu0 %v4314
      %v4395 = vpop.f32.mrf.mxu0
      %v4396 = vadd.f32 0.0, %v4395
      %v4397 = vpop.f32.mrf.mxu0
      %v4398 = vadd.f32 0.0, %v4397
      %4399 = vmatmul.bf16.gmra.mxu0 %v4315
      %v4400 = vpop.f32.mrf.mxu0
      %v4401 = vadd.f32 0.0, %v4400
      %v4402 = vpop.f32.mrf.mxu0
      %v4403 = vadd.f32 0.0, %v4402
      %4404 = vmatmul.bf16.gmra.mxu0 %v4316
      %v4405 = vpop.f32.mrf.mxu0
      %v4406 = vadd.f32 0.0, %v4405
      %v4407 = vpop.f32.mrf.mxu0
      %v4408 = vadd.f32 0.0, %v4407
      %4409 = vmatmul.bf16.gmra.mxu0 %v4317
      %v4410 = vpop.f32.mrf.mxu0
      %v4411 = vadd.f32 0.0, %v4410
      %v4412 = vpop.f32.mrf.mxu0
      %v4413 = vadd.f32 0.0, %v4412
      %4414 = vmatmul.bf16.gmra.mxu0 %v4318
      %v4415 = vpop.f32.mrf.mxu0
      %v4416 = vadd.f32 0.0, %v4415
      %v4417 = vpop.f32.mrf.mxu0
      %v4418 = vadd.f32 0.0, %v4417
      %4419 = vmatmul.bf16.gmra.mxu0 %v4319
      %v4420 = vpop.f32.mrf.mxu0
      %v4421 = vadd.f32 0.0, %v4420
      %v4422 = vpop.f32.mrf.mxu0
      %v4423 = vadd.f32 0.0, %v4422
      %4424 = vdwg.mxu0
      %v4425 = vadd.f32 %v4161, %v4386
      %v4426 = vadd.f32 %v4163, %v4388
      %v4427 = vadd.f32 %v4166, %v4391
      %v4428 = vadd.f32 %v4168, %v4393
      %v4429 = vadd.f32 %v4171, %v4396
      %v4430 = vadd.f32 %v4173, %v4398
      %v4431 = vadd.f32 %v4176, %v4401
      %v4432 = vadd.f32 %v4178, %v4403
      %v4433 = vadd.f32 %v4181, %v4406
      %v4434 = vadd.f32 %v4183, %v4408
      %v4435 = vadd.f32 %v4186, %v4411
      %v4436 = vadd.f32 %v4188, %v4413
      %v4437 = vadd.f32 %v4191, %v4416
      %v4438 = vadd.f32 %v4193, %v4418
      %v4439 = vadd.f32 %v4196, %v4421
      %v4440 = vadd.f32 %v4198, %v4423
      %s4441 = scalar_lea.vmem [#allocation2], 12
      %v4442 = vld [vmem:[%s4441] sm:$0xf]
      %v4443 = vld [vmem:[%s4441 + $0x4] sm:$0xf]
      %v4444 = vld [vmem:[%s4441 + $0xc] sm:$0xf]
      %v4445 = vld [vmem:[%s4441 + $0x10] sm:$0xf]
      %v4446 = vld [vmem:[%s4441 + $0x18] sm:$0xf]
      %v4447 = vld [vmem:[%s4441 + $0x1c] sm:$0xf]
      %v4448 = vld [vmem:[%s4441 + $0x24] sm:$0xf]
      %v4449 = vld [vmem:[%s4441 + $0x28] sm:$0xf]
      %v4450 = vld [vmem:[%s4441 + $0x30] sm:$0xf]
      %v4451 = vld [vmem:[%s4441 + $0x34] sm:$0xf]
      %v4452 = vld [vmem:[%s4441 + $0x3c] sm:$0xf]
      %v4453 = vld [vmem:[%s4441 + $0x40] sm:$0xf]
      %v4454 = vld [vmem:[%s4441 + $0x48] sm:$0xf]
      %v4455 = vld [vmem:[%s4441 + $0x4c] sm:$0xf]
      %v4456 = vld [vmem:[%s4441 + $0x54] sm:$0xf]
      %v4457 = vld [vmem:[%s4441 + $0x58] sm:$0xf]
      %v4458 = vld [vmem:[%s5 + $0xc0] sm:$0xf]
      %v4459 = vld [vmem:[%s5 + $0xc4] sm:$0xf]
      %v4460 = vld [vmem:[%s5 + $0xc8] sm:$0xf]
      %v4461 = vld [vmem:[%s5 + $0xcc] sm:$0xf]
      %v4462 = vld [vmem:[%s5 + $0xd0] sm:$0xf]
      %v4463 = vld [vmem:[%s5 + $0xd4] sm:$0xf]
      %v4464 = vld [vmem:[%s5 + $0xd8] sm:$0xf]
      %v4465 = vld [vmem:[%s5 + $0xdc] sm:$0xf]
      %v4466 = vld [vmem:[%s5 + $0xe0] sm:$0xf]
      %v4467 = vld [vmem:[%s5 + $0xe4] sm:$0xf]
      %v4468 = vld [vmem:[%s5 + $0xe8] sm:$0xf]
      %v4469 = vld [vmem:[%s5 + $0xec] sm:$0xf]
      %v4470 = vld [vmem:[%s5 + $0xf0] sm:$0xf]
      %v4471 = vld [vmem:[%s5 + $0xf4] sm:$0xf]
      %v4472 = vld [vmem:[%s5 + $0xf8] sm:$0xf]
      %v4473 = vld [vmem:[%s5 + $0xfc] sm:$0xf]
      %v4490 = vunpack.c.l.b16 %v4442
      %v4491 = vunpack.c.l.b16 %v4443
      %v4492 = vunpack.c.l.b16 %v4444
      %v4493 = vunpack.c.l.b16 %v4445
      %v4494 = vunpack.c.l.b16 %v4446
      %v4495 = vunpack.c.l.b16 %v4447
      %v4496 = vunpack.c.l.b16 %v4448
      %v4497 = vunpack.c.l.b16 %v4449
      %v4498 = vunpack.c.l.b16 %v4450
      %v4499 = vunpack.c.l.b16 %v4451
      %v4500 = vunpack.c.l.b16 %v4452
      %v4501 = vunpack.c.l.b16 %v4453
      %v4502 = vunpack.c.l.b16 %v4454
      %v4503 = vunpack.c.l.b16 %v4455
      %v4504 = vunpack.c.l.b16 %v4456
      %v4505 = vunpack.c.l.b16 %v4457
      %v4506 = vpack.c.b16 %v4491, %v4490
      %v4507 = vpack.c.b16 %v4493, %v4492
      %v4508 = vpack.c.b16 %v4495, %v4494
      %v4509 = vpack.c.b16 %v4497, %v4496
      %v4510 = vpack.c.b16 %v4499, %v4498
      %v4511 = vpack.c.b16 %v4501, %v4500
      %v4512 = vpack.c.b16 %v4503, %v4502
      %v4513 = vpack.c.b16 %v4505, %v4504
      %v4538 = vunpack.c.l.b16 %v4458
      %v4539 = vunpack.c.l.b16 %v4459
      %v4540 = vunpack.c.l.b16 %v4460
      %v4541 = vunpack.c.l.b16 %v4461
      %v4542 = vunpack.c.l.b16 %v4462
      %v4543 = vunpack.c.l.b16 %v4463
      %v4544 = vunpack.c.l.b16 %v4464
      %v4545 = vunpack.c.l.b16 %v4465
      %v4546 = vunpack.c.l.b16 %v4466
      %v4547 = vunpack.c.l.b16 %v4467
      %v4548 = vunpack.c.l.b16 %v4468
      %v4549 = vunpack.c.l.b16 %v4469
      %v4550 = vunpack.c.l.b16 %v4470
      %v4551 = vunpack.c.l.b16 %v4471
      %v4552 = vunpack.c.l.b16 %v4472
      %v4553 = vunpack.c.l.b16 %v4473
      %v4554 = vpack.c.b16 %v4539, %v4538
      %v4555 = vpack.c.b16 %v4541, %v4540
      %v4556 = vpack.c.b16 %v4543, %v4542
      %v4557 = vpack.c.b16 %v4545, %v4544
      %v4558 = vpack.c.b16 %v4547, %v4546
      %v4559 = vpack.c.b16 %v4549, %v4548
      %v4560 = vpack.c.b16 %v4551, %v4550
      %v4561 = vpack.c.b16 %v4553, %v4552
      %4570 = vmatpush.bf16.msra.mxu0 %v4561
      %4571 = vmatpush.bf16.msra.mxu0 %v4560
      %4572 = vmatpush.bf16.msra.mxu0 %v4559
      %4573 = vmatpush.bf16.msra.mxu0 %v4558
      %4574 = vmatpush.bf16.msra.mxu0 %v4557
      %4575 = vmatpush.bf16.msra.mxu0 %v4556
      %4576 = vmatpush.bf16.msra.mxu0 %v4555
      %4577 = vmatpush.bf16.msra.mxu0 %v4554
      %4578 = vmatmul.bf16.gmra.mxu0 %v4506
      %v4579 = vpop.f32.mrf.mxu0
      %v4580 = vadd.f32 0.0, %v4579
      %v4581 = vpop.f32.mrf.mxu0
      %v4582 = vadd.f32 0.0, %v4581
      %4583 = vmatmul.bf16.gmra.mxu0 %v4507
      %v4584 = vpop.f32.mrf.mxu0
      %v4585 = vadd.f32 0.0, %v4584
      %v4586 = vpop.f32.mrf.mxu0
      %v4587 = vadd.f32 0.0, %v4586
      %4588 = vmatmul.bf16.gmra.mxu0 %v4508
      %v4589 = vpop.f32.mrf.mxu0
      %v4590 = vadd.f32 0.0, %v4589
      %v4591 = vpop.f32.mrf.mxu0
      %v4592 = vadd.f32 0.0, %v4591
      %4593 = vmatmul.bf16.gmra.mxu0 %v4509
      %v4594 = vpop.f32.mrf.mxu0
      %v4595 = vadd.f32 0.0, %v4594
      %v4596 = vpop.f32.mrf.mxu0
      %v4597 = vadd.f32 0.0, %v4596
      %4598 = vmatmul.bf16.gmra.mxu0 %v4510
      %v4599 = vpop.f32.mrf.mxu0
      %v4600 = vadd.f32 0.0, %v4599
      %v4601 = vpop.f32.mrf.mxu0
      %v4602 = vadd.f32 0.0, %v4601
      %4603 = vmatmul.bf16.gmra.mxu0 %v4511
      %v4604 = vpop.f32.mrf.mxu0
      %v4605 = vadd.f32 0.0, %v4604
      %v4606 = vpop.f32.mrf.mxu0
      %v4607 = vadd.f32 0.0, %v4606
      %4608 = vmatmul.bf16.gmra.mxu0 %v4512
      %v4609 = vpop.f32.mrf.mxu0
      %v4610 = vadd.f32 0.0, %v4609
      %v4611 = vpop.f32.mrf.mxu0
      %v4612 = vadd.f32 0.0, %v4611
      %4613 = vmatmul.bf16.gmra.mxu0 %v4513
      %v4614 = vpop.f32.mrf.mxu0
      %v4615 = vadd.f32 0.0, %v4614
      %v4616 = vpop.f32.mrf.mxu0
      %v4617 = vadd.f32 0.0, %v4616
      %4618 = vdwg.mxu0
      %v4619 = vadd.f32 %v4425, %v4580
      %v4620 = vadd.f32 %v4426, %v4582
      %v4621 = vadd.f32 %v4427, %v4585
      %v4622 = vadd.f32 %v4428, %v4587
      %v4623 = vadd.f32 %v4429, %v4590
      %v4624 = vadd.f32 %v4430, %v4592
      %v4625 = vadd.f32 %v4431, %v4595
      %v4626 = vadd.f32 %v4432, %v4597
      %v4627 = vadd.f32 %v4433, %v4600
      %v4628 = vadd.f32 %v4434, %v4602
      %v4629 = vadd.f32 %v4435, %v4605
      %v4630 = vadd.f32 %v4436, %v4607
      %v4631 = vadd.f32 %v4437, %v4610
      %v4632 = vadd.f32 %v4438, %v4612
      %v4633 = vadd.f32 %v4439, %v4615
      %v4634 = vadd.f32 %v4440, %v4617
      %v4635 = vld [vmem:[%s4441] sm:$0xf]
      %v4636 = vld [vmem:[%s4441 + $0x4] sm:$0xf]
      %v4637 = vld [vmem:[%s4441 + $0x8] sm:$0x1]
      %v4638 = vld [vmem:[%s4441 + $0xc] sm:$0xf]
      %v4639 = vld [vmem:[%s4441 + $0x10] sm:$0xf]
      %v4640 = vld [vmem:[%s4441 + $0x14] sm:$0x1]
      %v4641 = vld [vmem:[%s4441 + $0x18] sm:$0xf]
      %v4642 = vld [vmem:[%s4441 + $0x1c] sm:$0xf]
      %v4643 = vld [vmem:[%s4441 + $0x20] sm:$0x1]
      %v4644 = vld [vmem:[%s4441 + $0x24] sm:$0xf]
      %v4645 = vld [vmem:[%s4441 + $0x28] sm:$0xf]
      %v4646 = vld [vmem:[%s4441 + $0x2c] sm:$0x1]
      %v4647 = vld [vmem:[%s4441 + $0x30] sm:$0xf]
      %v4648 = vld [vmem:[%s4441 + $0x34] sm:$0xf]
      %v4649 = vld [vmem:[%s4441 + $0x38] sm:$0x1]
      %v4650 = vld [vmem:[%s4441 + $0x3c] sm:$0xf]
      %v4651 = vld [vmem:[%s4441 + $0x40] sm:$0xf]
      %v4652 = vld [vmem:[%s4441 + $0x44] sm:$0x1]
      %v4653 = vld [vmem:[%s4441 + $0x48] sm:$0xf]
      %v4654 = vld [vmem:[%s4441 + $0x4c] sm:$0xf]
      %v4655 = vld [vmem:[%s4441 + $0x50] sm:$0x1]
      %v4656 = vld [vmem:[%s4441 + $0x54] sm:$0xf]
      %v4657 = vld [vmem:[%s4441 + $0x58] sm:$0xf]
      %v4658 = vld [vmem:[%s4441 + $0x5c] sm:$0x1]
      %v4660 = vshrl.u32 %v4635, 16
      %v4662 = vrot.slane %v4660, 4
      %v4663 = vshll.u32 %v4635, 16
      %v4665 = vrot.slane %v4663, 5
      %v4666 = vor.u32 %v4662, %v4665
      %v4667 = vrot.slane %v4666, 4
      %v4669 = vshll.u32 %v4636, 16
      %v4671 = vrot.slane %v4669, 5
      %v4672 = vsel %vm427, %v4667, %v4671
      %v4673 = vshrl.u32 %v4636, 16
      %v4675 = vrot.slane %v4673, 4
      %v4676 = vor.u32 %v4675, %v4671
      %v4677 = vrot.slane %v4676, 4
      %v4679 = vshll.u32 %v4637, 16
      %v4681 = vrot.slane %v4679, 5
      %v4682 = vsel %vm427, %v4677, %v4681
      %v4684 = vshrl.u32 %v4638, 16
      %v4686 = vrot.slane %v4684, 4
      %v4687 = vshll.u32 %v4638, 16
      %v4689 = vrot.slane %v4687, 5
      %v4690 = vor.u32 %v4686, %v4689
      %v4691 = vrot.slane %v4690, 4
      %v4693 = vshll.u32 %v4639, 16
      %v4695 = vrot.slane %v4693, 5
      %v4696 = vsel %vm427, %v4691, %v4695
      %v4697 = vshrl.u32 %v4639, 16
      %v4699 = vrot.slane %v4697, 4
      %v4700 = vor.u32 %v4699, %v4695
      %v4701 = vrot.slane %v4700, 4
      %v4703 = vshll.u32 %v4640, 16
      %v4705 = vrot.slane %v4703, 5
      %v4706 = vsel %vm427, %v4701, %v4705
      %v4708 = vshrl.u32 %v4641, 16
      %v4710 = vrot.slane %v4708, 4
      %v4711 = vshll.u32 %v4641, 16
      %v4713 = vrot.slane %v4711, 5
      %v4714 = vor.u32 %v4710, %v4713
      %v4715 = vrot.slane %v4714, 4
      %v4717 = vshll.u32 %v4642, 16
      %v4719 = vrot.slane %v4717, 5
      %v4720 = vsel %vm427, %v4715, %v4719
      %v4721 = vshrl.u32 %v4642, 16
      %v4723 = vrot.slane %v4721, 4
      %v4724 = vor.u32 %v4723, %v4719
      %v4725 = vrot.slane %v4724, 4
      %v4727 = vshll.u32 %v4643, 16
      %v4729 = vrot.slane %v4727, 5
      %v4730 = vsel %vm427, %v4725, %v4729
      %v4732 = vshrl.u32 %v4644, 16
      %v4734 = vrot.slane %v4732, 4
      %v4735 = vshll.u32 %v4644, 16
      %v4737 = vrot.slane %v4735, 5
      %v4738 = vor.u32 %v4734, %v4737
      %v4739 = vrot.slane %v4738, 4
      %v4741 = vshll.u32 %v4645, 16
      %v4743 = vrot.slane %v4741, 5
      %v4744 = vsel %vm427, %v4739, %v4743
      %v4745 = vshrl.u32 %v4645, 16
      %v4747 = vrot.slane %v4745, 4
      %v4748 = vor.u32 %v4747, %v4743
      %v4749 = vrot.slane %v4748, 4
      %v4751 = vshll.u32 %v4646, 16
      %v4753 = vrot.slane %v4751, 5
      %v4754 = vsel %vm427, %v4749, %v4753
      %v4756 = vshrl.u32 %v4647, 16
      %v4758 = vrot.slane %v4756, 4
      %v4759 = vshll.u32 %v4647, 16
      %v4761 = vrot.slane %v4759, 5
      %v4762 = vor.u32 %v4758, %v4761
      %v4763 = vrot.slane %v4762, 4
      %v4765 = vshll.u32 %v4648, 16
      %v4767 = vrot.slane %v4765, 5
      %v4768 = vsel %vm427, %v4763, %v4767
      %v4769 = vshrl.u32 %v4648, 16
      %v4771 = vrot.slane %v4769, 4
      %v4772 = vor.u32 %v4771, %v4767
      %v4773 = vrot.slane %v4772, 4
      %v4775 = vshll.u32 %v4649, 16
      %v4777 = vrot.slane %v4775, 5
      %v4778 = vsel %vm427, %v4773, %v4777
      %v4780 = vshrl.u32 %v4650, 16
      %v4782 = vrot.slane %v4780, 4
      %v4783 = vshll.u32 %v4650, 16
      %v4785 = vrot.slane %v4783, 5
      %v4786 = vor.u32 %v4782, %v4785
      %v4787 = vrot.slane %v4786, 4
      %v4789 = vshll.u32 %v4651, 16
      %v4791 = vrot.slane %v4789, 5
      %v4792 = vsel %vm427, %v4787, %v4791
      %v4793 = vshrl.u32 %v4651, 16
      %v4795 = vrot.slane %v4793, 4
      %v4796 = vor.u32 %v4795, %v4791
      %v4797 = vrot.slane %v4796, 4
      %v4799 = vshll.u32 %v4652, 16
      %v4801 = vrot.slane %v4799, 5
      %v4802 = vsel %vm427, %v4797, %v4801
      %v4804 = vshrl.u32 %v4653, 16
      %v4806 = vrot.slane %v4804, 4
      %v4807 = vshll.u32 %v4653, 16
      %v4809 = vrot.slane %v4807, 5
      %v4810 = vor.u32 %v4806, %v4809
      %v4811 = vrot.slane %v4810, 4
      %v4813 = vshll.u32 %v4654, 16
      %v4815 = vrot.slane %v4813, 5
      %v4816 = vsel %vm427, %v4811, %v4815
      %v4817 = vshrl.u32 %v4654, 16
      %v4819 = vrot.slane %v4817, 4
      %v4820 = vor.u32 %v4819, %v4815
      %v4821 = vrot.slane %v4820, 4
      %v4823 = vshll.u32 %v4655, 16
      %v4825 = vrot.slane %v4823, 5
      %v4826 = vsel %vm427, %v4821, %v4825
      %v4828 = vshrl.u32 %v4656, 16
      %v4830 = vrot.slane %v4828, 4
      %v4831 = vshll.u32 %v4656, 16
      %v4833 = vrot.slane %v4831, 5
      %v4834 = vor.u32 %v4830, %v4833
      %v4835 = vrot.slane %v4834, 4
      %v4837 = vshll.u32 %v4657, 16
      %v4839 = vrot.slane %v4837, 5
      %v4840 = vsel %vm427, %v4835, %v4839
      %v4841 = vshrl.u32 %v4657, 16
      %v4843 = vrot.slane %v4841, 4
      %v4844 = vor.u32 %v4843, %v4839
      %v4845 = vrot.slane %v4844, 4
      %v4847 = vshll.u32 %v4658, 16
      %v4849 = vrot.slane %v4847, 5
      %v4850 = vsel %vm427, %v4845, %v4849
      %v4851 = vld [vmem:[%s5 + $0x100] sm:$0xf]
      %v4852 = vld [vmem:[%s5 + $0x104] sm:$0xf]
      %v4853 = vld [vmem:[%s5 + $0x108] sm:$0xf]
      %v4854 = vld [vmem:[%s5 + $0x10c] sm:$0xf]
      %v4855 = vld [vmem:[%s5 + $0x110] sm:$0xf]
      %v4856 = vld [vmem:[%s5 + $0x114] sm:$0xf]
      %v4857 = vld [vmem:[%s5 + $0x118] sm:$0xf]
      %v4858 = vld [vmem:[%s5 + $0x11c] sm:$0xf]
      %v4859 = vld [vmem:[%s5 + $0x120] sm:$0xf]
      %v4860 = vld [vmem:[%s5 + $0x124] sm:$0xf]
      %v4861 = vld [vmem:[%s5 + $0x128] sm:$0xf]
      %v4862 = vld [vmem:[%s5 + $0x12c] sm:$0xf]
      %v4863 = vld [vmem:[%s5 + $0x130] sm:$0xf]
      %v4864 = vld [vmem:[%s5 + $0x134] sm:$0xf]
      %v4865 = vld [vmem:[%s5 + $0x138] sm:$0xf]
      %v4866 = vld [vmem:[%s5 + $0x13c] sm:$0xf]
      %v4867 = vunpack.c.l.b16 %v4672
      %v4868 = vunpack.c.l.b16 %v4682
      %v4869 = vunpack.c.l.b16 %v4696
      %v4870 = vunpack.c.l.b16 %v4706
      %v4871 = vunpack.c.l.b16 %v4720
      %v4872 = vunpack.c.l.b16 %v4730
      %v4873 = vunpack.c.l.b16 %v4744
      %v4874 = vunpack.c.l.b16 %v4754
      %v4875 = vunpack.c.l.b16 %v4768
      %v4876 = vunpack.c.l.b16 %v4778
      %v4877 = vunpack.c.l.b16 %v4792
      %v4878 = vunpack.c.l.b16 %v4802
      %v4879 = vunpack.c.l.b16 %v4816
      %v4880 = vunpack.c.l.b16 %v4826
      %v4881 = vunpack.c.l.b16 %v4840
      %v4882 = vunpack.c.l.b16 %v4850
      %v4883 = vpack.c.b16 %v4868, %v4867
      %v4884 = vpack.c.b16 %v4870, %v4869
      %v4885 = vpack.c.b16 %v4872, %v4871
      %v4886 = vpack.c.b16 %v4874, %v4873
      %v4887 = vpack.c.b16 %v4876, %v4875
      %v4888 = vpack.c.b16 %v4878, %v4877
      %v4889 = vpack.c.b16 %v4880, %v4879
      %v4890 = vpack.c.b16 %v4882, %v4881
      %v4915 = vunpack.c.l.b16 %v4851
      %v4916 = vunpack.c.l.b16 %v4852
      %v4917 = vunpack.c.l.b16 %v4853
      %v4918 = vunpack.c.l.b16 %v4854
      %v4919 = vunpack.c.l.b16 %v4855
      %v4920 = vunpack.c.l.b16 %v4856
      %v4921 = vunpack.c.l.b16 %v4857
      %v4922 = vunpack.c.l.b16 %v4858
      %v4923 = vunpack.c.l.b16 %v4859
      %v4924 = vunpack.c.l.b16 %v4860
      %v4925 = vunpack.c.l.b16 %v4861
      %v4926 = vunpack.c.l.b16 %v4862
      %v4927 = vunpack.c.l.b16 %v4863
      %v4928 = vunpack.c.l.b16 %v4864
      %v4929 = vunpack.c.l.b16 %v4865
      %v4930 = vunpack.c.l.b16 %v4866
      %v4931 = vpack.c.b16 %v4916, %v4915
      %v4932 = vpack.c.b16 %v4918, %v4917
      %v4933 = vpack.c.b16 %v4920, %v4919
      %v4934 = vpack.c.b16 %v4922, %v4921
      %v4935 = vpack.c.b16 %v4924, %v4923
      %v4936 = vpack.c.b16 %v4926, %v4925
      %v4937 = vpack.c.b16 %v4928, %v4927
      %v4938 = vpack.c.b16 %v4930, %v4929
      %4947 = vmatpush.bf16.msra.mxu0 %v4938
      %4948 = vmatpush.bf16.msra.mxu0 %v4937
      %4949 = vmatpush.bf16.msra.mxu0 %v4936
      %4950 = vmatpush.bf16.msra.mxu0 %v4935
      %4951 = vmatpush.bf16.msra.mxu0 %v4934
      %4952 = vmatpush.bf16.msra.mxu0 %v4933
      %4953 = vmatpush.bf16.msra.mxu0 %v4932
      %4954 = vmatpush.bf16.msra.mxu0 %v4931
      %4955 = vmatmul.bf16.gmra.mxu0 %v4883
      %v4956 = vpop.f32.mrf.mxu0
      %v4957 = vadd.f32 0.0, %v4956
      %v4958 = vpop.f32.mrf.mxu0
      %v4959 = vadd.f32 0.0, %v4958
      %4960 = vmatmul.bf16.gmra.mxu0 %v4884
      %v4961 = vpop.f32.mrf.mxu0
      %v4962 = vadd.f32 0.0, %v4961
      %v4963 = vpop.f32.mrf.mxu0
      %v4964 = vadd.f32 0.0, %v4963
      %4965 = vmatmul.bf16.gmra.mxu0 %v4885
      %v4966 = vpop.f32.mrf.mxu0
      %v4967 = vadd.f32 0.0, %v4966
      %v4968 = vpop.f32.mrf.mxu0
      %v4969 = vadd.f32 0.0, %v4968
      %4970 = vmatmul.bf16.gmra.mxu0 %v4886
      %v4971 = vpop.f32.mrf.mxu0
      %v4972 = vadd.f32 0.0, %v4971
      %v4973 = vpop.f32.mrf.mxu0
      %v4974 = vadd.f32 0.0, %v4973
      %4975 = vmatmul.bf16.gmra.mxu0 %v4887
      %v4976 = vpop.f32.mrf.mxu0
      %v4977 = vadd.f32 0.0, %v4976
      %v4978 = vpop.f32.mrf.mxu0
      %v4979 = vadd.f32 0.0, %v4978
      %4980 = vmatmul.bf16.gmra.mxu0 %v4888
      %v4981 = vpop.f32.mrf.mxu0
      %v4982 = vadd.f32 0.0, %v4981
      %v4983 = vpop.f32.mrf.mxu0
      %v4984 = vadd.f32 0.0, %v4983
      %4985 = vmatmul.bf16.gmra.mxu0 %v4889
      %v4986 = vpop.f32.mrf.mxu0
      %v4987 = vadd.f32 0.0, %v4986
      %v4988 = vpop.f32.mrf.mxu0
      %v4989 = vadd.f32 0.0, %v4988
      %4990 = vmatmul.bf16.gmra.mxu0 %v4890
      %v4991 = vpop.f32.mrf.mxu0
      %v4992 = vadd.f32 0.0, %v4991
      %v4993 = vpop.f32.mrf.mxu0
      %v4994 = vadd.f32 0.0, %v4993
      %4995 = vdwg.mxu0
      %v4996 = vadd.f32 %v4619, %v4957
      %v4997 = vadd.f32 %v4620, %v4959
      %v4998 = vadd.f32 %v4621, %v4962
      %v4999 = vadd.f32 %v4622, %v4964
      %v5000 = vadd.f32 %v4623, %v4967
      %v5001 = vadd.f32 %v4624, %v4969
      %v5002 = vadd.f32 %v4625, %v4972
      %v5003 = vadd.f32 %v4626, %v4974
      %v5004 = vadd.f32 %v4627, %v4977
      %v5005 = vadd.f32 %v4628, %v4979
      %v5006 = vadd.f32 %v4629, %v4982
      %v5007 = vadd.f32 %v4630, %v4984
      %v5008 = vadd.f32 %v4631, %v4987
      %v5009 = vadd.f32 %v4632, %v4989
      %v5010 = vadd.f32 %v4633, %v4992
      %v5011 = vadd.f32 %v4634, %v4994
      %v5012 = vld [vmem:[%s4441] sm:$0xe]
      %v5013 = vld [vmem:[%s4441 + $0xc] sm:$0xe]
      %v5014 = vld [vmem:[%s4441 + $0x18] sm:$0xe]
      %v5015 = vld [vmem:[%s4441 + $0x24] sm:$0xe]
      %v5016 = vld [vmem:[%s4441 + $0x30] sm:$0xe]
      %v5017 = vld [vmem:[%s4441 + $0x3c] sm:$0xe]
      %v5018 = vld [vmem:[%s4441 + $0x48] sm:$0xe]
      %v5019 = vld [vmem:[%s4441 + $0x54] sm:$0xe]
      %v5044 = vrot.slane %v5012, 5
      %v5045 = vrot.slane %v5044, 4
      %v5046 = vrot.slane %v4636, 5
      %v5047 = vsel %vm1030, %v5045, %v5046
      %v5048 = vrot.slane %v5046, 4
      %v5049 = vrot.slane %v4637, 5
      %v5050 = vsel %vm1030, %v5048, %v5049
      %v5051 = vrot.slane %v5013, 5
      %v5052 = vrot.slane %v5051, 4
      %v5053 = vrot.slane %v4639, 5
      %v5054 = vsel %vm1030, %v5052, %v5053
      %v5055 = vrot.slane %v5053, 4
      %v5056 = vrot.slane %v4640, 5
      %v5057 = vsel %vm1030, %v5055, %v5056
      %v5058 = vrot.slane %v5014, 5
      %v5059 = vrot.slane %v5058, 4
      %v5060 = vrot.slane %v4642, 5
      %v5061 = vsel %vm1030, %v5059, %v5060
      %v5062 = vrot.slane %v5060, 4
      %v5063 = vrot.slane %v4643, 5
      %v5064 = vsel %vm1030, %v5062, %v5063
      %v5065 = vrot.slane %v5015, 5
      %v5066 = vrot.slane %v5065, 4
      %v5067 = vrot.slane %v4645, 5
      %v5068 = vsel %vm1030, %v5066, %v5067
      %v5069 = vrot.slane %v5067, 4
      %v5070 = vrot.slane %v4646, 5
      %v5071 = vsel %vm1030, %v5069, %v5070
      %v5072 = vrot.slane %v5016, 5
      %v5073 = vrot.slane %v5072, 4
      %v5074 = vrot.slane %v4648, 5
      %v5075 = vsel %vm1030, %v5073, %v5074
      %v5076 = vrot.slane %v5074, 4
      %v5077 = vrot.slane %v4649, 5
      %v5078 = vsel %vm1030, %v5076, %v5077
      %v5079 = vrot.slane %v5017, 5
      %v5080 = vrot.slane %v5079, 4
      %v5081 = vrot.slane %v4651, 5
      %v5082 = vsel %vm1030, %v5080, %v5081
      %v5083 = vrot.slane %v5081, 4
      %v5084 = vrot.slane %v4652, 5
      %v5085 = vsel %vm1030, %v5083, %v5084
      %v5086 = vrot.slane %v5018, 5
      %v5087 = vrot.slane %v5086, 4
      %v5088 = vrot.slane %v4654, 5
      %v5089 = vsel %vm1030, %v5087, %v5088
      %v5090 = vrot.slane %v5088, 4
      %v5091 = vrot.slane %v4655, 5
      %v5092 = vsel %vm1030, %v5090, %v5091
      %v5093 = vrot.slane %v5019, 5
      %v5094 = vrot.slane %v5093, 4
      %v5095 = vrot.slane %v4657, 5
      %v5096 = vsel %vm1030, %v5094, %v5095
      %v5097 = vrot.slane %v5095, 4
      %v5098 = vrot.slane %v4658, 5
      %v5099 = vsel %vm1030, %v5097, %v5098
      %v5100 = vld [vmem:[%s5 + $0x140] sm:$0xf]
      %v5101 = vld [vmem:[%s5 + $0x144] sm:$0xf]
      %v5102 = vld [vmem:[%s5 + $0x148] sm:$0xf]
      %v5103 = vld [vmem:[%s5 + $0x14c] sm:$0xf]
      %v5104 = vld [vmem:[%s5 + $0x150] sm:$0xf]
      %v5105 = vld [vmem:[%s5 + $0x154] sm:$0xf]
      %v5106 = vld [vmem:[%s5 + $0x158] sm:$0xf]
      %v5107 = vld [vmem:[%s5 + $0x15c] sm:$0xf]
      %v5108 = vld [vmem:[%s5 + $0x160] sm:$0xf]
      %v5109 = vld [vmem:[%s5 + $0x164] sm:$0xf]
      %v5110 = vld [vmem:[%s5 + $0x168] sm:$0xf]
      %v5111 = vld [vmem:[%s5 + $0x16c] sm:$0xf]
      %v5112 = vld [vmem:[%s5 + $0x170] sm:$0xf]
      %v5113 = vld [vmem:[%s5 + $0x174] sm:$0xf]
      %v5114 = vld [vmem:[%s5 + $0x178] sm:$0xf]
      %v5115 = vld [vmem:[%s5 + $0x17c] sm:$0xf]
      %v5116 = vunpack.c.l.b16 %v5047
      %v5117 = vunpack.c.l.b16 %v5050
      %v5118 = vunpack.c.l.b16 %v5054
      %v5119 = vunpack.c.l.b16 %v5057
      %v5120 = vunpack.c.l.b16 %v5061
      %v5121 = vunpack.c.l.b16 %v5064
      %v5122 = vunpack.c.l.b16 %v5068
      %v5123 = vunpack.c.l.b16 %v5071
      %v5124 = vunpack.c.l.b16 %v5075
      %v5125 = vunpack.c.l.b16 %v5078
      %v5126 = vunpack.c.l.b16 %v5082
      %v5127 = vunpack.c.l.b16 %v5085
      %v5128 = vunpack.c.l.b16 %v5089
      %v5129 = vunpack.c.l.b16 %v5092
      %v5130 = vunpack.c.l.b16 %v5096
      %v5131 = vunpack.c.l.b16 %v5099
      %v5132 = vpack.c.b16 %v5117, %v5116
      %v5133 = vpack.c.b16 %v5119, %v5118
      %v5134 = vpack.c.b16 %v5121, %v5120
      %v5135 = vpack.c.b16 %v5123, %v5122
      %v5136 = vpack.c.b16 %v5125, %v5124
      %v5137 = vpack.c.b16 %v5127, %v5126
      %v5138 = vpack.c.b16 %v5129, %v5128
      %v5139 = vpack.c.b16 %v5131, %v5130
      %v5164 = vunpack.c.l.b16 %v5100
      %v5165 = vunpack.c.l.b16 %v5101
      %v5166 = vunpack.c.l.b16 %v5102
      %v5167 = vunpack.c.l.b16 %v5103
      %v5168 = vunpack.c.l.b16 %v5104
      %v5169 = vunpack.c.l.b16 %v5105
      %v5170 = vunpack.c.l.b16 %v5106
      %v5171 = vunpack.c.l.b16 %v5107
      %v5172 = vunpack.c.l.b16 %v5108
      %v5173 = vunpack.c.l.b16 %v5109
      %v5174 = vunpack.c.l.b16 %v5110
      %v5175 = vunpack.c.l.b16 %v5111
      %v5176 = vunpack.c.l.b16 %v5112
      %v5177 = vunpack.c.l.b16 %v5113
      %v5178 = vunpack.c.l.b16 %v5114
      %v5179 = vunpack.c.l.b16 %v5115
      %v5180 = vpack.c.b16 %v5165, %v5164
      %v5181 = vpack.c.b16 %v5167, %v5166
      %v5182 = vpack.c.b16 %v5169, %v5168
      %v5183 = vpack.c.b16 %v5171, %v5170
      %v5184 = vpack.c.b16 %v5173, %v5172
      %v5185 = vpack.c.b16 %v5175, %v5174
      %v5186 = vpack.c.b16 %v5177, %v5176
      %v5187 = vpack.c.b16 %v5179, %v5178
      %5196 = vmatpush.bf16.msra.mxu0 %v5187
      %5197 = vmatpush.bf16.msra.mxu0 %v5186
      %5198 = vmatpush.bf16.msra.mxu0 %v5185
      %5199 = vmatpush.bf16.msra.mxu0 %v5184
      %5200 = vmatpush.bf16.msra.mxu0 %v5183
      %5201 = vmatpush.bf16.msra.mxu0 %v5182
      %5202 = vmatpush.bf16.msra.mxu0 %v5181
      %5203 = vmatpush.bf16.msra.mxu0 %v5180
      %5204 = vmatmul.bf16.gmra.mxu0 %v5132
      %v5205 = vpop.f32.mrf.mxu0
      %v5206 = vadd.f32 0.0, %v5205
      %v5207 = vpop.f32.mrf.mxu0
      %v5208 = vadd.f32 0.0, %v5207
      %5209 = vmatmul.bf16.gmra.mxu0 %v5133
      %v5210 = vpop.f32.mrf.mxu0
      %v5211 = vadd.f32 0.0, %v5210
      %v5212 = vpop.f32.mrf.mxu0
      %v5213 = vadd.f32 0.0, %v5212
      %5214 = vmatmul.bf16.gmra.mxu0 %v5134
      %v5215 = vpop.f32.mrf.mxu0
      %v5216 = vadd.f32 0.0, %v5215
      %v5217 = vpop.f32.mrf.mxu0
      %v5218 = vadd.f32 0.0, %v5217
      %5219 = vmatmul.bf16.gmra.mxu0 %v5135
      %v5220 = vpop.f32.mrf.mxu0
      %v5221 = vadd.f32 0.0, %v5220
      %v5222 = vpop.f32.mrf.mxu0
      %v5223 = vadd.f32 0.0, %v5222
      %5224 = vmatmul.bf16.gmra.mxu0 %v5136
      %v5225 = vpop.f32.mrf.mxu0
      %v5226 = vadd.f32 0.0, %v5225
      %v5227 = vpop.f32.mrf.mxu0
      %v5228 = vadd.f32 0.0, %v5227
      %5229 = vmatmul.bf16.gmra.mxu0 %v5137
      %v5230 = vpop.f32.mrf.mxu0
      %v5231 = vadd.f32 0.0, %v5230
      %v5232 = vpop.f32.mrf.mxu0
      %v5233 = vadd.f32 0.0, %v5232
      %5234 = vmatmul.bf16.gmra.mxu0 %v5138
      %v5235 = vpop.f32.mrf.mxu0
      %v5236 = vadd.f32 0.0, %v5235
      %v5237 = vpop.f32.mrf.mxu0
      %v5238 = vadd.f32 0.0, %v5237
      %5239 = vmatmul.bf16.gmra.mxu0 %v5139
      %v5240 = vpop.f32.mrf.mxu0
      %v5241 = vadd.f32 0.0, %v5240
      %v5242 = vpop.f32.mrf.mxu0
      %v5243 = vadd.f32 0.0, %v5242
      %5244 = vdwg.mxu0
      %v5245 = vadd.f32 %v4996, %v5206
      %v5246 = vadd.f32 %v4997, %v5208
      %v5247 = vadd.f32 %v4998, %v5211
      %v5248 = vadd.f32 %v4999, %v5213
      %v5249 = vadd.f32 %v5000, %v5216
      %v5250 = vadd.f32 %v5001, %v5218
      %v5251 = vadd.f32 %v5002, %v5221
      %v5252 = vadd.f32 %v5003, %v5223
      %v5253 = vadd.f32 %v5004, %v5226
      %v5254 = vadd.f32 %v5005, %v5228
      %v5255 = vadd.f32 %v5006, %v5231
      %v5256 = vadd.f32 %v5007, %v5233
      %v5257 = vadd.f32 %v5008, %v5236
      %v5258 = vadd.f32 %v5009, %v5238
      %v5259 = vadd.f32 %v5010, %v5241
      %v5260 = vadd.f32 %v5011, %v5243
      %s5261 = scalar_lea.vmem [#allocation2], 24
      %v5262 = vld [vmem:[%s5261] sm:$0xf]
      %v5263 = vld [vmem:[%s5261 + $0x4] sm:$0xf]
      %v5264 = vld [vmem:[%s5261 + $0xc] sm:$0xf]
      %v5265 = vld [vmem:[%s5261 + $0x10] sm:$0xf]
      %v5266 = vld [vmem:[%s5261 + $0x18] sm:$0xf]
      %v5267 = vld [vmem:[%s5261 + $0x1c] sm:$0xf]
      %v5268 = vld [vmem:[%s5261 + $0x24] sm:$0xf]
      %v5269 = vld [vmem:[%s5261 + $0x28] sm:$0xf]
      %v5270 = vld [vmem:[%s5261 + $0x30] sm:$0xf]
      %v5271 = vld [vmem:[%s5261 + $0x34] sm:$0xf]
      %v5272 = vld [vmem:[%s5261 + $0x3c] sm:$0xf]
      %v5273 = vld [vmem:[%s5261 + $0x40] sm:$0xf]
      %v5274 = vld [vmem:[%s5261 + $0x48] sm:$0xf]
      %v5275 = vld [vmem:[%s5261 + $0x4c] sm:$0xf]
      %v5276 = vld [vmem:[%s5261 + $0x54] sm:$0xf]
      %v5277 = vld [vmem:[%s5261 + $0x58] sm:$0xf]
      %v5278 = vld [vmem:[%s5 + $0x180] sm:$0xf]
      %v5279 = vld [vmem:[%s5 + $0x184] sm:$0xf]
      %v5280 = vld [vmem:[%s5 + $0x188] sm:$0xf]
      %v5281 = vld [vmem:[%s5 + $0x18c] sm:$0xf]
      %v5282 = vld [vmem:[%s5 + $0x190] sm:$0xf]
      %v5283 = vld [vmem:[%s5 + $0x194] sm:$0xf]
      %v5284 = vld [vmem:[%s5 + $0x198] sm:$0xf]
      %v5285 = vld [vmem:[%s5 + $0x19c] sm:$0xf]
      %v5286 = vld [vmem:[%s5 + $0x1a0] sm:$0xf]
      %v5287 = vld [vmem:[%s5 + $0x1a4] sm:$0xf]
      %v5288 = vld [vmem:[%s5 + $0x1a8] sm:$0xf]
      %v5289 = vld [vmem:[%s5 + $0x1ac] sm:$0xf]
      %v5290 = vld [vmem:[%s5 + $0x1b0] sm:$0xf]
      %v5291 = vld [vmem:[%s5 + $0x1b4] sm:$0xf]
      %v5292 = vld [vmem:[%s5 + $0x1b8] sm:$0xf]
      %v5293 = vld [vmem:[%s5 + $0x1bc] sm:$0xf]
      %v5310 = vunpack.c.l.b16 %v5262
      %v5311 = vunpack.c.l.b16 %v5263
      %v5312 = vunpack.c.l.b16 %v5264
      %v5313 = vunpack.c.l.b16 %v5265
      %v5314 = vunpack.c.l.b16 %v5266
      %v5315 = vunpack.c.l.b16 %v5267
      %v5316 = vunpack.c.l.b16 %v5268
      %v5317 = vunpack.c.l.b16 %v5269
      %v5318 = vunpack.c.l.b16 %v5270
      %v5319 = vunpack.c.l.b16 %v5271
      %v5320 = vunpack.c.l.b16 %v5272
      %v5321 = vunpack.c.l.b16 %v5273
      %v5322 = vunpack.c.l.b16 %v5274
      %v5323 = vunpack.c.l.b16 %v5275
      %v5324 = vunpack.c.l.b16 %v5276
      %v5325 = vunpack.c.l.b16 %v5277
      %v5326 = vpack.c.b16 %v5311, %v5310
      %v5327 = vpack.c.b16 %v5313, %v5312
      %v5328 = vpack.c.b16 %v5315, %v5314
      %v5329 = vpack.c.b16 %v5317, %v5316
      %v5330 = vpack.c.b16 %v5319, %v5318
      %v5331 = vpack.c.b16 %v5321, %v5320
      %v5332 = vpack.c.b16 %v5323, %v5322
      %v5333 = vpack.c.b16 %v5325, %v5324
      %v5358 = vunpack.c.l.b16 %v5278
      %v5359 = vunpack.c.l.b16 %v5279
      %v5360 = vunpack.c.l.b16 %v5280
      %v5361 = vunpack.c.l.b16 %v5281
      %v5362 = vunpack.c.l.b16 %v5282
      %v5363 = vunpack.c.l.b16 %v5283
      %v5364 = vunpack.c.l.b16 %v5284
      %v5365 = vunpack.c.l.b16 %v5285
      %v5366 = vunpack.c.l.b16 %v5286
      %v5367 = vunpack.c.l.b16 %v5287
      %v5368 = vunpack.c.l.b16 %v5288
      %v5369 = vunpack.c.l.b16 %v5289
      %v5370 = vunpack.c.l.b16 %v5290
      %v5371 = vunpack.c.l.b16 %v5291
      %v5372 = vunpack.c.l.b16 %v5292
      %v5373 = vunpack.c.l.b16 %v5293
      %v5374 = vpack.c.b16 %v5359, %v5358
      %v5375 = vpack.c.b16 %v5361, %v5360
      %v5376 = vpack.c.b16 %v5363, %v5362
      %v5377 = vpack.c.b16 %v5365, %v5364
      %v5378 = vpack.c.b16 %v5367, %v5366
      %v5379 = vpack.c.b16 %v5369, %v5368
      %v5380 = vpack.c.b16 %v5371, %v5370
      %v5381 = vpack.c.b16 %v5373, %v5372
      %5390 = vmatpush.bf16.msra.mxu0 %v5381
      %5391 = vmatpush.bf16.msra.mxu0 %v5380
      %5392 = vmatpush.bf16.msra.mxu0 %v5379
      %5393 = vmatpush.bf16.msra.mxu0 %v5378
      %5394 = vmatpush.bf16.msra.mxu0 %v5377
      %5395 = vmatpush.bf16.msra.mxu0 %v5376
      %5396 = vmatpush.bf16.msra.mxu0 %v5375
      %5397 = vmatpush.bf16.msra.mxu0 %v5374
      %5398 = vmatmul.bf16.gmra.mxu0 %v5326
      %v5399 = vpop.f32.mrf.mxu0
      %v5400 = vadd.f32 0.0, %v5399
      %v5401 = vpop.f32.mrf.mxu0
      %v5402 = vadd.f32 0.0, %v5401
      %5403 = vmatmul.bf16.gmra.mxu0 %v5327
      %v5404 = vpop.f32.mrf.mxu0
      %v5405 = vadd.f32 0.0, %v5404
      %v5406 = vpop.f32.mrf.mxu0
      %v5407 = vadd.f32 0.0, %v5406
      %5408 = vmatmul.bf16.gmra.mxu0 %v5328
      %v5409 = vpop.f32.mrf.mxu0
      %v5410 = vadd.f32 0.0, %v5409
      %v5411 = vpop.f32.mrf.mxu0
      %v5412 = vadd.f32 0.0, %v5411
      %5413 = vmatmul.bf16.gmra.mxu0 %v5329
      %v5414 = vpop.f32.mrf.mxu0
      %v5415 = vadd.f32 0.0, %v5414
      %v5416 = vpop.f32.mrf.mxu0
      %v5417 = vadd.f32 0.0, %v5416
      %5418 = vmatmul.bf16.gmra.mxu0 %v5330
      %v5419 = vpop.f32.mrf.mxu0
      %v5420 = vadd.f32 0.0, %v5419
      %v5421 = vpop.f32.mrf.mxu0
      %v5422 = vadd.f32 0.0, %v5421
      %5423 = vmatmul.bf16.gmra.mxu0 %v5331
      %v5424 = vpop.f32.mrf.mxu0
      %v5425 = vadd.f32 0.0, %v5424
      %v5426 = vpop.f32.mrf.mxu0
      %v5427 = vadd.f32 0.0, %v5426
      %5428 = vmatmul.bf16.gmra.mxu0 %v5332
      %v5429 = vpop.f32.mrf.mxu0
      %v5430 = vadd.f32 0.0, %v5429
      %v5431 = vpop.f32.mrf.mxu0
      %v5432 = vadd.f32 0.0, %v5431
      %5433 = vmatmul.bf16.gmra.mxu0 %v5333
      %v5434 = vpop.f32.mrf.mxu0
      %v5435 = vadd.f32 0.0, %v5434
      %v5436 = vpop.f32.mrf.mxu0
      %v5437 = vadd.f32 0.0, %v5436
      %5438 = vdwg.mxu0
      %v5439 = vadd.f32 %v5245, %v5400
      %v5440 = vadd.f32 %v5246, %v5402
      %v5441 = vadd.f32 %v5247, %v5405
      %v5442 = vadd.f32 %v5248, %v5407
      %v5443 = vadd.f32 %v5249, %v5410
      %v5444 = vadd.f32 %v5250, %v5412
      %v5445 = vadd.f32 %v5251, %v5415
      %v5446 = vadd.f32 %v5252, %v5417
      %v5447 = vadd.f32 %v5253, %v5420
      %v5448 = vadd.f32 %v5254, %v5422
      %v5449 = vadd.f32 %v5255, %v5425
      %v5450 = vadd.f32 %v5256, %v5427
      %v5451 = vadd.f32 %v5257, %v5430
      %v5452 = vadd.f32 %v5258, %v5432
      %v5453 = vadd.f32 %v5259, %v5435
      %v5454 = vadd.f32 %v5260, %v5437
      %v5455 = vld [vmem:[%s5261] sm:$0xf]
      %v5456 = vld [vmem:[%s5261 + $0x4] sm:$0xf]
      %v5457 = vld [vmem:[%s5261 + $0x8] sm:$0x1]
      %v5458 = vld [vmem:[%s5261 + $0xc] sm:$0xf]
      %v5459 = vld [vmem:[%s5261 + $0x10] sm:$0xf]
      %v5460 = vld [vmem:[%s5261 + $0x14] sm:$0x1]
      %v5461 = vld [vmem:[%s5261 + $0x18] sm:$0xf]
      %v5462 = vld [vmem:[%s5261 + $0x1c] sm:$0xf]
      %v5463 = vld [vmem:[%s5261 + $0x20] sm:$0x1]
      %v5464 = vld [vmem:[%s5261 + $0x24] sm:$0xf]
      %v5465 = vld [vmem:[%s5261 + $0x28] sm:$0xf]
      %v5466 = vld [vmem:[%s5261 + $0x2c] sm:$0x1]
      %v5467 = vld [vmem:[%s5261 + $0x30] sm:$0xf]
      %v5468 = vld [vmem:[%s5261 + $0x34] sm:$0xf]
      %v5469 = vld [vmem:[%s5261 + $0x38] sm:$0x1]
      %v5470 = vld [vmem:[%s5261 + $0x3c] sm:$0xf]
      %v5471 = vld [vmem:[%s5261 + $0x40] sm:$0xf]
      %v5472 = vld [vmem:[%s5261 + $0x44] sm:$0x1]
      %v5473 = vld [vmem:[%s5261 + $0x48] sm:$0xf]
      %v5474 = vld [vmem:[%s5261 + $0x4c] sm:$0xf]
      %v5475 = vld [vmem:[%s5261 + $0x50] sm:$0x1]
      %v5476 = vld [vmem:[%s5261 + $0x54] sm:$0xf]
      %v5477 = vld [vmem:[%s5261 + $0x58] sm:$0xf]
      %v5478 = vld [vmem:[%s5261 + $0x5c] sm:$0x1]
      %v5480 = vshrl.u32 %v5455, 16
      %v5482 = vrot.slane %v5480, 4
      %v5483 = vshll.u32 %v5455, 16
      %v5485 = vrot.slane %v5483, 5
      %v5486 = vor.u32 %v5482, %v5485
      %v5487 = vrot.slane %v5486, 4
      %v5489 = vshll.u32 %v5456, 16
      %v5491 = vrot.slane %v5489, 5
      %v5492 = vsel %vm427, %v5487, %v5491
      %v5493 = vshrl.u32 %v5456, 16
      %v5495 = vrot.slane %v5493, 4
      %v5496 = vor.u32 %v5495, %v5491
      %v5497 = vrot.slane %v5496, 4
      %v5499 = vshll.u32 %v5457, 16
      %v5501 = vrot.slane %v5499, 5
      %v5502 = vsel %vm427, %v5497, %v5501
      %v5504 = vshrl.u32 %v5458, 16
      %v5506 = vrot.slane %v5504, 4
      %v5507 = vshll.u32 %v5458, 16
      %v5509 = vrot.slane %v5507, 5
      %v5510 = vor.u32 %v5506, %v5509
      %v5511 = vrot.slane %v5510, 4
      %v5513 = vshll.u32 %v5459, 16
      %v5515 = vrot.slane %v5513, 5
      %v5516 = vsel %vm427, %v5511, %v5515
      %v5517 = vshrl.u32 %v5459, 16
      %v5519 = vrot.slane %v5517, 4
      %v5520 = vor.u32 %v5519, %v5515
      %v5521 = vrot.slane %v5520, 4
      %v5523 = vshll.u32 %v5460, 16
      %v5525 = vrot.slane %v5523, 5
      %v5526 = vsel %vm427, %v5521, %v5525
      %v5528 = vshrl.u32 %v5461, 16
      %v5530 = vrot.slane %v5528, 4
      %v5531 = vshll.u32 %v5461, 16
      %v5533 = vrot.slane %v5531, 5
      %v5534 = vor.u32 %v5530, %v5533
      %v5535 = vrot.slane %v5534, 4
      %v5537 = vshll.u32 %v5462, 16
      %v5539 = vrot.slane %v5537, 5
      %v5540 = vsel %vm427, %v5535, %v5539
      %v5541 = vshrl.u32 %v5462, 16
      %v5543 = vrot.slane %v5541, 4
      %v5544 = vor.u32 %v5543, %v5539
      %v5545 = vrot.slane %v5544, 4
      %v5547 = vshll.u32 %v5463, 16
      %v5549 = vrot.slane %v5547, 5
      %v5550 = vsel %vm427, %v5545, %v5549
      %v5552 = vshrl.u32 %v5464, 16
      %v5554 = vrot.slane %v5552, 4
      %v5555 = vshll.u32 %v5464, 16
      %v5557 = vrot.slane %v5555, 5
      %v5558 = vor.u32 %v5554, %v5557
      %v5559 = vrot.slane %v5558, 4
      %v5561 = vshll.u32 %v5465, 16
      %v5563 = vrot.slane %v5561, 5
      %v5564 = vsel %vm427, %v5559, %v5563
      %v5565 = vshrl.u32 %v5465, 16
      %v5567 = vrot.slane %v5565, 4
      %v5568 = vor.u32 %v5567, %v5563
      %v5569 = vrot.slane %v5568, 4
      %v5571 = vshll.u32 %v5466, 16
      %v5573 = vrot.slane %v5571, 5
      %v5574 = vsel %vm427, %v5569, %v5573
      %v5576 = vshrl.u32 %v5467, 16
      %v5578 = vrot.slane %v5576, 4
      %v5579 = vshll.u32 %v5467, 16
      %v5581 = vrot.slane %v5579, 5
      %v5582 = vor.u32 %v5578, %v5581
      %v5583 = vrot.slane %v5582, 4
      %v5585 = vshll.u32 %v5468, 16
      %v5587 = vrot.slane %v5585, 5
      %v5588 = vsel %vm427, %v5583, %v5587
      %v5589 = vshrl.u32 %v5468, 16
      %v5591 = vrot.slane %v5589, 4
      %v5592 = vor.u32 %v5591, %v5587
      %v5593 = vrot.slane %v5592, 4
      %v5595 = vshll.u32 %v5469, 16
      %v5597 = vrot.slane %v5595, 5
      %v5598 = vsel %vm427, %v5593, %v5597
      %v5600 = vshrl.u32 %v5470, 16
      %v5602 = vrot.slane %v5600, 4
      %v5603 = vshll.u32 %v5470, 16
      %v5605 = vrot.slane %v5603, 5
      %v5606 = vor.u32 %v5602, %v5605
      %v5607 = vrot.slane %v5606, 4
      %v5609 = vshll.u32 %v5471, 16
      %v5611 = vrot.slane %v5609, 5
      %v5612 = vsel %vm427, %v5607, %v5611
      %v5613 = vshrl.u32 %v5471, 16
      %v5615 = vrot.slane %v5613, 4
      %v5616 = vor.u32 %v5615, %v5611
      %v5617 = vrot.slane %v5616, 4
      %v5619 = vshll.u32 %v5472, 16
      %v5621 = vrot.slane %v5619, 5
      %v5622 = vsel %vm427, %v5617, %v5621
      %v5624 = vshrl.u32 %v5473, 16
      %v5626 = vrot.slane %v5624, 4
      %v5627 = vshll.u32 %v5473, 16
      %v5629 = vrot.slane %v5627, 5
      %v5630 = vor.u32 %v5626, %v5629
      %v5631 = vrot.slane %v5630, 4
      %v5633 = vshll.u32 %v5474, 16
      %v5635 = vrot.slane %v5633, 5
      %v5636 = vsel %vm427, %v5631, %v5635
      %v5637 = vshrl.u32 %v5474, 16
      %v5639 = vrot.slane %v5637, 4
      %v5640 = vor.u32 %v5639, %v5635
      %v5641 = vrot.slane %v5640, 4
      %v5643 = vshll.u32 %v5475, 16
      %v5645 = vrot.slane %v5643, 5
      %v5646 = vsel %vm427, %v5641, %v5645
      %v5648 = vshrl.u32 %v5476, 16
      %v5650 = vrot.slane %v5648, 4
      %v5651 = vshll.u32 %v5476, 16
      %v5653 = vrot.slane %v5651, 5
      %v5654 = vor.u32 %v5650, %v5653
      %v5655 = vrot.slane %v5654, 4
      %v5657 = vshll.u32 %v5477, 16
      %v5659 = vrot.slane %v5657, 5
      %v5660 = vsel %vm427, %v5655, %v5659
      %v5661 = vshrl.u32 %v5477, 16
      %v5663 = vrot.slane %v5661, 4
      %v5664 = vor.u32 %v5663, %v5659
      %v5665 = vrot.slane %v5664, 4
      %v5667 = vshll.u32 %v5478, 16
      %v5669 = vrot.slane %v5667, 5
      %v5670 = vsel %vm427, %v5665, %v5669
      %v5671 = vld [vmem:[%s5 + $0x1c0] sm:$0xf]
      %v5672 = vld [vmem:[%s5 + $0x1c4] sm:$0xf]
      %v5673 = vld [vmem:[%s5 + $0x1c8] sm:$0xf]
      %v5674 = vld [vmem:[%s5 + $0x1cc] sm:$0xf]
      %v5675 = vld [vmem:[%s5 + $0x1d0] sm:$0xf]
      %v5676 = vld [vmem:[%s5 + $0x1d4] sm:$0xf]
      %v5677 = vld [vmem:[%s5 + $0x1d8] sm:$0xf]
      %v5678 = vld [vmem:[%s5 + $0x1dc] sm:$0xf]
      %v5679 = vld [vmem:[%s5 + $0x1e0] sm:$0xf]
      %v5680 = vld [vmem:[%s5 + $0x1e4] sm:$0xf]
      %v5681 = vld [vmem:[%s5 + $0x1e8] sm:$0xf]
      %v5682 = vld [vmem:[%s5 + $0x1ec] sm:$0xf]
      %v5683 = vld [vmem:[%s5 + $0x1f0] sm:$0xf]
      %v5684 = vld [vmem:[%s5 + $0x1f4] sm:$0xf]
      %v5685 = vld [vmem:[%s5 + $0x1f8] sm:$0xf]
      %v5686 = vld [vmem:[%s5 + $0x1fc] sm:$0xf]
      %v5687 = vunpack.c.l.b16 %v5492
      %v5688 = vunpack.c.l.b16 %v5502
      %v5689 = vunpack.c.l.b16 %v5516
      %v5690 = vunpack.c.l.b16 %v5526
      %v5691 = vunpack.c.l.b16 %v5540
      %v5692 = vunpack.c.l.b16 %v5550
      %v5693 = vunpack.c.l.b16 %v5564
      %v5694 = vunpack.c.l.b16 %v5574
      %v5695 = vunpack.c.l.b16 %v5588
      %v5696 = vunpack.c.l.b16 %v5598
      %v5697 = vunpack.c.l.b16 %v5612
      %v5698 = vunpack.c.l.b16 %v5622
      %v5699 = vunpack.c.l.b16 %v5636
      %v5700 = vunpack.c.l.b16 %v5646
      %v5701 = vunpack.c.l.b16 %v5660
      %v5702 = vunpack.c.l.b16 %v5670
      %v5703 = vpack.c.b16 %v5688, %v5687
      %v5704 = vpack.c.b16 %v5690, %v5689
      %v5705 = vpack.c.b16 %v5692, %v5691
      %v5706 = vpack.c.b16 %v5694, %v5693
      %v5707 = vpack.c.b16 %v5696, %v5695
      %v5708 = vpack.c.b16 %v5698, %v5697
      %v5709 = vpack.c.b16 %v5700, %v5699
      %v5710 = vpack.c.b16 %v5702, %v5701
      %v5735 = vunpack.c.l.b16 %v5671
      %v5736 = vunpack.c.l.b16 %v5672
      %v5737 = vunpack.c.l.b16 %v5673
      %v5738 = vunpack.c.l.b16 %v5674
      %v5739 = vunpack.c.l.b16 %v5675
      %v5740 = vunpack.c.l.b16 %v5676
      %v5741 = vunpack.c.l.b16 %v5677
      %v5742 = vunpack.c.l.b16 %v5678
      %v5743 = vunpack.c.l.b16 %v5679
      %v5744 = vunpack.c.l.b16 %v5680
      %v5745 = vunpack.c.l.b16 %v5681
      %v5746 = vunpack.c.l.b16 %v5682
      %v5747 = vunpack.c.l.b16 %v5683
      %v5748 = vunpack.c.l.b16 %v5684
      %v5749 = vunpack.c.l.b16 %v5685
      %v5750 = vunpack.c.l.b16 %v5686
      %v5751 = vpack.c.b16 %v5736, %v5735
      %v5752 = vpack.c.b16 %v5738, %v5737
      %v5753 = vpack.c.b16 %v5740, %v5739
      %v5754 = vpack.c.b16 %v5742, %v5741
      %v5755 = vpack.c.b16 %v5744, %v5743
      %v5756 = vpack.c.b16 %v5746, %v5745
      %v5757 = vpack.c.b16 %v5748, %v5747
      %v5758 = vpack.c.b16 %v5750, %v5749
      %5767 = vmatpush.bf16.msra.mxu0 %v5758
      %5768 = vmatpush.bf16.msra.mxu0 %v5757
      %5769 = vmatpush.bf16.msra.mxu0 %v5756
      %5770 = vmatpush.bf16.msra.mxu0 %v5755
      %5771 = vmatpush.bf16.msra.mxu0 %v5754
      %5772 = vmatpush.bf16.msra.mxu0 %v5753
      %5773 = vmatpush.bf16.msra.mxu0 %v5752
      %5774 = vmatpush.bf16.msra.mxu0 %v5751
      %5775 = vmatmul.bf16.gmra.mxu0 %v5703
      %v5776 = vpop.f32.mrf.mxu0
      %v5777 = vadd.f32 0.0, %v5776
      %v5778 = vpop.f32.mrf.mxu0
      %v5779 = vadd.f32 0.0, %v5778
      %5780 = vmatmul.bf16.gmra.mxu0 %v5704
      %v5781 = vpop.f32.mrf.mxu0
      %v5782 = vadd.f32 0.0, %v5781
      %v5783 = vpop.f32.mrf.mxu0
      %v5784 = vadd.f32 0.0, %v5783
      %5785 = vmatmul.bf16.gmra.mxu0 %v5705
      %v5786 = vpop.f32.mrf.mxu0
      %v5787 = vadd.f32 0.0, %v5786
      %v5788 = vpop.f32.mrf.mxu0
      %v5789 = vadd.f32 0.0, %v5788
      %5790 = vmatmul.bf16.gmra.mxu0 %v5706
      %v5791 = vpop.f32.mrf.mxu0
      %v5792 = vadd.f32 0.0, %v5791
      %v5793 = vpop.f32.mrf.mxu0
      %v5794 = vadd.f32 0.0, %v5793
      %5795 = vmatmul.bf16.gmra.mxu0 %v5707
      %v5796 = vpop.f32.mrf.mxu0
      %v5797 = vadd.f32 0.0, %v5796
      %v5798 = vpop.f32.mrf.mxu0
      %v5799 = vadd.f32 0.0, %v5798
      %5800 = vmatmul.bf16.gmra.mxu0 %v5708
      %v5801 = vpop.f32.mrf.mxu0
      %v5802 = vadd.f32 0.0, %v5801
      %v5803 = vpop.f32.mrf.mxu0
      %v5804 = vadd.f32 0.0, %v5803
      %5805 = vmatmul.bf16.gmra.mxu0 %v5709
      %v5806 = vpop.f32.mrf.mxu0
      %v5807 = vadd.f32 0.0, %v5806
      %v5808 = vpop.f32.mrf.mxu0
      %v5809 = vadd.f32 0.0, %v5808
      %5810 = vmatmul.bf16.gmra.mxu0 %v5710
      %v5811 = vpop.f32.mrf.mxu0
      %v5812 = vadd.f32 0.0, %v5811
      %v5813 = vpop.f32.mrf.mxu0
      %v5814 = vadd.f32 0.0, %v5813
      %5815 = vdwg.mxu0
      %v5816 = vadd.f32 %v5439, %v5777
      %v5817 = vadd.f32 %v5440, %v5779
      %v5818 = vadd.f32 %v5441, %v5782
      %v5819 = vadd.f32 %v5442, %v5784
      %v5820 = vadd.f32 %v5443, %v5787
      %v5821 = vadd.f32 %v5444, %v5789
      %v5822 = vadd.f32 %v5445, %v5792
      %v5823 = vadd.f32 %v5446, %v5794
      %v5824 = vadd.f32 %v5447, %v5797
      %v5825 = vadd.f32 %v5448, %v5799
      %v5826 = vadd.f32 %v5449, %v5802
      %v5827 = vadd.f32 %v5450, %v5804
      %v5828 = vadd.f32 %v5451, %v5807
      %v5829 = vadd.f32 %v5452, %v5809
      %v5830 = vadd.f32 %v5453, %v5812
      %v5831 = vadd.f32 %v5454, %v5814
      %v5832 = vld [vmem:[%s5261] sm:$0xe]
      %v5833 = vld [vmem:[%s5261 + $0xc] sm:$0xe]
      %v5834 = vld [vmem:[%s5261 + $0x18] sm:$0xe]
      %v5835 = vld [vmem:[%s5261 + $0x24] sm:$0xe]
      %v5836 = vld [vmem:[%s5261 + $0x30] sm:$0xe]
      %v5837 = vld [vmem:[%s5261 + $0x3c] sm:$0xe]
      %v5838 = vld [vmem:[%s5261 + $0x48] sm:$0xe]
      %v5839 = vld [vmem:[%s5261 + $0x54] sm:$0xe]
      %v5864 = vrot.slane %v5832, 5
      %v5865 = vrot.slane %v5864, 4
      %v5866 = vrot.slane %v5456, 5
      %v5867 = vsel %vm1030, %v5865, %v5866
      %v5868 = vrot.slane %v5866, 4
      %v5869 = vrot.slane %v5457, 5
      %v5870 = vsel %vm1030, %v5868, %v5869
      %v5871 = vrot.slane %v5833, 5
      %v5872 = vrot.slane %v5871, 4
      %v5873 = vrot.slane %v5459, 5
      %v5874 = vsel %vm1030, %v5872, %v5873
      %v5875 = vrot.slane %v5873, 4
      %v5876 = vrot.slane %v5460, 5
      %v5877 = vsel %vm1030, %v5875, %v5876
      %v5878 = vrot.slane %v5834, 5
      %v5879 = vrot.slane %v5878, 4
      %v5880 = vrot.slane %v5462, 5
      %v5881 = vsel %vm1030, %v5879, %v5880
      %v5882 = vrot.slane %v5880, 4
      %v5883 = vrot.slane %v5463, 5
      %v5884 = vsel %vm1030, %v5882, %v5883
      %v5885 = vrot.slane %v5835, 5
      %v5886 = vrot.slane %v5885, 4
      %v5887 = vrot.slane %v5465, 5
      %v5888 = vsel %vm1030, %v5886, %v5887
      %v5889 = vrot.slane %v5887, 4
      %v5890 = vrot.slane %v5466, 5
      %v5891 = vsel %vm1030, %v5889, %v5890
      %v5892 = vrot.slane %v5836, 5
      %v5893 = vrot.slane %v5892, 4
      %v5894 = vrot.slane %v5468, 5
      %v5895 = vsel %vm1030, %v5893, %v5894
      %v5896 = vrot.slane %v5894, 4
      %v5897 = vrot.slane %v5469, 5
      %v5898 = vsel %vm1030, %v5896, %v5897
      %v5899 = vrot.slane %v5837, 5
      %v5900 = vrot.slane %v5899, 4
      %v5901 = vrot.slane %v5471, 5
      %v5902 = vsel %vm1030, %v5900, %v5901
      %v5903 = vrot.slane %v5901, 4
      %v5904 = vrot.slane %v5472, 5
      %v5905 = vsel %vm1030, %v5903, %v5904
      %v5906 = vrot.slane %v5838, 5
      %v5907 = vrot.slane %v5906, 4
      %v5908 = vrot.slane %v5474, 5
      %v5909 = vsel %vm1030, %v5907, %v5908
      %v5910 = vrot.slane %v5908, 4
      %v5911 = vrot.slane %v5475, 5
      %v5912 = vsel %vm1030, %v5910, %v5911
      %v5913 = vrot.slane %v5839, 5
      %v5914 = vrot.slane %v5913, 4
      %v5915 = vrot.slane %v5477, 5
      %v5916 = vsel %vm1030, %v5914, %v5915
      %v5917 = vrot.slane %v5915, 4
      %v5918 = vrot.slane %v5478, 5
      %v5919 = vsel %vm1030, %v5917, %v5918
      %v5920 = vld [vmem:[%s5 + $0x200] sm:$0xf]
      %v5921 = vld [vmem:[%s5 + $0x204] sm:$0xf]
      %v5922 = vld [vmem:[%s5 + $0x208] sm:$0xf]
      %v5923 = vld [vmem:[%s5 + $0x20c] sm:$0xf]
      %v5924 = vld [vmem:[%s5 + $0x210] sm:$0xf]
      %v5925 = vld [vmem:[%s5 + $0x214] sm:$0xf]
      %v5926 = vld [vmem:[%s5 + $0x218] sm:$0xf]
      %v5927 = vld [vmem:[%s5 + $0x21c] sm:$0xf]
      %v5928 = vld [vmem:[%s5 + $0x220] sm:$0xf]
      %v5929 = vld [vmem:[%s5 + $0x224] sm:$0xf]
      %v5930 = vld [vmem:[%s5 + $0x228] sm:$0xf]
      %v5931 = vld [vmem:[%s5 + $0x22c] sm:$0xf]
      %v5932 = vld [vmem:[%s5 + $0x230] sm:$0xf]
      %v5933 = vld [vmem:[%s5 + $0x234] sm:$0xf]
      %v5934 = vld [vmem:[%s5 + $0x238] sm:$0xf]
      %v5935 = vld [vmem:[%s5 + $0x23c] sm:$0xf]
      %v5936 = vunpack.c.l.b16 %v5867
      %v5937 = vunpack.c.l.b16 %v5870
      %v5938 = vunpack.c.l.b16 %v5874
      %v5939 = vunpack.c.l.b16 %v5877
      %v5940 = vunpack.c.l.b16 %v5881
      %v5941 = vunpack.c.l.b16 %v5884
      %v5942 = vunpack.c.l.b16 %v5888
      %v5943 = vunpack.c.l.b16 %v5891
      %v5944 = vunpack.c.l.b16 %v5895
      %v5945 = vunpack.c.l.b16 %v5898
      %v5946 = vunpack.c.l.b16 %v5902
      %v5947 = vunpack.c.l.b16 %v5905
      %v5948 = vunpack.c.l.b16 %v5909
      %v5949 = vunpack.c.l.b16 %v5912
      %v5950 = vunpack.c.l.b16 %v5916
      %v5951 = vunpack.c.l.b16 %v5919
      %v5952 = vpack.c.b16 %v5937, %v5936
      %v5953 = vpack.c.b16 %v5939, %v5938
      %v5954 = vpack.c.b16 %v5941, %v5940
      %v5955 = vpack.c.b16 %v5943, %v5942
      %v5956 = vpack.c.b16 %v5945, %v5944
      %v5957 = vpack.c.b16 %v5947, %v5946
      %v5958 = vpack.c.b16 %v5949, %v5948
      %v5959 = vpack.c.b16 %v5951, %v5950
      %v5984 = vunpack.c.l.b16 %v5920
      %v5985 = vunpack.c.l.b16 %v5921
      %v5986 = vunpack.c.l.b16 %v5922
      %v5987 = vunpack.c.l.b16 %v5923
      %v5988 = vunpack.c.l.b16 %v5924
      %v5989 = vunpack.c.l.b16 %v5925
      %v5990 = vunpack.c.l.b16 %v5926
      %v5991 = vunpack.c.l.b16 %v5927
      %v5992 = vunpack.c.l.b16 %v5928
      %v5993 = vunpack.c.l.b16 %v5929
      %v5994 = vunpack.c.l.b16 %v5930
      %v5995 = vunpack.c.l.b16 %v5931
      %v5996 = vunpack.c.l.b16 %v5932
      %v5997 = vunpack.c.l.b16 %v5933
      %v5998 = vunpack.c.l.b16 %v5934
      %v5999 = vunpack.c.l.b16 %v5935
      %v6000 = vpack.c.b16 %v5985, %v5984
      %v6001 = vpack.c.b16 %v5987, %v5986
      %v6002 = vpack.c.b16 %v5989, %v5988
      %v6003 = vpack.c.b16 %v5991, %v5990
      %v6004 = vpack.c.b16 %v5993, %v5992
      %v6005 = vpack.c.b16 %v5995, %v5994
      %v6006 = vpack.c.b16 %v5997, %v5996
      %v6007 = vpack.c.b16 %v5999, %v5998
      %6016 = vmatpush.bf16.msra.mxu0 %v6007
      %6017 = vmatpush.bf16.msra.mxu0 %v6006
      %6018 = vmatpush.bf16.msra.mxu0 %v6005
      %6019 = vmatpush.bf16.msra.mxu0 %v6004
      %6020 = vmatpush.bf16.msra.mxu0 %v6003
      %6021 = vmatpush.bf16.msra.mxu0 %v6002
      %6022 = vmatpush.bf16.msra.mxu0 %v6001
      %6023 = vmatpush.bf16.msra.mxu0 %v6000
      %6024 = vmatmul.bf16.gmra.mxu0 %v5952
      %v6025 = vpop.f32.mrf.mxu0
      %v6026 = vadd.f32 0.0, %v6025
      %v6027 = vpop.f32.mrf.mxu0
      %v6028 = vadd.f32 0.0, %v6027
      %6029 = vmatmul.bf16.gmra.mxu0 %v5953
      %v6030 = vpop.f32.mrf.mxu0
      %v6031 = vadd.f32 0.0, %v6030
      %v6032 = vpop.f32.mrf.mxu0
      %v6033 = vadd.f32 0.0, %v6032
      %6034 = vmatmul.bf16.gmra.mxu0 %v5954
      %v6035 = vpop.f32.mrf.mxu0
      %v6036 = vadd.f32 0.0, %v6035
      %v6037 = vpop.f32.mrf.mxu0
      %v6038 = vadd.f32 0.0, %v6037
      %6039 = vmatmul.bf16.gmra.mxu0 %v5955
      %v6040 = vpop.f32.mrf.mxu0
      %v6041 = vadd.f32 0.0, %v6040
      %v6042 = vpop.f32.mrf.mxu0
      %v6043 = vadd.f32 0.0, %v6042
      %6044 = vmatmul.bf16.gmra.mxu0 %v5956
      %v6045 = vpop.f32.mrf.mxu0
      %v6046 = vadd.f32 0.0, %v6045
      %v6047 = vpop.f32.mrf.mxu0
      %v6048 = vadd.f32 0.0, %v6047
      %6049 = vmatmul.bf16.gmra.mxu0 %v5957
      %v6050 = vpop.f32.mrf.mxu0
      %v6051 = vadd.f32 0.0, %v6050
      %v6052 = vpop.f32.mrf.mxu0
      %v6053 = vadd.f32 0.0, %v6052
      %6054 = vmatmul.bf16.gmra.mxu0 %v5958
      %v6055 = vpop.f32.mrf.mxu0
      %v6056 = vadd.f32 0.0, %v6055
      %v6057 = vpop.f32.mrf.mxu0
      %v6058 = vadd.f32 0.0, %v6057
      %6059 = vmatmul.bf16.gmra.mxu0 %v5959
      %v6060 = vpop.f32.mrf.mxu0
      %v6061 = vadd.f32 0.0, %v6060
      %v6062 = vpop.f32.mrf.mxu0
      %v6063 = vadd.f32 0.0, %v6062
      %6064 = vdwg.mxu0
      %v6065 = vadd.f32 %v5816, %v6026
      %v6066 = vadd.f32 %v5817, %v6028
      %v6067 = vadd.f32 %v5818, %v6031
      %v6068 = vadd.f32 %v5819, %v6033
      %v6069 = vadd.f32 %v5820, %v6036
      %v6070 = vadd.f32 %v5821, %v6038
      %v6071 = vadd.f32 %v5822, %v6041
      %v6072 = vadd.f32 %v5823, %v6043
      %v6073 = vadd.f32 %v5824, %v6046
      %v6074 = vadd.f32 %v5825, %v6048
      %v6075 = vadd.f32 %v5826, %v6051
      %v6076 = vadd.f32 %v5827, %v6053
      %v6077 = vadd.f32 %v5828, %v6056
      %v6078 = vadd.f32 %v5829, %v6058
      %v6079 = vadd.f32 %v5830, %v6061
      %v6080 = vadd.f32 %v5831, %v6063
      %v6082 = vperm.slane %v374, 0
      %v6084 = vmul.f32 %v6065, %v6082
      %v6085 = vmul.f32 %v6066, %v6082
      %v6086 = vmul.f32 %v6067, %v6082
      %v6087 = vmul.f32 %v6068, %v6082
      %v6088 = vmul.f32 %v6069, %v6082
      %v6089 = vmul.f32 %v6070, %v6082
      %v6090 = vmul.f32 %v6071, %v6082
      %v6091 = vmul.f32 %v6072, %v6082
      %v6092 = vmul.f32 %v6073, %v6082
      %v6093 = vmul.f32 %v6074, %v6082
      %v6094 = vmul.f32 %v6075, %v6082
      %v6095 = vmul.f32 %v6076, %v6082
      %v6096 = vmul.f32 %v6077, %v6082
      %v6097 = vmul.f32 %v6078, %v6082
      %v6098 = vmul.f32 %v6079, %v6082
      %v6099 = vmul.f32 %v6080, %v6082
      %v6101 = vperm.slane %v375, 0
      %v6103 = vadd.f32 %v6084, %v6101
      %v6104 = vadd.f32 %v6085, %v6101
      %v6105 = vadd.f32 %v6086, %v6101
      %v6106 = vadd.f32 %v6087, %v6101
      %v6107 = vadd.f32 %v6088, %v6101
      %v6108 = vadd.f32 %v6089, %v6101
      %v6109 = vadd.f32 %v6090, %v6101
      %v6110 = vadd.f32 %v6091, %v6101
      %v6111 = vadd.f32 %v6092, %v6101
      %v6112 = vadd.f32 %v6093, %v6101
      %v6113 = vadd.f32 %v6094, %v6101
      %v6114 = vadd.f32 %v6095, %v6101
      %v6115 = vadd.f32 %v6096, %v6101
      %v6116 = vadd.f32 %v6097, %v6101
      %v6117 = vadd.f32 %v6098, %v6101
      %v6118 = vadd.f32 %v6099, %v6101
      %v6119 = vld [vmem:[%s357] sm:$0xf]
      %v6120 = vld [vmem:[%s357 + $0x4] sm:$0xf]
      %v6121 = vld [vmem:[%s357 + $0x8] sm:$0xf]
      %v6122 = vld [vmem:[%s357 + $0xc] sm:$0xf]
      %v6123 = vld [vmem:[%s357 + $0x10] sm:$0xf]
      %v6124 = vld [vmem:[%s357 + $0x14] sm:$0xf]
      %v6125 = vld [vmem:[%s357 + $0x18] sm:$0xf]
      %v6126 = vld [vmem:[%s357 + $0x1c] sm:$0xf]
      %v6127 = vld [vmem:[%s357 + $0x20] sm:$0xf]
      %v6128 = vld [vmem:[%s357 + $0x24] sm:$0xf]
      %v6129 = vld [vmem:[%s357 + $0x28] sm:$0xf]
      %v6130 = vld [vmem:[%s357 + $0x2c] sm:$0xf]
      %v6131 = vld [vmem:[%s357 + $0x30] sm:$0xf]
      %v6132 = vld [vmem:[%s357 + $0x34] sm:$0xf]
      %v6133 = vld [vmem:[%s357 + $0x38] sm:$0xf]
      %v6134 = vld [vmem:[%s357 + $0x3c] sm:$0xf]
      %v6135 = vunpack.c.l.bf16 %v6119
      %v6136 = vunpack.c.l.bf16 %v6120
      %v6137 = vunpack.c.l.bf16 %v6121
      %v6138 = vunpack.c.l.bf16 %v6122
      %v6139 = vunpack.c.l.bf16 %v6123
      %v6140 = vunpack.c.l.bf16 %v6124
      %v6141 = vunpack.c.l.bf16 %v6125
      %v6142 = vunpack.c.l.bf16 %v6126
      %v6143 = vunpack.c.l.bf16 %v6127
      %v6144 = vunpack.c.l.bf16 %v6128
      %v6145 = vunpack.c.l.bf16 %v6129
      %v6146 = vunpack.c.l.bf16 %v6130
      %v6147 = vunpack.c.l.bf16 %v6131
      %v6148 = vunpack.c.l.bf16 %v6132
      %v6149 = vunpack.c.l.bf16 %v6133
      %v6150 = vunpack.c.l.bf16 %v6134
      %v6151 = vadd.f32 %v6103, %v6135
      %v6152 = vadd.f32 %v6104, %v6136
      %v6153 = vadd.f32 %v6105, %v6137
      %v6154 = vadd.f32 %v6106, %v6138
      %v6155 = vadd.f32 %v6107, %v6139
      %v6156 = vadd.f32 %v6108, %v6140
      %v6157 = vadd.f32 %v6109, %v6141
      %v6158 = vadd.f32 %v6110, %v6142
      %v6159 = vadd.f32 %v6111, %v6143
      %v6160 = vadd.f32 %v6112, %v6144
      %v6161 = vadd.f32 %v6113, %v6145
      %v6162 = vadd.f32 %v6114, %v6146
      %v6163 = vadd.f32 %v6115, %v6147
      %v6164 = vadd.f32 %v6116, %v6148
      %v6165 = vadd.f32 %v6117, %v6149
      %v6166 = vadd.f32 %v6118, %v6150
      %v6167 = vmax.f32 %v6151, 0.0
      %v6168 = vmax.f32 %v6152, 0.0
      %v6169 = vmax.f32 %v6153, 0.0
      %v6170 = vmax.f32 %v6154, 0.0
      %v6171 = vmax.f32 %v6155, 0.0
      %v6172 = vmax.f32 %v6156, 0.0
      %v6173 = vmax.f32 %v6157, 0.0
      %v6174 = vmax.f32 %v6158, 0.0
      %v6175 = vmax.f32 %v6159, 0.0
      %v6176 = vmax.f32 %v6160, 0.0
      %v6177 = vmax.f32 %v6161, 0.0
      %v6178 = vmax.f32 %v6162, 0.0
      %v6179 = vmax.f32 %v6163, 0.0
      %v6180 = vmax.f32 %v6164, 0.0
      %v6181 = vmax.f32 %v6165, 0.0
      %v6182 = vmax.f32 %v6166, 0.0
      %6183 = vst [vmem:[%s368] sm:$0xff] %v6167
      %6184 = vst [vmem:[%s368 + $0x8] sm:$0xff] %v6168
      %6185 = vst [vmem:[%s368 + $0x10] sm:$0xff] %v6169
      %6186 = vst [vmem:[%s368 + $0x18] sm:$0xff] %v6170
      %6187 = vst [vmem:[%s368 + $0x20] sm:$0xff] %v6171
      %6188 = vst [vmem:[%s368 + $0x28] sm:$0xff] %v6172
      %6189 = vst [vmem:[%s368 + $0x30] sm:$0xff] %v6173
      %6190 = vst [vmem:[%s368 + $0x38] sm:$0xff] %v6174
      %6191 = vst [vmem:[%s368 + $0x40] sm:$0xff] %v6175
      %6192 = vst [vmem:[%s368 + $0x48] sm:$0xff] %v6176
      %6193 = vst [vmem:[%s368 + $0x50] sm:$0xff] %v6177
      %6194 = vst [vmem:[%s368 + $0x58] sm:$0xff] %v6178
      %6195 = vst [vmem:[%s368 + $0x60] sm:$0xff] %v6179
      %6196 = vst [vmem:[%s368 + $0x68] sm:$0xff] %v6180
      %6197 = vst [vmem:[%s368 + $0x70] sm:$0xff] %v6181
      %6198 = vst [vmem:[%s368 + $0x78] sm:$0xff] %v6182
      %s6199 = smul.u32 8, %s24
      %p6200 = scmp.lt.s32.totalorder %s23, 1
      %s6201 = scalar_select %p6200, %s23, 1
      %p6202 = scmp.lt.s32.totalorder %s6199, 15
      %s6203 = scalar_select %p6202, %s6199, 15
      %s6204 = smul.addr %s6203, 2
      %s6205 = smul.addr %s6201, 32
      %s6206 = sadd.s32 %s6204, %s6205
      %s6207 = smul.addr %s6206, 8
      %s6208 = scalar_lea.vmem %s8, %s6207
      // Predicated region
      $region61: #{basic_block_forward.1} parent=51 // pred_check
        %p6209 = pneg %p231
      $region62: #{basic_block_forward.1} parent=51 // pred_check_branch
        %6211 = sbr.rel (%p6209) target = $region64
      $region63: #{basic_block_forward.1} parent=51 // pred_region
        %s6212 = smul.u32 8, %s24
      $region64: #{basic_block_forward.1} parent=51 // pred_fallthru
        _
    $region52: #{basic_block_forward.1} parent=5 // pred_fallthru
      _
    %p6213 = scmp.le.s32.totalorder 2, %s14
    // Predicated region
    $region65: #{basic_block_forward.1} parent=5 // pred_check
      %p6214 = pneg %p6213
    $region66: #{basic_block_forward.1} parent=5 // pred_check_branch
      %6216 = sbr.rel (%p6214) target = $region68
    $region67: #{basic_block_forward.1} parent=5 // pred_region
      %s6217 = ssub.s32 %s14, 2
      // Predicated region
      $region69: #{basic_block_forward.1} parent=67 // pred_check
        %p6218 = pneg %p237
      $region70: #{basic_block_forward.1} parent=67 // pred_check_branch
        %6220 = sbr.rel (%p6218) target = $region72
      $region71: #{basic_block_forward.1} parent=67 // pred_region
        %s6221 = smul.u32 8, %s26
        %p6222 = scmp.lt.s32.totalorder %s25, 1
        %s6223 = scalar_select %p6222, %s25, 1
        %p6224 = scmp.lt.s32.totalorder %s6221, 15
        %s6225 = scalar_select %p6224, %s6221, 15
        %s6226 = smul.addr %s6225, 2
        %s6227 = smul.addr %s6223, 32
        %s6228 = sadd.s32 %s6226, %s6227
        %s6229 = smul.addr %s6228, 8
        %s6230 = scalar_lea.vmem %s8, %s6229
      $region72: #{basic_block_forward.1} parent=67 // pred_fallthru
        _
    $region68: #{basic_block_forward.1} parent=5 // pred_fallthru
      _
  $region6: #{basic_block_forward.1} parent=0 // loop_footer
    %s18 = sadd.s32 1, %s14
  $region7: #{basic_block_forward.1} parent=0 // loop_footer_branch
    %13 = sbr.rel target = $region3
  $region8: #{basic_block_forward.1} parent=0 // loop_exit
    _

</llo_original>
